<compile_context>
chip_gen: v5e
topology: v5e:2x2
jax: 0.10.0
libtpu: 0.0.40
codegen_flags: <defaults>
</compile_context>

<pallas_src>
import functools

import jax
import jax.numpy as jnp
from jax.experimental import pallas as pl
from jax.experimental.pallas import tpu as pltpu

LATENT_DIM = 128
HIDDEN_DIM = 512
OUTPUT_DIM = 9
OUT_PAD = 128          # lane-dense padded width of the final Linear
BN_EPS = 1e-5


# ---------------------------------------------------------------------------
# Pallas kernel: whole decoder MLP, VMEM-resident weights, batch-tiled.
# ---------------------------------------------------------------------------
def decoder_kernel(
    z_ref,
    w0_ref, b0_ref,
    w1a_ref, b1a_ref, w1b_ref, b1b_ref,
    w2a_ref, b2a_ref, w2b_ref, b2b_ref,
    wo_ref, bo_ref,
    out_ref,
):
    """Weights: bf16 [in, out] with BatchNorm pre-folded.  Biases: fp32 [1, out].
    Matmuls run bf16 x bf16 -> fp32 on the MXU; bias / residual / ReLU happen on
    the fp32 accumulator, then one fp32->bf16 cast carries the activation to the
    next layer (bf16 intermediates = half the VMEM spill/store traffic)."""

    def linear_f32(x_bf16, w_ref, b_ref):
        acc = jnp.dot(x_bf16, w_ref[...], preferred_element_type=jnp.float32)
        return acc + b_ref[...]

    def resblock(x_bf16, wa, ba, wb, bb):
        # Linear -> (folded BN) -> ReLU
        y = jnp.maximum(linear_f32(x_bf16, wa, ba), 0.0).astype(jnp.bfloat16)
        # Linear -> (folded BN) -> +residual -> ReLU   (fp32 math, one cast out)
        y = jnp.maximum(linear_f32(y, wb, bb) + x_bf16.astype(jnp.float32), 0.0)
        return y.astype(jnp.bfloat16)

    z = z_ref[...]    # already bf16 (cast + pad done once in the wrapper)

    # Linear(latent -> hidden) -> BN(folded) -> ReLU -> Dropout(identity in eval)
    h = jnp.maximum(linear_f32(z, w0_ref, b0_ref), 0.0).astype(jnp.bfloat16)

    # Two residual blocks
    h = resblock(h, w1a_ref, b1a_ref, w1b_ref, b1b_ref)
    h = resblock(h, w2a_ref, b2a_ref, w2b_ref, b2b_ref)

    # Final Linear(hidden -> 128-padded output); lane-dense bf16 store.
    out_ref[...] = linear_f32(h, wo_ref, bo_ref).astype(out_ref.dtype)


# ---------------------------------------------------------------------------
# Parameter setup (PyTorch-default-style init, non-trivial BN stats) + folding.
# ---------------------------------------------------------------------------
def _linear_init(key, fan_in, fan_out):
    """PyTorch nn.Linear default: U(-1/sqrt(fan_in), 1/sqrt(fan_in)); stored [out, in]."""
    kw, kb = jax.random.split(key)
    bound = 1.0 / jnp.sqrt(jnp.float32(fan_in))
    w = jax.random.uniform(kw, (fan_out, fan_in), jnp.float32, -bound, bound)
    b = jax.random.uniform(kb, (fan_out,), jnp.float32, -bound, bound)
    return w, b


def _bn_init(key, dim):
    """Non-trivial eval-mode BN stats so the fold is actually exercised."""
    k1, k2, k3, k4 = jax.random.split(key, 4)
    gamma = jax.random.uniform(k1, (dim,), jnp.float32, 0.5, 1.5)
    beta = 0.1 * jax.random.normal(k2, (dim,), jnp.float32)
    mean = 0.1 * jax.random.normal(k3, (dim,), jnp.float32)
    var = jax.random.uniform(k4, (dim,), jnp.float32, 0.5, 1.5)
    return gamma, beta, mean, var


def make_decoder_params(key):
    keys = jax.random.split(key, 11)
    p = {}
    p["w0"], p["b0"] = _linear_init(keys[0], LATENT_DIM, HIDDEN_DIM)
    p["bn0"] = _bn_init(keys[1], HIDDEN_DIM)
    p["w1a"], p["b1a"] = _linear_init(keys[2], HIDDEN_DIM, HIDDEN_DIM)
    p["bn1a"] = _bn_init(keys[3], HIDDEN_DIM)
    p["w1b"], p["b1b"] = _linear_init(keys[4], HIDDEN_DIM, HIDDEN_DIM)
    p["bn1b"] = _bn_init(keys[5], HIDDEN_DIM)
    p["w2a"], p["b2a"] = _linear_init(keys[6], HIDDEN_DIM, HIDDEN_DIM)
    p["bn2a"] = _bn_init(keys[7], HIDDEN_DIM)
    p["w2b"], p["b2b"] = _linear_init(keys[8], HIDDEN_DIM, HIDDEN_DIM)
    p["bn2b"] = _bn_init(keys[9], HIDDEN_DIM)
    p["wo"], p["bo"] = _linear_init(keys[10], HIDDEN_DIM, OUTPUT_DIM)
    return p


def prepare_kernel_params(params):
    """One-time conversion to kernel-ready layout: BN folded into [in,out] bf16
    weights + fp32 [1,out] biases; final Linear zero-padded to OUT_PAD lanes."""

    def fold(w, b, bn):
        gamma, beta, mean, var = bn
        scale = gamma / jnp.sqrt(var + BN_EPS)
        shift = beta - mean * scale
        w_k = (jnp.transpose(w) * scale[None, :]).astype(jnp.bfloat16)   # [in, out]
        b_k = (b * scale + shift).reshape(1, -1).astype(jnp.float32)
        return w_k, b_k

    w0, b0 = fold(params["w0"], params["b0"], params["bn0"])
    w1a, b1a = fold(params["w1a"], params["b1a"], params["bn1a"])
    w1b, b1b = fold(params["w1b"], params["b1b"], params["bn1b"])
    w2a, b2a = fold(params["w2a"], params["b2a"], params["bn2a"])
    w2b, b2b = fold(params["w2b"], params["b2b"], params["bn2b"])

    wo = jnp.zeros((HIDDEN_DIM, OUT_PAD), jnp.float32)
    wo = wo.at[:, :OUTPUT_DIM].set(jnp.transpose(params["wo"]))
    wo = wo.astype(jnp.bfloat16)
    bo = jnp.zeros((1, OUT_PAD), jnp.float32).at[0, :OUTPUT_DIM].set(params["bo"])

    return (w0, b0, w1a, b1a, w1b, b1b, w2a, b2a, w2b, b2b, wo, bo)


# ---------------------------------------------------------------------------
# Wrapper: batch-tiled pallas_call with weight-resident BlockSpecs.
# ---------------------------------------------------------------------------
def _round_up(x, m):
    return ((x + m - 1) // m) * m


def _choose_batch_tiling(batch, tile_b):
    """Balanced tiles: cap padding waste at <8 rows per tile, keep the tile a
    multiple of 8 sublanes, and use >=2 (even) grid steps once batch > 128 so
    the "parallel" batch axis can shard across both TensorCores on v7x."""
    n_tiles = max(1, -(-batch // tile_b))
    if batch > 128:
        n_tiles = max(n_tiles, 2)
    if n_tiles > 1 and n_tiles % 2 == 1:
        n_tiles += 1
    tb = _round_up(-(-batch // n_tiles), 8)
    return tb, tb * n_tiles, n_tiles


def decoder_forward(z, kparams, *, tile_b=256):
    # tile_b=256 fills the 256-row MXU on v6e/v7x; on v5e (128-row MXU) pass 128.
    B = z.shape[0]
    tb, b_pad, n_tiles = _choose_batch_tiling(B, tile_b)

    z_bf = z.astype(jnp.bfloat16)          # halve input-tile DMA, no in-kernel cast
    if b_pad != B:
        z_bf = jnp.pad(z_bf, ((0, b_pad - B), (0, 0)))

    def resident(p):
        # Same block index every grid step -> weights/biases stay VMEM-resident.
        return pl.BlockSpec(p.shape, lambda i: (0, 0))

    in_specs = [pl.BlockSpec((tb, LATENT_DIM), lambda i: (i, 0))]
    in_specs += [resident(p) for p in kparams]
    out_spec = pl.BlockSpec((tb, OUT_PAD), lambda i: (i, 0))

    out_padded = pl.pallas_call(
        decoder_kernel,
        out_shape=jax.ShapeDtypeStruct((b_pad, OUT_PAD), jnp.bfloat16),
        grid=(n_tiles,),
        in_specs=in_specs,
        out_specs=out_spec,
        compiler_params=pltpu.CompilerParams(
            dimension_semantics=("parallel",),   # shards batch tiles across TCs on v7x
        ),
    )(z_bf, *kparams)

    # Slice off batch/lane padding; return fp32 like the PyTorch module.
    return out_padded[:B, :OUTPUT_DIM].astype(jnp.float32)


# ---------------------------------------------------------------------------
# Pure-JAX reference (same eval-mode semantics, fp32 end-to-end).
# ---------------------------------------------------------------------------
def decoder_forward_ref(z, params):
    def lin(x, w, b):
        return x @ w.T + b

    def bn(x, bn_params):
        g, be, m, v = bn_params
        return (x - m) / jnp.sqrt(v + BN_EPS) * g + be

    def res(x, wa, ba, bna, wb, bb, bnb):
        y = jnp.maximum(bn(lin(x, wa, ba), bna), 0.0)
        y = bn(lin(y, wb, bb), bnb)
        return jnp.maximum(y + x, 0.0)

    h = jnp.maximum(bn(lin(z, params["w0"], params["b0"]), params["bn0"]), 0.0)
    h = res(h, params["w1a"], params["b1a"], params["bn1a"],
            params["w1b"], params["b1b"], params["bn1b"])
    h = res(h, params["w2a"], params["b2a"], params["bn2a"],
            params["w2b"], params["b2b"], params["bn2b"])
    return lin(h, params["wo"], params["bo"])


if __name__ == "__main__":
    key = jax.random.PRNGKey(0)
    k_z, k_p = jax.random.split(key)

    B = 8  # small batch
    z = jax.random.normal(k_z, (B, LATENT_DIM), dtype=jnp.float32)

    params = make_decoder_params(k_p)
    kparams = prepare_kernel_params(params)   # one-time, kernel-ready layout

    fwd = jax.jit(functools.partial(decoder_forward, tile_b=256))
    out = jax.block_until_ready(fwd(z, kparams))

    ref = decoder_forward_ref(z, params)
    assert out.shape == (B, OUTPUT_DIM)
    # bf16 weights + bf16 inter-layer activations (fp32 accumulation) -> loosened
    # tolerance vs the fp32 reference.
    assert jnp.allclose(out, ref, atol=5e-2, rtol=5e-2), (
        f"mismatch vs JAX reference, max abs diff = {jnp.max(jnp.abs(out - ref))}"
    )

    print("KERNEL_OK")
</pallas_src>

<mosaic_0001>
module attributes {stable_mosaic.version = 11 : i64} {
  func.func @decoder_kernel(%arg0: i32, %arg1: memref<8x128xbf16, #tpu.memory_space<vmem>>, %arg2: memref<128x512xbf16, #tpu.memory_space<vmem>>, %arg3: memref<1x512xf32, #tpu.memory_space<vmem>>, %arg4: memref<512x512xbf16, #tpu.memory_space<vmem>>, %arg5: memref<1x512xf32, #tpu.memory_space<vmem>>, %arg6: memref<512x512xbf16, #tpu.memory_space<vmem>>, %arg7: memref<1x512xf32, #tpu.memory_space<vmem>>, %arg8: memref<512x512xbf16, #tpu.memory_space<vmem>>, %arg9: memref<1x512xf32, #tpu.memory_space<vmem>>, %arg10: memref<512x512xbf16, #tpu.memory_space<vmem>>, %arg11: memref<1x512xf32, #tpu.memory_space<vmem>>, %arg12: memref<512x128xbf16, #tpu.memory_space<vmem>>, %arg13: memref<1x128xf32, #tpu.memory_space<vmem>>, %arg14: memref<8x128xbf16, #tpu.memory_space<vmem>>) attributes {dimension_semantics = [#tpu.dimension_semantics<parallel>], iteration_bounds = array<i64: 1>, scalar_prefetch = 0 : i64, scratch_operands = 0 : i64, tpu.core_type = #tpu.core_type<tc>, window_params = [{transform_indices = @transform_0, window_bounds = array<i64: 8, 128>}, {pipeline_mode = #tpu.pipeline_mode<synchronous>, transform_indices = @transform_1, window_bounds = array<i64: 128, 512>}, {pipeline_mode = #tpu.pipeline_mode<synchronous>, transform_indices = @transform_2, window_bounds = array<i64: 1, 512>}, {pipeline_mode = #tpu.pipeline_mode<synchronous>, transform_indices = @transform_3, window_bounds = array<i64: 512, 512>}, {pipeline_mode = #tpu.pipeline_mode<synchronous>, transform_indices = @transform_4, window_bounds = array<i64: 1, 512>}, {pipeline_mode = #tpu.pipeline_mode<synchronous>, transform_indices = @transform_5, window_bounds = array<i64: 512, 512>}, {pipeline_mode = #tpu.pipeline_mode<synchronous>, transform_indices = @transform_6, window_bounds = array<i64: 1, 512>}, {pipeline_mode = #tpu.pipeline_mode<synchronous>, transform_indices = @transform_7, window_bounds = array<i64: 512, 512>}, {pipeline_mode = #tpu.pipeline_mode<synchronous>, transform_indices = @transform_8, window_bounds = array<i64: 1, 512>}, {pipeline_mode = #tpu.pipeline_mode<synchronous>, transform_indices = @transform_9, window_bounds = array<i64: 512, 512>}, {pipeline_mode = #tpu.pipeline_mode<synchronous>, transform_indices = @transform_10, window_bounds = array<i64: 1, 512>}, {pipeline_mode = #tpu.pipeline_mode<synchronous>, transform_indices = @transform_11, window_bounds = array<i64: 512, 128>}, {pipeline_mode = #tpu.pipeline_mode<synchronous>, transform_indices = @transform_12, window_bounds = array<i64: 1, 128>}, {transform_indices = @transform_13, window_bounds = array<i64: 8, 128>}]} {
    %c0 = arith.constant 0 : index
    %c0_0 = arith.constant 0 : index
    %0 = vector.load %arg1[%c0, %c0_0] : memref<8x128xbf16, #tpu.memory_space<vmem>>, vector<8x128xbf16>
    %c0_1 = arith.constant 0 : index
    %c0_2 = arith.constant 0 : index
    %1 = vector.load %arg2[%c0_1, %c0_2] : memref<128x512xbf16, #tpu.memory_space<vmem>>, vector<128x512xbf16>
    %cst = arith.constant dense<0.000000e+00> : vector<8x512xf32>
    %2 = tpu.matmul %0, %1, %cst {dimension_numbers = #tpu.dot_dimension_numbers<[1], [0], [0], [1], [0, 0, 1, 1], [], []>} : vector<8x128xbf16>, vector<128x512xbf16>, vector<8x512xf32> -> vector<8x512xf32>
    %c0_3 = arith.constant 0 : index
    %c0_4 = arith.constant 0 : index
    %3 = vector.load %arg3[%c0_3, %c0_4] : memref<1x512xf32, #tpu.memory_space<vmem>>, vector<1x512xf32>
    %4 = vector.broadcast %3 : vector<1x512xf32> to vector<8x512xf32>
    %5 = arith.addf %2, %4 : vector<8x512xf32>
    %cst_5 = arith.constant 0.000000e+00 : f32
    %6 = vector.broadcast %cst_5 : f32 to vector<8x512xf32>
    %7 = arith.maximumf %5, %6 : vector<8x512xf32>
    %8 = arith.truncf %7 : vector<8x512xf32> to vector<8x512xbf16>
    %c0_6 = arith.constant 0 : index
    %c0_7 = arith.constant 0 : index
    %9 = vector.load %arg4[%c0_6, %c0_7] : memref<512x512xbf16, #tpu.memory_space<vmem>>, vector<512x512xbf16>
    %cst_8 = arith.constant dense<0.000000e+00> : vector<8x512xf32>
    %10 = tpu.matmul %8, %9, %cst_8 {dimension_numbers = #tpu.dot_dimension_numbers<[1], [0], [0], [1], [0, 0, 1, 1], [], []>} : vector<8x512xbf16>, vector<512x512xbf16>, vector<8x512xf32> -> vector<8x512xf32>
    %c0_9 = arith.constant 0 : index
    %c0_10 = arith.constant 0 : index
    %11 = vector.load %arg5[%c0_9, %c0_10] : memref<1x512xf32, #tpu.memory_space<vmem>>, vector<1x512xf32>
    %12 = vector.broadcast %11 : vector<1x512xf32> to vector<8x512xf32>
    %13 = arith.addf %10, %12 : vector<8x512xf32>
    %cst_11 = arith.constant 0.000000e+00 : f32
    %14 = vector.broadcast %cst_11 : f32 to vector<8x512xf32>
    %15 = arith.maximumf %13, %14 : vector<8x512xf32>
    %16 = arith.truncf %15 : vector<8x512xf32> to vector<8x512xbf16>
    %c0_12 = arith.constant 0 : index
    %c0_13 = arith.constant 0 : index
    %17 = vector.load %arg6[%c0_12, %c0_13] : memref<512x512xbf16, #tpu.memory_space<vmem>>, vector<512x512xbf16>
    %cst_14 = arith.constant dense<0.000000e+00> : vector<8x512xf32>
    %18 = tpu.matmul %16, %17, %cst_14 {dimension_numbers = #tpu.dot_dimension_numbers<[1], [0], [0], [1], [0, 0, 1, 1], [], []>} : vector<8x512xbf16>, vector<512x512xbf16>, vector<8x512xf32> -> vector<8x512xf32>
    %c0_15 = arith.constant 0 : index
    %c0_16 = arith.constant 0 : index
    %19 = vector.load %arg7[%c0_15, %c0_16] : memref<1x512xf32, #tpu.memory_space<vmem>>, vector<1x512xf32>
    %20 = vector.broadcast %19 : vector<1x512xf32> to vector<8x512xf32>
    %21 = arith.addf %18, %20 : vector<8x512xf32>
    %22 = arith.extf %8 : vector<8x512xbf16> to vector<8x512xf32>
    %23 = arith.addf %21, %22 : vector<8x512xf32>
    %cst_17 = arith.constant 0.000000e+00 : f32
    %24 = vector.broadcast %cst_17 : f32 to vector<8x512xf32>
    %25 = arith.maximumf %23, %24 : vector<8x512xf32>
    %26 = arith.truncf %25 : vector<8x512xf32> to vector<8x512xbf16>
    %c0_18 = arith.constant 0 : index
    %c0_19 = arith.constant 0 : index
    %27 = vector.load %arg8[%c0_18, %c0_19] : memref<512x512xbf16, #tpu.memory_space<vmem>>, vector<512x512xbf16>
    %cst_20 = arith.constant dense<0.000000e+00> : vector<8x512xf32>
    %28 = tpu.matmul %26, %27, %cst_20 {dimension_numbers = #tpu.dot_dimension_numbers<[1], [0], [0], [1], [0, 0, 1, 1], [], []>} : vector<8x512xbf16>, vector<512x512xbf16>, vector<8x512xf32> -> vector<8x512xf32>
    %c0_21 = arith.constant 0 : index
    %c0_22 = arith.constant 0 : index
    %29 = vector.load %arg9[%c0_21, %c0_22] : memref<1x512xf32, #tpu.memory_space<vmem>>, vector<1x512xf32>
    %30 = vector.broadcast %29 : vector<1x512xf32> to vector<8x512xf32>
    %31 = arith.addf %28, %30 : vector<8x512xf32>
    %cst_23 = arith.constant 0.000000e+00 : f32
    %32 = vector.broadcast %cst_23 : f32 to vector<8x512xf32>
    %33 = arith.maximumf %31, %32 : vector<8x512xf32>
    %34 = arith.truncf %33 : vector<8x512xf32> to vector<8x512xbf16>
    %c0_24 = arith.constant 0 : index
    %c0_25 = arith.constant 0 : index
    %35 = vector.load %arg10[%c0_24, %c0_25] : memref<512x512xbf16, #tpu.memory_space<vmem>>, vector<512x512xbf16>
    %cst_26 = arith.constant dense<0.000000e+00> : vector<8x512xf32>
    %36 = tpu.matmul %34, %35, %cst_26 {dimension_numbers = #tpu.dot_dimension_numbers<[1], [0], [0], [1], [0, 0, 1, 1], [], []>} : vector<8x512xbf16>, vector<512x512xbf16>, vector<8x512xf32> -> vector<8x512xf32>
    %c0_27 = arith.constant 0 : index
    %c0_28 = arith.constant 0 : index
    %37 = vector.load %arg11[%c0_27, %c0_28] : memref<1x512xf32, #tpu.memory_space<vmem>>, vector<1x512xf32>
    %38 = vector.broadcast %37 : vector<1x512xf32> to vector<8x512xf32>
    %39 = arith.addf %36, %38 : vector<8x512xf32>
    %40 = arith.extf %26 : vector<8x512xbf16> to vector<8x512xf32>
    %41 = arith.addf %39, %40 : vector<8x512xf32>
    %cst_29 = arith.constant 0.000000e+00 : f32
    %42 = vector.broadcast %cst_29 : f32 to vector<8x512xf32>
    %43 = arith.maximumf %41, %42 : vector<8x512xf32>
    %44 = arith.truncf %43 : vector<8x512xf32> to vector<8x512xbf16>
    %c0_30 = arith.constant 0 : index
    %c0_31 = arith.constant 0 : index
    %45 = vector.load %arg12[%c0_30, %c0_31] : memref<512x128xbf16, #tpu.memory_space<vmem>>, vector<512x128xbf16>
    %cst_32 = arith.constant dense<0.000000e+00> : vector<8x128xf32>
    %46 = tpu.matmul %44, %45, %cst_32 {dimension_numbers = #tpu.dot_dimension_numbers<[1], [0], [0], [1], [0, 0, 1, 1], [], []>} : vector<8x512xbf16>, vector<512x128xbf16>, vector<8x128xf32> -> vector<8x128xf32>
    %c0_33 = arith.constant 0 : index
    %c0_34 = arith.constant 0 : index
    %47 = vector.load %arg13[%c0_33, %c0_34] : memref<1x128xf32, #tpu.memory_space<vmem>>, vector<1x128xf32>
    %48 = vector.broadcast %47 : vector<1x128xf32> to vector<8x128xf32>
    %49 = arith.addf %46, %48 : vector<8x128xf32>
    %50 = arith.truncf %49 : vector<8x128xf32> to vector<8x128xbf16>
    %c0_35 = arith.constant 0 : index
    %c0_36 = arith.constant 0 : index
    %51 = vector.load %arg14[%c0_35, %c0_36] : memref<8x128xbf16, #tpu.memory_space<vmem>>, vector<8x128xbf16>
    tpu.vector_store %arg14[%c0_35, %c0_36], %50 {strides = array<i32>} : memref<8x128xbf16, #tpu.memory_space<vmem>>, vector<8x128xbf16>,
    return
  }
  func.func @transform_0(%arg0: i32) -> (i32, i32) {
    %c0_i32 = arith.constant 0 : i32
    %c0_i32_0 = arith.constant 0 : i32
    return %arg0, %c0_i32 : i32, i32
  }
  func.func @transform_1(%arg0: i32) -> (i32, i32) {
    %c0_i32 = arith.constant 0 : i32
    %c0_i32_0 = arith.constant 0 : i32
    %c0_i32_1 = arith.constant 0 : i32
    return %c0_i32, %c0_i32_0 : i32, i32
  }
  func.func @transform_2(%arg0: i32) -> (i32, i32) {
    %c0_i32 = arith.constant 0 : i32
    %c0_i32_0 = arith.constant 0 : i32
    %c0_i32_1 = arith.constant 0 : i32
    return %c0_i32, %c0_i32_0 : i32, i32
  }
  func.func @transform_3(%arg0: i32) -> (i32, i32) {
    %c0_i32 = arith.constant 0 : i32
    %c0_i32_0 = arith.constant 0 : i32
    %c0_i32_1 = arith.constant 0 : i32
    return %c0_i32, %c0_i32_0 : i32, i32
  }
  func.func @transform_4(%arg0: i32) -> (i32, i32) {
    %c0_i32 = arith.constant 0 : i32
    %c0_i32_0 = arith.constant 0 : i32
    %c0_i32_1 = arith.constant 0 : i32
    return %c0_i32, %c0_i32_0 : i32, i32
  }
  func.func @transform_5(%arg0: i32) -> (i32, i32) {
    %c0_i32 = arith.constant 0 : i32
    %c0_i32_0 = arith.constant 0 : i32
    %c0_i32_1 = arith.constant 0 : i32
    return %c0_i32, %c0_i32_0 : i32, i32
  }
  func.func @transform_6(%arg0: i32) -> (i32, i32) {
    %c0_i32 = arith.constant 0 : i32
    %c0_i32_0 = arith.constant 0 : i32
    %c0_i32_1 = arith.constant 0 : i32
    return %c0_i32, %c0_i32_0 : i32, i32
  }
  func.func @transform_7(%arg0: i32) -> (i32, i32) {
    %c0_i32 = arith.constant 0 : i32
    %c0_i32_0 = arith.constant 0 : i32
    %c0_i32_1 = arith.constant 0 : i32
    return %c0_i32, %c0_i32_0 : i32, i32
  }
  func.func @transform_8(%arg0: i32) -> (i32, i32) {
    %c0_i32 = arith.constant 0 : i32
    %c0_i32_0 = arith.constant 0 : i32
    %c0_i32_1 = arith.constant 0 : i32
    return %c0_i32, %c0_i32_0 : i32, i32
  }
  func.func @transform_9(%arg0: i32) -> (i32, i32) {
    %c0_i32 = arith.constant 0 : i32
    %c0_i32_0 = arith.constant 0 : i32
    %c0_i32_1 = arith.constant 0 : i32
    return %c0_i32, %c0_i32_0 : i32, i32
  }
  func.func @transform_10(%arg0: i32) -> (i32, i32) {
    %c0_i32 = arith.constant 0 : i32
    %c0_i32_0 = arith.constant 0 : i32
    %c0_i32_1 = arith.constant 0 : i32
    return %c0_i32, %c0_i32_0 : i32, i32
  }
  func.func @transform_11(%arg0: i32) -> (i32, i32) {
    %c0_i32 = arith.constant 0 : i32
    %c0_i32_0 = arith.constant 0 : i32
    %c0_i32_1 = arith.constant 0 : i32
    return %c0_i32, %c0_i32_0 : i32, i32
  }
  func.func @transform_12(%arg0: i32) -> (i32, i32) {
    %c0_i32 = arith.constant 0 : i32
    %c0_i32_0 = arith.constant 0 : i32
    %c0_i32_1 = arith.constant 0 : i32
    return %c0_i32, %c0_i32_0 : i32, i32
  }
  func.func @transform_13(%arg0: i32) -> (i32, i32) {
    %c0_i32 = arith.constant 0 : i32
    %c0_i32_0 = arith.constant 0 : i32
    return %arg0, %c0_i32 : i32, i32
  }
}

</mosaic_0001>

<llo_original>
// kernel: decoder_forward.1
$region0: #{decoder_forward.1}
  #allocation0 [shape = 'u32[]', space=smem, size = 0x4, offset = 0x4, fixed_abs, tag = 'smem constant byte address 0x4 - core index']
  #allocation1 [shape = 'u32[72,128]{1,0:T(1,128)}', space=vmem, size = 0x9000, scoped, tag = 'internal scratch']
  %s0 = inlined_call_operand.vmem [shape: bf16[8,128], index: 0, kind: input, shape index: {}]
  %s1 = inlined_call_operand.hbm [shape: bf16[128,512], index: 1, kind: input, shape index: {}]
  %s2 = inlined_call_operand.vmem [shape: f32[1,512], index: 2, kind: input, shape index: {}]
  %s3 = inlined_call_operand.hbm [shape: bf16[512,512], index: 3, kind: input, shape index: {}]
  %s4 = inlined_call_operand.vmem [shape: f32[1,512], index: 4, kind: input, shape index: {}]
  %s5 = inlined_call_operand.hbm [shape: bf16[512,512], index: 5, kind: input, shape index: {}]
  %s6 = inlined_call_operand.vmem [shape: f32[1,512], index: 6, kind: input, shape index: {}]
  %s7 = inlined_call_operand.hbm [shape: bf16[512,512], index: 7, kind: input, shape index: {}]
  %s8 = inlined_call_operand.vmem [shape: f32[1,512], index: 8, kind: input, shape index: {}]
  %s9 = inlined_call_operand.hbm [shape: bf16[512,512], index: 9, kind: input, shape index: {}]
  %s10 = inlined_call_operand.vmem [shape: f32[1,512], index: 10, kind: input, shape index: {}]
  %s11 = inlined_call_operand.hbm [shape: bf16[512,128], index: 11, kind: input, shape index: {}]
  %s12 = inlined_call_operand.vmem [shape: f32[1,128], index: 12, kind: input, shape index: {}]
  %s13 = inlined_call_operand.vmem [shape: bf16[8,128], index: 13, kind: output, shape index: {}]
  %s14 = sld [smem:[#allocation0]]
  $region86: #{decoder_forward.1} parent=0
    _
  %s16 = ssub.s32 1, %s14
  %s17 = scalar_select 0, %s16, %s14
  $region1: #{decoder_forward.1} parent=0
    #allocation2 [shape = 'u8[131072]{0}', space=vmem, size = 0x20000, scoped, tag = 'input window, operand 1, single buffered']
    #allocation3 [shape = 's32[1]{0}', space=sflag, size = 0x4, scoped, tag = 'scoped memory for decoder_forward.1']
    #allocation4 [shape = 'u8[524288]{0}', space=vmem, size = 0x80000, scoped, tag = 'input window, operand 3, single buffered']
    #allocation5 [shape = 's32[1]{0}', space=sflag, size = 0x4, scoped, tag = 'scoped memory for decoder_forward.1']
    #allocation6 [shape = 'u8[524288]{0}', space=vmem, size = 0x80000, scoped, tag = 'input window, operand 5, single buffered']
    #allocation7 [shape = 'u8[524288]{0}', space=vmem, size = 0x80000, scoped, tag = 'input window, operand 7, single buffered']
    #allocation8 [shape = 's32[1]{0}', space=sflag, size = 0x4, scoped, tag = 'scoped memory for decoder_forward.1']
    #allocation9 [shape = 'u8[524288]{0}', space=vmem, size = 0x80000, scoped, tag = 'input window, operand 9, single buffered']
    #allocation10 [shape = 'u8[131072]{0}', space=vmem, size = 0x20000, scoped, tag = 'input window, operand 11, single buffered']
    #allocation11 [shape = 's32[1]{0}', space=sflag, size = 0x4, scoped, tag = 'scoped memory for decoder_forward.1']
    %18 = vsyncpa [#allocation3], 0
    %19 = vsyncpa [#allocation5], 0
    %20 = vsyncpa [#allocation8], 0
    %21 = vsyncpa [#allocation11], 0
    // Predicated region
    $region2: #{decoder_forward.1} parent=1 // pred_check
      _
    $region3: #{decoder_forward.1} parent=1 // pred_check_branch
      %23 = sbr.rel (0) target = $region5
    $region4: #{decoder_forward.1} parent=1 // pred_region
      _
    $region5: #{decoder_forward.1} parent=1 // pred_fallthru
      _
    // Predicated region
    $region6: #{decoder_forward.1} parent=1 // pred_check
      _
    $region7: #{decoder_forward.1} parent=1 // pred_check_branch
      %25 = sbr.rel (0) target = $region9
    $region8: #{decoder_forward.1} parent=1 // pred_region
      %27 = vsyncadd [#allocation3], 0
      %s28 = sshll.u32 %s1, 4
      %s29 = int_to_ptr.hbm [resolvable:$true] %s28
      %s30 = sshll.u32 [#allocation2], 4
      %s31 = int_to_ptr.vmem [resolvable:$true] %s30
      %36 = dma.hbm_to_vmem [thread:$0]  %s29, 4096, %s31, [#allocation3], 256, 256, 16
    $region9: #{decoder_forward.1} parent=1 // pred_fallthru
      _
    // Predicated region
    $region10: #{decoder_forward.1} parent=1 // pred_check
      _
    $region11: #{decoder_forward.1} parent=1 // pred_check_branch
      %38 = sbr.rel (0) target = $region13
    $region12: #{decoder_forward.1} parent=1 // pred_region
      _
    $region13: #{decoder_forward.1} parent=1 // pred_fallthru
      _
    // Predicated region
    $region14: #{decoder_forward.1} parent=1 // pred_check
      _
    $region15: #{decoder_forward.1} parent=1 // pred_check_branch
      %40 = sbr.rel (0) target = $region17
    $region16: #{decoder_forward.1} parent=1 // pred_region
      %42 = vsyncadd [#allocation5], 0
      %s43 = sshll.u32 %s3, 4
      %s44 = int_to_ptr.hbm [resolvable:$true] %s43
      %s45 = sshll.u32 [#allocation4], 4
      %s46 = int_to_ptr.vmem [resolvable:$true] %s45
      %51 = dma.hbm_to_vmem [thread:$0]  %s44, 16384, %s46, [#allocation5], 256, 256, 16
    $region17: #{decoder_forward.1} parent=1 // pred_fallthru
      _
    // Predicated region
    $region18: #{decoder_forward.1} parent=1 // pred_check
      _
    $region19: #{decoder_forward.1} parent=1 // pred_check_branch
      %53 = sbr.rel (0) target = $region21
    $region20: #{decoder_forward.1} parent=1 // pred_region
      _
    $region21: #{decoder_forward.1} parent=1 // pred_fallthru
      _
    // Predicated region
    $region22: #{decoder_forward.1} parent=1 // pred_check
      _
    $region23: #{decoder_forward.1} parent=1 // pred_check_branch
      %55 = sbr.rel (0) target = $region25
    $region24: #{decoder_forward.1} parent=1 // pred_region
      %57 = vsyncadd [#allocation5], 0
      %s58 = sshll.u32 %s5, 4
      %s59 = int_to_ptr.hbm [resolvable:$true] %s58
      %s60 = sshll.u32 [#allocation6], 4
      %s61 = int_to_ptr.vmem [resolvable:$true] %s60
      %66 = dma.hbm_to_vmem [thread:$0]  %s59, 16384, %s61, [#allocation5], 256, 256, 16
    $region25: #{decoder_forward.1} parent=1 // pred_fallthru
      _
    // Predicated region
    $region26: #{decoder_forward.1} parent=1 // pred_check
      _
    $region27: #{decoder_forward.1} parent=1 // pred_check_branch
      %68 = sbr.rel (0) target = $region29
    $region28: #{decoder_forward.1} parent=1 // pred_region
      _
    $region29: #{decoder_forward.1} parent=1 // pred_fallthru
      _
    // Predicated region
    $region30: #{decoder_forward.1} parent=1 // pred_check
      _
    $region31: #{decoder_forward.1} parent=1 // pred_check_branch
      %70 = sbr.rel (0) target = $region33
    $region32: #{decoder_forward.1} parent=1 // pred_region
      %72 = vsyncadd [#allocation8], 0
      %s73 = sshll.u32 %s7, 4
      %s74 = int_to_ptr.hbm [resolvable:$true] %s73
      %s75 = sshll.u32 [#allocation7], 4
      %s76 = int_to_ptr.vmem [resolvable:$true] %s75
      %81 = dma.hbm_to_vmem [thread:$0]  %s74, 16384, %s76, [#allocation8], 256, 256, 16
    $region33: #{decoder_forward.1} parent=1 // pred_fallthru
      _
    // Predicated region
    $region34: #{decoder_forward.1} parent=1 // pred_check
      _
    $region35: #{decoder_forward.1} parent=1 // pred_check_branch
      %83 = sbr.rel (0) target = $region37
    $region36: #{decoder_forward.1} parent=1 // pred_region
      _
    $region37: #{decoder_forward.1} parent=1 // pred_fallthru
      _
    // Predicated region
    $region38: #{decoder_forward.1} parent=1 // pred_check
      _
    $region39: #{decoder_forward.1} parent=1 // pred_check_branch
      %85 = sbr.rel (0) target = $region41
    $region40: #{decoder_forward.1} parent=1 // pred_region
      %87 = vsyncadd [#allocation8], 0
      %s88 = sshll.u32 %s9, 4
      %s89 = int_to_ptr.hbm [resolvable:$true] %s88
      %s90 = sshll.u32 [#allocation9], 4
      %s91 = int_to_ptr.vmem [resolvable:$true] %s90
      %96 = dma.hbm_to_vmem [thread:$0]  %s89, 16384, %s91, [#allocation8], 256, 256, 16
    $region41: #{decoder_forward.1} parent=1 // pred_fallthru
      _
    // Predicated region
    $region42: #{decoder_forward.1} parent=1 // pred_check
      _
    $region43: #{decoder_forward.1} parent=1 // pred_check_branch
      %98 = sbr.rel (0) target = $region45
    $region44: #{decoder_forward.1} parent=1 // pred_region
      _
    $region45: #{decoder_forward.1} parent=1 // pred_fallthru
      _
    // Predicated region
    $region46: #{decoder_forward.1} parent=1 // pred_check
      _
    $region47: #{decoder_forward.1} parent=1 // pred_check_branch
      %100 = sbr.rel (0) target = $region49
    $region48: #{decoder_forward.1} parent=1 // pred_region
      %102 = vsyncadd [#allocation11], 0
      %s103 = sshll.u32 %s11, 4
      %s104 = int_to_ptr.hbm [resolvable:$true] %s103
      %s105 = sshll.u32 [#allocation10], 4
      %s106 = int_to_ptr.vmem [resolvable:$true] %s105
      %111 = dma.hbm_to_vmem [thread:$0]  %s104, 4096, %s106, [#allocation11], 64, 64, 4
    $region49: #{decoder_forward.1} parent=1 // pred_fallthru
      _
    // Predicated region
    $region50: #{decoder_forward.1} parent=1 // pred_check
      _
    $region51: #{decoder_forward.1} parent=1 // pred_check_branch
      %113 = sbr.rel (0) target = $region53
    $region52: #{decoder_forward.1} parent=1 // pred_region
      _
    $region53: #{decoder_forward.1} parent=1 // pred_fallthru
      _
    // Predicated region
    $region54: #{decoder_forward.1} parent=1 // pred_check
      _
    $region55: #{decoder_forward.1} parent=1 // pred_check_branch
      %115 = sbr.rel (0) target = $region57
    $region56: #{decoder_forward.1} parent=1 // pred_region
      %117 = dma.done [#allocation3], 4096
    $region57: #{decoder_forward.1} parent=1 // pred_fallthru
      _
    // Predicated region
    $region58: #{decoder_forward.1} parent=1 // pred_check
      _
    $region59: #{decoder_forward.1} parent=1 // pred_check_branch
      %119 = sbr.rel (0) target = $region61
    $region60: #{decoder_forward.1} parent=1 // pred_region
      %121 = dma.done [#allocation5], 16384
    $region61: #{decoder_forward.1} parent=1 // pred_fallthru
      _
    // Predicated region
    $region62: #{decoder_forward.1} parent=1 // pred_check
      _
    $region63: #{decoder_forward.1} parent=1 // pred_check_branch
      %123 = sbr.rel (0) target = $region65
    $region64: #{decoder_forward.1} parent=1 // pred_region
      %125 = dma.done [#allocation5], 16384
    $region65: #{decoder_forward.1} parent=1 // pred_fallthru
      _
    // Predicated region
    $region66: #{decoder_forward.1} parent=1 // pred_check
      _
    $region67: #{decoder_forward.1} parent=1 // pred_check_branch
      %127 = sbr.rel (0) target = $region69
    $region68: #{decoder_forward.1} parent=1 // pred_region
      %129 = dma.done [#allocation8], 16384
    $region69: #{decoder_forward.1} parent=1 // pred_fallthru
      _
    // Predicated region
    $region70: #{decoder_forward.1} parent=1 // pred_check
      _
    $region71: #{decoder_forward.1} parent=1 // pred_check_branch
      %131 = sbr.rel (0) target = $region73
    $region72: #{decoder_forward.1} parent=1 // pred_region
      %133 = dma.done [#allocation8], 16384
    $region73: #{decoder_forward.1} parent=1 // pred_fallthru
      _
    // Predicated region
    $region74: #{decoder_forward.1} parent=1 // pred_check
      _
    $region75: #{decoder_forward.1} parent=1 // pred_check_branch
      %135 = sbr.rel (0) target = $region77
    $region76: #{decoder_forward.1} parent=1 // pred_region
      %137 = dma.done [#allocation11], 4096
    $region77: #{decoder_forward.1} parent=1 // pred_fallthru
      _
    %v138 = vld [vmem:[%s0] sm:$0xf]
    %v139 = vld [vmem:[#allocation2] sm:$0xff]
    %v140 = vld [vmem:[#allocation2 + $0x8] sm:$0xff]
    %v141 = vld [vmem:[#allocation2 + $0x10] sm:$0xff]
    %v142 = vld [vmem:[#allocation2 + $0x18] sm:$0xff]
    %v143 = vld [vmem:[#allocation2 + $0x20] sm:$0xff]
    %v144 = vld [vmem:[#allocation2 + $0x28] sm:$0xff]
    %v145 = vld [vmem:[#allocation2 + $0x30] sm:$0xff]
    %v146 = vld [vmem:[#allocation2 + $0x38] sm:$0xff]
    %v147 = vld [vmem:[#allocation2 + $0x40] sm:$0xff]
    %v148 = vld [vmem:[#allocation2 + $0x48] sm:$0xff]
    %v149 = vld [vmem:[#allocation2 + $0x50] sm:$0xff]
    %v150 = vld [vmem:[#allocation2 + $0x58] sm:$0xff]
    %v151 = vld [vmem:[#allocation2 + $0x60] sm:$0xff]
    %v152 = vld [vmem:[#allocation2 + $0x68] sm:$0xff]
    %v153 = vld [vmem:[#allocation2 + $0x70] sm:$0xff]
    %v154 = vld [vmem:[#allocation2 + $0x78] sm:$0xff]
    %v155 = vld [vmem:[#allocation2 + $0x80] sm:$0xff]
    %v156 = vld [vmem:[#allocation2 + $0x88] sm:$0xff]
    %v157 = vld [vmem:[#allocation2 + $0x90] sm:$0xff]
    %v158 = vld [vmem:[#allocation2 + $0x98] sm:$0xff]
    %v159 = vld [vmem:[#allocation2 + $0xa0] sm:$0xff]
    %v160 = vld [vmem:[#allocation2 + $0xa8] sm:$0xff]
    %v161 = vld [vmem:[#allocation2 + $0xb0] sm:$0xff]
    %v162 = vld [vmem:[#allocation2 + $0xb8] sm:$0xff]
    %v163 = vld [vmem:[#allocation2 + $0xc0] sm:$0xff]
    %v164 = vld [vmem:[#allocation2 + $0xc8] sm:$0xff]
    %v165 = vld [vmem:[#allocation2 + $0xd0] sm:$0xff]
    %v166 = vld [vmem:[#allocation2 + $0xd8] sm:$0xff]
    %v167 = vld [vmem:[#allocation2 + $0xe0] sm:$0xff]
    %v168 = vld [vmem:[#allocation2 + $0xe8] sm:$0xff]
    %v169 = vld [vmem:[#allocation2 + $0xf0] sm:$0xff]
    %v170 = vld [vmem:[#allocation2 + $0xf8] sm:$0xff]
    %v171 = vld [vmem:[%s2] sm:$0xf]
    %v173 = vperm.slane %v171, 0
    %v174 = vperm.slane %v171, 1
    %v175 = vperm.slane %v171, 2
    %v176 = vperm.slane %v171, 3
    %v213 = vunpack.c.l.b16 %v139
    %v214 = vunpack.c.h.b16 %v139
    %v215 = vunpack.c.l.b16 %v140
    %v216 = vunpack.c.h.b16 %v140
    %v217 = vunpack.c.l.b16 %v141
    %v218 = vunpack.c.h.b16 %v141
    %v219 = vunpack.c.l.b16 %v142
    %v220 = vunpack.c.h.b16 %v142
    %v221 = vunpack.c.l.b16 %v143
    %v222 = vunpack.c.h.b16 %v143
    %v223 = vunpack.c.l.b16 %v144
    %v224 = vunpack.c.h.b16 %v144
    %v225 = vunpack.c.l.b16 %v145
    %v226 = vunpack.c.h.b16 %v145
    %v227 = vunpack.c.l.b16 %v146
    %v228 = vunpack.c.h.b16 %v146
    %v229 = vunpack.c.l.b16 %v147
    %v230 = vunpack.c.h.b16 %v147
    %v231 = vunpack.c.l.b16 %v148
    %v232 = vunpack.c.h.b16 %v148
    %v233 = vunpack.c.l.b16 %v149
    %v234 = vunpack.c.h.b16 %v149
    %v235 = vunpack.c.l.b16 %v150
    %v236 = vunpack.c.h.b16 %v150
    %v237 = vunpack.c.l.b16 %v151
    %v238 = vunpack.c.h.b16 %v151
    %v239 = vunpack.c.l.b16 %v152
    %v240 = vunpack.c.h.b16 %v152
    %v241 = vunpack.c.l.b16 %v153
    %v242 = vunpack.c.h.b16 %v153
    %v243 = vunpack.c.l.b16 %v154
    %v244 = vunpack.c.h.b16 %v154
    %v245 = vunpack.c.l.b16 %v155
    %v246 = vunpack.c.h.b16 %v155
    %v247 = vunpack.c.l.b16 %v156
    %v248 = vunpack.c.h.b16 %v156
    %v249 = vunpack.c.l.b16 %v157
    %v250 = vunpack.c.h.b16 %v157
    %v251 = vunpack.c.l.b16 %v158
    %v252 = vunpack.c.h.b16 %v158
    %v253 = vunpack.c.l.b16 %v159
    %v254 = vunpack.c.h.b16 %v159
    %v255 = vunpack.c.l.b16 %v160
    %v256 = vunpack.c.h.b16 %v160
    %v257 = vunpack.c.l.b16 %v161
    %v258 = vunpack.c.h.b16 %v161
    %v259 = vunpack.c.l.b16 %v162
    %v260 = vunpack.c.h.b16 %v162
    %v261 = vunpack.c.l.b16 %v163
    %v262 = vunpack.c.h.b16 %v163
    %v263 = vunpack.c.l.b16 %v164
    %v264 = vunpack.c.h.b16 %v164
    %v265 = vunpack.c.l.b16 %v165
    %v266 = vunpack.c.h.b16 %v165
    %v267 = vunpack.c.l.b16 %v166
    %v268 = vunpack.c.h.b16 %v166
    %v269 = vunpack.c.l.b16 %v167
    %v270 = vunpack.c.h.b16 %v167
    %v271 = vunpack.c.l.b16 %v168
    %v272 = vunpack.c.h.b16 %v168
    %v273 = vunpack.c.l.b16 %v169
    %v274 = vunpack.c.h.b16 %v169
    %v275 = vunpack.c.l.b16 %v170
    %v276 = vunpack.c.h.b16 %v170
    %v277 = vpack.c.b16 %v217, %v213
    %v278 = vpack.c.b16 %v218, %v214
    %v279 = vpack.c.b16 %v219, %v215
    %v280 = vpack.c.b16 %v220, %v216
    %v281 = vpack.c.b16 %v225, %v221
    %v282 = vpack.c.b16 %v226, %v222
    %v283 = vpack.c.b16 %v227, %v223
    %v284 = vpack.c.b16 %v228, %v224
    %v285 = vpack.c.b16 %v233, %v229
    %v286 = vpack.c.b16 %v234, %v230
    %v287 = vpack.c.b16 %v235, %v231
    %v288 = vpack.c.b16 %v236, %v232
    %v289 = vpack.c.b16 %v241, %v237
    %v290 = vpack.c.b16 %v242, %v238
    %v291 = vpack.c.b16 %v243, %v239
    %v292 = vpack.c.b16 %v244, %v240
    %v293 = vpack.c.b16 %v249, %v245
    %v294 = vpack.c.b16 %v250, %v246
    %v295 = vpack.c.b16 %v251, %v247
    %v296 = vpack.c.b16 %v252, %v248
    %v297 = vpack.c.b16 %v257, %v253
    %v298 = vpack.c.b16 %v258, %v254
    %v299 = vpack.c.b16 %v259, %v255
    %v300 = vpack.c.b16 %v260, %v256
    %v301 = vpack.c.b16 %v265, %v261
    %v302 = vpack.c.b16 %v266, %v262
    %v303 = vpack.c.b16 %v267, %v263
    %v304 = vpack.c.b16 %v268, %v264
    %v305 = vpack.c.b16 %v273, %v269
    %v306 = vpack.c.b16 %v274, %v270
    %v307 = vpack.c.b16 %v275, %v271
    %v308 = vpack.c.b16 %v276, %v272
    %341 = vmatpush.bf16.msra.mxu0 %v305
    %342 = vmatpush.bf16.msra.mxu0 %v301
    %343 = vmatpush.bf16.msra.mxu0 %v297
    %344 = vmatpush.bf16.msra.mxu0 %v293
    %345 = vmatpush.bf16.msra.mxu0 %v289
    %346 = vmatpush.bf16.msra.mxu0 %v285
    %347 = vmatpush.bf16.msra.mxu0 %v281
    %348 = vmatpush.bf16.msra.mxu0 %v277
    %349 = vmatmul.bf16.gmra.mxu0 %v138
    %v350 = vpop.f32.mrf.mxu0
    %v351 = vadd.f32 %v173, %v350
    %v352 = vpop.f32.mrf.mxu0
    %353 = vdwg.mxu0
    %354 = vmatpush.bf16.msra.mxu0 %v306
    %355 = vmatpush.bf16.msra.mxu0 %v302
    %356 = vmatpush.bf16.msra.mxu0 %v298
    %357 = vmatpush.bf16.msra.mxu0 %v294
    %358 = vmatpush.bf16.msra.mxu0 %v290
    %359 = vmatpush.bf16.msra.mxu0 %v286
    %360 = vmatpush.bf16.msra.mxu0 %v282
    %361 = vmatpush.bf16.msra.mxu0 %v278
    %362 = vmatmul.bf16.gmra.mxu0 %v138
    %v363 = vpop.f32.mrf.mxu0
    %v364 = vadd.f32 %v174, %v363
    %v365 = vpop.f32.mrf.mxu0
    %366 = vdwg.mxu0
    %367 = vmatpush.bf16.msra.mxu0 %v307
    %368 = vmatpush.bf16.msra.mxu0 %v303
    %369 = vmatpush.bf16.msra.mxu0 %v299
    %370 = vmatpush.bf16.msra.mxu0 %v295
    %371 = vmatpush.bf16.msra.mxu0 %v291
    %372 = vmatpush.bf16.msra.mxu0 %v287
    %373 = vmatpush.bf16.msra.mxu0 %v283
    %374 = vmatpush.bf16.msra.mxu0 %v279
    %375 = vmatmul.bf16.gmra.mxu0 %v138
    %v376 = vpop.f32.mrf.mxu0
    %v377 = vadd.f32 %v175, %v376
    %v378 = vpop.f32.mrf.mxu0
    %379 = vdwg.mxu0
    %380 = vmatpush.bf16.msra.mxu0 %v308
    %381 = vmatpush.bf16.msra.mxu0 %v304
    %382 = vmatpush.bf16.msra.mxu0 %v300
    %383 = vmatpush.bf16.msra.mxu0 %v296
    %384 = vmatpush.bf16.msra.mxu0 %v292
    %385 = vmatpush.bf16.msra.mxu0 %v288
    %386 = vmatpush.bf16.msra.mxu0 %v284
    %387 = vmatpush.bf16.msra.mxu0 %v280
    %388 = vmatmul.bf16.gmra.mxu0 %v138
    %v389 = vpop.f32.mrf.mxu0
    %v390 = vadd.f32 %v176, %v389
    %v391 = vpop.f32.mrf.mxu0
    %392 = vdwg.mxu0
    %v393 = vmax.f32 %v351, 0.0
    %v394 = vmax.f32 %v364, 0.0
    %v395 = vmax.f32 %v377, 0.0
    %v396 = vmax.f32 %v390, 0.0
    %v397 = vpack.c.bf16 %v394, %v393
    %v398 = vpack.c.bf16 %v396, %v395
    %v399 = vld [vmem:[#allocation4] sm:$0xff]
    %v400 = vld [vmem:[#allocation4 + $0x8] sm:$0xff]
    %v401 = vld [vmem:[#allocation4 + $0x10] sm:$0xff]
    %v402 = vld [vmem:[#allocation4 + $0x18] sm:$0xff]
    %v403 = vld [vmem:[#allocation4 + $0x20] sm:$0xff]
    %v404 = vld [vmem:[#allocation4 + $0x28] sm:$0xff]
    %v405 = vld [vmem:[#allocation4 + $0x30] sm:$0xff]
    %v406 = vld [vmem:[#allocation4 + $0x38] sm:$0xff]
    %v407 = vld [vmem:[#allocation4 + $0x40] sm:$0xff]
    %v408 = vld [vmem:[#allocation4 + $0x48] sm:$0xff]
    %v409 = vld [vmem:[#allocation4 + $0x50] sm:$0xff]
    %v410 = vld [vmem:[#allocation4 + $0x58] sm:$0xff]
    %v411 = vld [vmem:[#allocation4 + $0x60] sm:$0xff]
    %v412 = vld [vmem:[#allocation4 + $0x68] sm:$0xff]
    %v413 = vld [vmem:[#allocation4 + $0x70] sm:$0xff]
    %v414 = vld [vmem:[#allocation4 + $0x78] sm:$0xff]
    %v415 = vld [vmem:[#allocation4 + $0x80] sm:$0xff]
    %v416 = vld [vmem:[#allocation4 + $0x88] sm:$0xff]
    %v417 = vld [vmem:[#allocation4 + $0x90] sm:$0xff]
    %v418 = vld [vmem:[#allocation4 + $0x98] sm:$0xff]
    %v419 = vld [vmem:[#allocation4 + $0xa0] sm:$0xff]
    %v420 = vld [vmem:[#allocation4 + $0xa8] sm:$0xff]
    %v421 = vld [vmem:[#allocation4 + $0xb0] sm:$0xff]
    %v422 = vld [vmem:[#allocation4 + $0xb8] sm:$0xff]
    %v423 = vld [vmem:[#allocation4 + $0xc0] sm:$0xff]
    %v424 = vld [vmem:[#allocation4 + $0xc8] sm:$0xff]
    %v425 = vld [vmem:[#allocation4 + $0xd0] sm:$0xff]
    %v426 = vld [vmem:[#allocation4 + $0xd8] sm:$0xff]
    %v427 = vld [vmem:[#allocation4 + $0xe0] sm:$0xff]
    %v428 = vld [vmem:[#allocation4 + $0xe8] sm:$0xff]
    %v429 = vld [vmem:[#allocation4 + $0xf0] sm:$0xff]
    %v430 = vld [vmem:[#allocation4 + $0xf8] sm:$0xff]
    %v431 = vld [vmem:[#allocation4 + $0x100] sm:$0xff]
    %v432 = vld [vmem:[#allocation4 + $0x108] sm:$0xff]
    %v433 = vld [vmem:[#allocation4 + $0x110] sm:$0xff]
    %v434 = vld [vmem:[#allocation4 + $0x118] sm:$0xff]
    %v435 = vld [vmem:[#allocation4 + $0x120] sm:$0xff]
    %v436 = vld [vmem:[#allocation4 + $0x128] sm:$0xff]
    %v437 = vld [vmem:[#allocation4 + $0x130] sm:$0xff]
    %v438 = vld [vmem:[#allocation4 + $0x138] sm:$0xff]
    %v439 = vld [vmem:[#allocation4 + $0x140] sm:$0xff]
    %v440 = vld [vmem:[#allocation4 + $0x148] sm:$0xff]
    %v441 = vld [vmem:[#allocation4 + $0x150] sm:$0xff]
    %v442 = vld [vmem:[#allocation4 + $0x158] sm:$0xff]
    %v443 = vld [vmem:[#allocation4 + $0x160] sm:$0xff]
    %v444 = vld [vmem:[#allocation4 + $0x168] sm:$0xff]
    %v445 = vld [vmem:[#allocation4 + $0x170] sm:$0xff]
    %v446 = vld [vmem:[#allocation4 + $0x178] sm:$0xff]
    %v447 = vld [vmem:[#allocation4 + $0x180] sm:$0xff]
    %v448 = vld [vmem:[#allocation4 + $0x188] sm:$0xff]
    %v449 = vld [vmem:[#allocation4 + $0x190] sm:$0xff]
    %v450 = vld [vmem:[#allocation4 + $0x198] sm:$0xff]
    %v451 = vld [vmem:[#allocation4 + $0x1a0] sm:$0xff]
    %v452 = vld [vmem:[#allocation4 + $0x1a8] sm:$0xff]
    %v453 = vld [vmem:[#allocation4 + $0x1b0] sm:$0xff]
    %v454 = vld [vmem:[#allocation4 + $0x1b8] sm:$0xff]
    %v455 = vld [vmem:[#allocation4 + $0x1c0] sm:$0xff]
    %v456 = vld [vmem:[#allocation4 + $0x1c8] sm:$0xff]
    %v457 = vld [vmem:[#allocation4 + $0x1d0] sm:$0xff]
    %v458 = vld [vmem:[#allocation4 + $0x1d8] sm:$0xff]
    %v459 = vld [vmem:[#allocation4 + $0x1e0] sm:$0xff]
    %v460 = vld [vmem:[#allocation4 + $0x1e8] sm:$0xff]
    %v461 = vld [vmem:[#allocation4 + $0x1f0] sm:$0xff]
    %v462 = vld [vmem:[#allocation4 + $0x1f8] sm:$0xff]
    %v463 = vld [vmem:[#allocation4 + $0x200] sm:$0xff]
    %v464 = vld [vmem:[#allocation4 + $0x208] sm:$0xff]
    %v465 = vld [vmem:[#allocation4 + $0x210] sm:$0xff]
    %v466 = vld [vmem:[#allocation4 + $0x218] sm:$0xff]
    %v467 = vld [vmem:[#allocation4 + $0x220] sm:$0xff]
    %v468 = vld [vmem:[#allocation4 + $0x228] sm:$0xff]
    %v469 = vld [vmem:[#allocation4 + $0x230] sm:$0xff]
    %v470 = vld [vmem:[#allocation4 + $0x238] sm:$0xff]
    %v471 = vld [vmem:[#allocation4 + $0x240] sm:$0xff]
    %v472 = vld [vmem:[#allocation4 + $0x248] sm:$0xff]
    %v473 = vld [vmem:[#allocation4 + $0x250] sm:$0xff]
    %v474 = vld [vmem:[#allocation4 + $0x258] sm:$0xff]
    %v475 = vld [vmem:[#allocation4 + $0x260] sm:$0xff]
    %v476 = vld [vmem:[#allocation4 + $0x268] sm:$0xff]
    %v477 = vld [vmem:[#allocation4 + $0x270] sm:$0xff]
    %v478 = vld [vmem:[#allocation4 + $0x278] sm:$0xff]
    %v479 = vld [vmem:[#allocation4 + $0x280] sm:$0xff]
    %v480 = vld [vmem:[#allocation4 + $0x288] sm:$0xff]
    %v481 = vld [vmem:[#allocation4 + $0x290] sm:$0xff]
    %v482 = vld [vmem:[#allocation4 + $0x298] sm:$0xff]
    %v483 = vld [vmem:[#allocation4 + $0x2a0] sm:$0xff]
    %v484 = vld [vmem:[#allocation4 + $0x2a8] sm:$0xff]
    %v485 = vld [vmem:[#allocation4 + $0x2b0] sm:$0xff]
    %v486 = vld [vmem:[#allocation4 + $0x2b8] sm:$0xff]
    %v487 = vld [vmem:[#allocation4 + $0x2c0] sm:$0xff]
    %v488 = vld [vmem:[#allocation4 + $0x2c8] sm:$0xff]
    %v489 = vld [vmem:[#allocation4 + $0x2d0] sm:$0xff]
    %v490 = vld [vmem:[#allocation4 + $0x2d8] sm:$0xff]
    %v491 = vld [vmem:[#allocation4 + $0x2e0] sm:$0xff]
    %v492 = vld [vmem:[#allocation4 + $0x2e8] sm:$0xff]
    %v493 = vld [vmem:[#allocation4 + $0x2f0] sm:$0xff]
    %v494 = vld [vmem:[#allocation4 + $0x2f8] sm:$0xff]
    %v495 = vld [vmem:[#allocation4 + $0x300] sm:$0xff]
    %v496 = vld [vmem:[#allocation4 + $0x308] sm:$0xff]
    %v497 = vld [vmem:[#allocation4 + $0x310] sm:$0xff]
    %v498 = vld [vmem:[#allocation4 + $0x318] sm:$0xff]
    %v499 = vld [vmem:[#allocation4 + $0x320] sm:$0xff]
    %v500 = vld [vmem:[#allocation4 + $0x328] sm:$0xff]
    %v501 = vld [vmem:[#allocation4 + $0x330] sm:$0xff]
    %v502 = vld [vmem:[#allocation4 + $0x338] sm:$0xff]
    %v503 = vld [vmem:[#allocation4 + $0x340] sm:$0xff]
    %v504 = vld [vmem:[#allocation4 + $0x348] sm:$0xff]
    %v505 = vld [vmem:[#allocation4 + $0x350] sm:$0xff]
    %v506 = vld [vmem:[#allocation4 + $0x358] sm:$0xff]
    %v507 = vld [vmem:[#allocation4 + $0x360] sm:$0xff]
    %v508 = vld [vmem:[#allocation4 + $0x368] sm:$0xff]
    %v509 = vld [vmem:[#allocation4 + $0x370] sm:$0xff]
    %v510 = vld [vmem:[#allocation4 + $0x378] sm:$0xff]
    %v511 = vld [vmem:[#allocation4 + $0x380] sm:$0xff]
    %v512 = vld [vmem:[#allocation4 + $0x388] sm:$0xff]
    %v513 = vld [vmem:[#allocation4 + $0x390] sm:$0xff]
    %v514 = vld [vmem:[#allocation4 + $0x398] sm:$0xff]
    %v515 = vld [vmem:[#allocation4 + $0x3a0] sm:$0xff]
    %v516 = vld [vmem:[#allocation4 + $0x3a8] sm:$0xff]
    %v517 = vld [vmem:[#allocation4 + $0x3b0] sm:$0xff]
    %v518 = vld [vmem:[#allocation4 + $0x3b8] sm:$0xff]
    %v519 = vld [vmem:[#allocation4 + $0x3c0] sm:$0xff]
    %v520 = vld [vmem:[#allocation4 + $0x3c8] sm:$0xff]
    %v521 = vld [vmem:[#allocation4 + $0x3d0] sm:$0xff]
    %v522 = vld [vmem:[#allocation4 + $0x3d8] sm:$0xff]
    %v523 = vld [vmem:[#allocation4 + $0x3e0] sm:$0xff]
    %v524 = vld [vmem:[#allocation4 + $0x3e8] sm:$0xff]
    %v525 = vld [vmem:[#allocation4 + $0x3f0] sm:$0xff]
    %v526 = vld [vmem:[#allocation4 + $0x3f8] sm:$0xff]
    %v527 = vld [vmem:[%s4] sm:$0xf]
    %v529 = vperm.slane %v527, 0
    %v530 = vperm.slane %v527, 1
    %v531 = vperm.slane %v527, 2
    %v532 = vperm.slane %v527, 3
    %v539 = vunpack.c.l.b16 %v397
    %v540 = vunpack.c.h.b16 %v397
    %v541 = vunpack.c.l.b16 %v398
    %v542 = vunpack.c.h.b16 %v398
    %v543 = vpack.c.b16 %v539, %v539
    %v544 = vpack.c.b16 %v540, %v540
    %v545 = vpack.c.b16 %v541, %v541
    %v546 = vpack.c.b16 %v542, %v542
    %v679 = vunpack.c.l.b16 %v399
    %v680 = vunpack.c.h.b16 %v399
    %v681 = vunpack.c.l.b16 %v400
    %v682 = vunpack.c.h.b16 %v400
    %v683 = vunpack.c.l.b16 %v401
    %v684 = vunpack.c.h.b16 %v401
    %v685 = vunpack.c.l.b16 %v402
    %v686 = vunpack.c.h.b16 %v402
    %v687 = vunpack.c.l.b16 %v403
    %v688 = vunpack.c.h.b16 %v403
    %v689 = vunpack.c.l.b16 %v404
    %v690 = vunpack.c.h.b16 %v404
    %v691 = vunpack.c.l.b16 %v405
    %v692 = vunpack.c.h.b16 %v405
    %v693 = vunpack.c.l.b16 %v406
    %v694 = vunpack.c.h.b16 %v406
    %v695 = vunpack.c.l.b16 %v407
    %v696 = vunpack.c.h.b16 %v407
    %v697 = vunpack.c.l.b16 %v408
    %v698 = vunpack.c.h.b16 %v408
    %v699 = vunpack.c.l.b16 %v409
    %v700 = vunpack.c.h.b16 %v409
    %v701 = vunpack.c.l.b16 %v410
    %v702 = vunpack.c.h.b16 %v410
    %v703 = vunpack.c.l.b16 %v411
    %v704 = vunpack.c.h.b16 %v411
    %v705 = vunpack.c.l.b16 %v412
    %v706 = vunpack.c.h.b16 %v412
    %v707 = vunpack.c.l.b16 %v413
    %v708 = vunpack.c.h.b16 %v413
    %v709 = vunpack.c.l.b16 %v414
    %v710 = vunpack.c.h.b16 %v414
    %v711 = vunpack.c.l.b16 %v415
    %v712 = vunpack.c.h.b16 %v415
    %v713 = vunpack.c.l.b16 %v416
    %v714 = vunpack.c.h.b16 %v416
    %v715 = vunpack.c.l.b16 %v417
    %v716 = vunpack.c.h.b16 %v417
    %v717 = vunpack.c.l.b16 %v418
    %v718 = vunpack.c.h.b16 %v418
    %v719 = vunpack.c.l.b16 %v419
    %v720 = vunpack.c.h.b16 %v419
    %v721 = vunpack.c.l.b16 %v420
    %v722 = vunpack.c.h.b16 %v420
    %v723 = vunpack.c.l.b16 %v421
    %v724 = vunpack.c.h.b16 %v421
    %v725 = vunpack.c.l.b16 %v422
    %v726 = vunpack.c.h.b16 %v422
    %v727 = vunpack.c.l.b16 %v423
    %v728 = vunpack.c.h.b16 %v423
    %v729 = vunpack.c.l.b16 %v424
    %v730 = vunpack.c.h.b16 %v424
    %v731 = vunpack.c.l.b16 %v425
    %v732 = vunpack.c.h.b16 %v425
    %v733 = vunpack.c.l.b16 %v426
    %v734 = vunpack.c.h.b16 %v426
    %v735 = vunpack.c.l.b16 %v427
    %v736 = vunpack.c.h.b16 %v427
    %v737 = vunpack.c.l.b16 %v428
    %v738 = vunpack.c.h.b16 %v428
    %v739 = vunpack.c.l.b16 %v429
    %v740 = vunpack.c.h.b16 %v429
    %v741 = vunpack.c.l.b16 %v430
    %v742 = vunpack.c.h.b16 %v430
    %v743 = vunpack.c.l.b16 %v431
    %v744 = vunpack.c.h.b16 %v431
    %v745 = vunpack.c.l.b16 %v432
    %v746 = vunpack.c.h.b16 %v432
    %v747 = vunpack.c.l.b16 %v433
    %v748 = vunpack.c.h.b16 %v433
    %v749 = vunpack.c.l.b16 %v434
    %v750 = vunpack.c.h.b16 %v434
    %v751 = vunpack.c.l.b16 %v435
    %v752 = vunpack.c.h.b16 %v435
    %v753 = vunpack.c.l.b16 %v436
    %v754 = vunpack.c.h.b16 %v436
    %v755 = vunpack.c.l.b16 %v437
    %v756 = vunpack.c.h.b16 %v437
    %v757 = vunpack.c.l.b16 %v438
    %v758 = vunpack.c.h.b16 %v438
    %v759 = vunpack.c.l.b16 %v439
    %v760 = vunpack.c.h.b16 %v439
    %v761 = vunpack.c.l.b16 %v440
    %v762 = vunpack.c.h.b16 %v440
    %v763 = vunpack.c.l.b16 %v441
    %v764 = vunpack.c.h.b16 %v441
    %v765 = vunpack.c.l.b16 %v442
    %v766 = vunpack.c.h.b16 %v442
    %v767 = vunpack.c.l.b16 %v443
    %v768 = vunpack.c.h.b16 %v443
    %v769 = vunpack.c.l.b16 %v444
    %v770 = vunpack.c.h.b16 %v444
    %v771 = vunpack.c.l.b16 %v445
    %v772 = vunpack.c.h.b16 %v445
    %v773 = vunpack.c.l.b16 %v446
    %v774 = vunpack.c.h.b16 %v446
    %v775 = vunpack.c.l.b16 %v447
    %v776 = vunpack.c.h.b16 %v447
    %v777 = vunpack.c.l.b16 %v448
    %v778 = vunpack.c.h.b16 %v448
    %v779 = vunpack.c.l.b16 %v449
    %v780 = vunpack.c.h.b16 %v449
    %v781 = vunpack.c.l.b16 %v450
    %v782 = vunpack.c.h.b16 %v450
    %v783 = vunpack.c.l.b16 %v451
    %v784 = vunpack.c.h.b16 %v451
    %v785 = vunpack.c.l.b16 %v452
    %v786 = vunpack.c.h.b16 %v452
    %v787 = vunpack.c.l.b16 %v453
    %v788 = vunpack.c.h.b16 %v453
    %v789 = vunpack.c.l.b16 %v454
    %v790 = vunpack.c.h.b16 %v454
    %v791 = vunpack.c.l.b16 %v455
    %v792 = vunpack.c.h.b16 %v455
    %v793 = vunpack.c.l.b16 %v456
    %v794 = vunpack.c.h.b16 %v456
    %v795 = vunpack.c.l.b16 %v457
    %v796 = vunpack.c.h.b16 %v457
    %v797 = vunpack.c.l.b16 %v458
    %v798 = vunpack.c.h.b16 %v458
    %v799 = vunpack.c.l.b16 %v459
    %v800 = vunpack.c.h.b16 %v459
    %v801 = vunpack.c.l.b16 %v460
    %v802 = vunpack.c.h.b16 %v460
    %v803 = vunpack.c.l.b16 %v461
    %v804 = vunpack.c.h.b16 %v461
    %v805 = vunpack.c.l.b16 %v462
    %v806 = vunpack.c.h.b16 %v462
    %v807 = vunpack.c.l.b16 %v463
    %v808 = vunpack.c.h.b16 %v463
    %v809 = vunpack.c.l.b16 %v464
    %v810 = vunpack.c.h.b16 %v464
    %v811 = vunpack.c.l.b16 %v465
    %v812 = vunpack.c.h.b16 %v465
    %v813 = vunpack.c.l.b16 %v466
    %v814 = vunpack.c.h.b16 %v466
    %v815 = vunpack.c.l.b16 %v467
    %v816 = vunpack.c.h.b16 %v467
    %v817 = vunpack.c.l.b16 %v468
    %v818 = vunpack.c.h.b16 %v468
    %v819 = vunpack.c.l.b16 %v469
    %v820 = vunpack.c.h.b16 %v469
    %v821 = vunpack.c.l.b16 %v470
    %v822 = vunpack.c.h.b16 %v470
    %v823 = vunpack.c.l.b16 %v471
    %v824 = vunpack.c.h.b16 %v471
    %v825 = vunpack.c.l.b16 %v472
    %v826 = vunpack.c.h.b16 %v472
    %v827 = vunpack.c.l.b16 %v473
    %v828 = vunpack.c.h.b16 %v473
    %v829 = vunpack.c.l.b16 %v474
    %v830 = vunpack.c.h.b16 %v474
    %v831 = vunpack.c.l.b16 %v475
    %v832 = vunpack.c.h.b16 %v475
    %v833 = vunpack.c.l.b16 %v476
    %v834 = vunpack.c.h.b16 %v476
    %v835 = vunpack.c.l.b16 %v477
    %v836 = vunpack.c.h.b16 %v477
    %v837 = vunpack.c.l.b16 %v478
    %v838 = vunpack.c.h.b16 %v478
    %v839 = vunpack.c.l.b16 %v479
    %v840 = vunpack.c.h.b16 %v479
    %v841 = vunpack.c.l.b16 %v480
    %v842 = vunpack.c.h.b16 %v480
    %v843 = vunpack.c.l.b16 %v481
    %v844 = vunpack.c.h.b16 %v481
    %v845 = vunpack.c.l.b16 %v482
    %v846 = vunpack.c.h.b16 %v482
    %v847 = vunpack.c.l.b16 %v483
    %v848 = vunpack.c.h.b16 %v483
    %v849 = vunpack.c.l.b16 %v484
    %v850 = vunpack.c.h.b16 %v484
    %v851 = vunpack.c.l.b16 %v485
    %v852 = vunpack.c.h.b16 %v485
    %v853 = vunpack.c.l.b16 %v486
    %v854 = vunpack.c.h.b16 %v486
    %v855 = vunpack.c.l.b16 %v487
    %v856 = vunpack.c.h.b16 %v487
    %v857 = vunpack.c.l.b16 %v488
    %v858 = vunpack.c.h.b16 %v488
    %v859 = vunpack.c.l.b16 %v489
    %v860 = vunpack.c.h.b16 %v489
    %v861 = vunpack.c.l.b16 %v490
    %v862 = vunpack.c.h.b16 %v490
    %v863 = vunpack.c.l.b16 %v491
    %v864 = vunpack.c.h.b16 %v491
    %v865 = vunpack.c.l.b16 %v492
    %v866 = vunpack.c.h.b16 %v492
    %v867 = vunpack.c.l.b16 %v493
    %v868 = vunpack.c.h.b16 %v493
    %v869 = vunpack.c.l.b16 %v494
    %v870 = vunpack.c.h.b16 %v494
    %v871 = vunpack.c.l.b16 %v495
    %v872 = vunpack.c.h.b16 %v495
    %v873 = vunpack.c.l.b16 %v496
    %v874 = vunpack.c.h.b16 %v496
    %v875 = vunpack.c.l.b16 %v497
    %v876 = vunpack.c.h.b16 %v497
    %v877 = vunpack.c.l.b16 %v498
    %v878 = vunpack.c.h.b16 %v498
    %v879 = vunpack.c.l.b16 %v499
    %v880 = vunpack.c.h.b16 %v499
    %v881 = vunpack.c.l.b16 %v500
    %v882 = vunpack.c.h.b16 %v500
    %v883 = vunpack.c.l.b16 %v501
    %v884 = vunpack.c.h.b16 %v501
    %v885 = vunpack.c.l.b16 %v502
    %v886 = vunpack.c.h.b16 %v502
    %v887 = vunpack.c.l.b16 %v503
    %v888 = vunpack.c.h.b16 %v503
    %v889 = vunpack.c.l.b16 %v504
    %v890 = vunpack.c.h.b16 %v504
    %v891 = vunpack.c.l.b16 %v505
    %v892 = vunpack.c.h.b16 %v505
    %v893 = vunpack.c.l.b16 %v506
    %v894 = vunpack.c.h.b16 %v506
    %v895 = vunpack.c.l.b16 %v507
    %v896 = vunpack.c.h.b16 %v507
    %v897 = vunpack.c.l.b16 %v508
    %v898 = vunpack.c.h.b16 %v508
    %v899 = vunpack.c.l.b16 %v509
    %v900 = vunpack.c.h.b16 %v509
    %v901 = vunpack.c.l.b16 %v510
    %v902 = vunpack.c.h.b16 %v510
    %v903 = vunpack.c.l.b16 %v511
    %v904 = vunpack.c.h.b16 %v511
    %v905 = vunpack.c.l.b16 %v512
    %v906 = vunpack.c.h.b16 %v512
    %v907 = vunpack.c.l.b16 %v513
    %v908 = vunpack.c.h.b16 %v513
    %v909 = vunpack.c.l.b16 %v514
    %v910 = vunpack.c.h.b16 %v514
    %v911 = vunpack.c.l.b16 %v515
    %v912 = vunpack.c.h.b16 %v515
    %v913 = vunpack.c.l.b16 %v516
    %v914 = vunpack.c.h.b16 %v516
    %v915 = vunpack.c.l.b16 %v517
    %v916 = vunpack.c.h.b16 %v517
    %v917 = vunpack.c.l.b16 %v518
    %v918 = vunpack.c.h.b16 %v518
    %v919 = vunpack.c.l.b16 %v519
    %v920 = vunpack.c.h.b16 %v519
    %v921 = vunpack.c.l.b16 %v520
    %v922 = vunpack.c.h.b16 %v520
    %v923 = vunpack.c.l.b16 %v521
    %v924 = vunpack.c.h.b16 %v521
    %v925 = vunpack.c.l.b16 %v522
    %v926 = vunpack.c.h.b16 %v522
    %v927 = vunpack.c.l.b16 %v523
    %v928 = vunpack.c.h.b16 %v523
    %v929 = vunpack.c.l.b16 %v524
    %v930 = vunpack.c.h.b16 %v524
    %v931 = vunpack.c.l.b16 %v525
    %v932 = vunpack.c.h.b16 %v525
    %v933 = vunpack.c.l.b16 %v526
    %v934 = vunpack.c.h.b16 %v526
    %v935 = vpack.c.b16 %v683, %v679
    %v936 = vpack.c.b16 %v684, %v680
    %v937 = vpack.c.b16 %v685, %v681
    %v938 = vpack.c.b16 %v686, %v682
    %v939 = vpack.c.b16 %v691, %v687
    %v940 = vpack.c.b16 %v692, %v688
    %v941 = vpack.c.b16 %v693, %v689
    %v942 = vpack.c.b16 %v694, %v690
    %v943 = vpack.c.b16 %v699, %v695
    %v944 = vpack.c.b16 %v700, %v696
    %v945 = vpack.c.b16 %v701, %v697
    %v946 = vpack.c.b16 %v702, %v698
    %v947 = vpack.c.b16 %v707, %v703
    %v948 = vpack.c.b16 %v708, %v704
    %v949 = vpack.c.b16 %v709, %v705
    %v950 = vpack.c.b16 %v710, %v706
    %v951 = vpack.c.b16 %v715, %v711
    %v952 = vpack.c.b16 %v716, %v712
    %v953 = vpack.c.b16 %v717, %v713
    %v954 = vpack.c.b16 %v718, %v714
    %v955 = vpack.c.b16 %v723, %v719
    %v956 = vpack.c.b16 %v724, %v720
    %v957 = vpack.c.b16 %v725, %v721
    %v958 = vpack.c.b16 %v726, %v722
    %v959 = vpack.c.b16 %v731, %v727
    %v960 = vpack.c.b16 %v732, %v728
    %v961 = vpack.c.b16 %v733, %v729
    %v962 = vpack.c.b16 %v734, %v730
    %v963 = vpack.c.b16 %v739, %v735
    %v964 = vpack.c.b16 %v740, %v736
    %v965 = vpack.c.b16 %v741, %v737
    %v966 = vpack.c.b16 %v742, %v738
    %v967 = vpack.c.b16 %v747, %v743
    %v968 = vpack.c.b16 %v748, %v744
    %v969 = vpack.c.b16 %v749, %v745
    %v970 = vpack.c.b16 %v750, %v746
    %v971 = vpack.c.b16 %v755, %v751
    %v972 = vpack.c.b16 %v756, %v752
    %v973 = vpack.c.b16 %v757, %v753
    %v974 = vpack.c.b16 %v758, %v754
    %v975 = vpack.c.b16 %v763, %v759
    %v976 = vpack.c.b16 %v764, %v760
    %v977 = vpack.c.b16 %v765, %v761
    %v978 = vpack.c.b16 %v766, %v762
    %v979 = vpack.c.b16 %v771, %v767
    %v980 = vpack.c.b16 %v772, %v768
    %v981 = vpack.c.b16 %v773, %v769
    %v982 = vpack.c.b16 %v774, %v770
    %v983 = vpack.c.b16 %v779, %v775
    %v984 = vpack.c.b16 %v780, %v776
    %v985 = vpack.c.b16 %v781, %v777
    %v986 = vpack.c.b16 %v782, %v778
    %v987 = vpack.c.b16 %v787, %v783
    %v988 = vpack.c.b16 %v788, %v784
    %v989 = vpack.c.b16 %v789, %v785
    %v990 = vpack.c.b16 %v790, %v786
    %v991 = vpack.c.b16 %v795, %v791
    %v992 = vpack.c.b16 %v796, %v792
    %v993 = vpack.c.b16 %v797, %v793
    %v994 = vpack.c.b16 %v798, %v794
    %v995 = vpack.c.b16 %v803, %v799
    %v996 = vpack.c.b16 %v804, %v800
    %v997 = vpack.c.b16 %v805, %v801
    %v998 = vpack.c.b16 %v806, %v802
    %v999 = vpack.c.b16 %v811, %v807
    %v1000 = vpack.c.b16 %v812, %v808
    %v1001 = vpack.c.b16 %v813, %v809
    %v1002 = vpack.c.b16 %v814, %v810
    %v1003 = vpack.c.b16 %v819, %v815
    %v1004 = vpack.c.b16 %v820, %v816
    %v1005 = vpack.c.b16 %v821, %v817
    %v1006 = vpack.c.b16 %v822, %v818
    %v1007 = vpack.c.b16 %v827, %v823
    %v1008 = vpack.c.b16 %v828, %v824
    %v1009 = vpack.c.b16 %v829, %v825
    %v1010 = vpack.c.b16 %v830, %v826
    %v1011 = vpack.c.b16 %v835, %v831
    %v1012 = vpack.c.b16 %v836, %v832
    %v1013 = vpack.c.b16 %v837, %v833
    %v1014 = vpack.c.b16 %v838, %v834
    %v1015 = vpack.c.b16 %v843, %v839
    %v1016 = vpack.c.b16 %v844, %v840
    %v1017 = vpack.c.b16 %v845, %v841
    %v1018 = vpack.c.b16 %v846, %v842
    %v1019 = vpack.c.b16 %v851, %v847
    %v1020 = vpack.c.b16 %v852, %v848
    %v1021 = vpack.c.b16 %v853, %v849
    %v1022 = vpack.c.b16 %v854, %v850
    %v1023 = vpack.c.b16 %v859, %v855
    %v1024 = vpack.c.b16 %v860, %v856
    %v1025 = vpack.c.b16 %v861, %v857
    %v1026 = vpack.c.b16 %v862, %v858
    %v1027 = vpack.c.b16 %v867, %v863
    %v1028 = vpack.c.b16 %v868, %v864
    %v1029 = vpack.c.b16 %v869, %v865
    %v1030 = vpack.c.b16 %v870, %v866
    %v1031 = vpack.c.b16 %v875, %v871
    %v1032 = vpack.c.b16 %v876, %v872
    %v1033 = vpack.c.b16 %v877, %v873
    %v1034 = vpack.c.b16 %v878, %v874
    %v1035 = vpack.c.b16 %v883, %v879
    %v1036 = vpack.c.b16 %v884, %v880
    %v1037 = vpack.c.b16 %v885, %v881
    %v1038 = vpack.c.b16 %v886, %v882
    %v1039 = vpack.c.b16 %v891, %v887
    %v1040 = vpack.c.b16 %v892, %v888
    %v1041 = vpack.c.b16 %v893, %v889
    %v1042 = vpack.c.b16 %v894, %v890
    %v1043 = vpack.c.b16 %v899, %v895
    %v1044 = vpack.c.b16 %v900, %v896
    %v1045 = vpack.c.b16 %v901, %v897
    %v1046 = vpack.c.b16 %v902, %v898
    %v1047 = vpack.c.b16 %v907, %v903
    %v1048 = vpack.c.b16 %v908, %v904
    %v1049 = vpack.c.b16 %v909, %v905
    %v1050 = vpack.c.b16 %v910, %v906
    %v1051 = vpack.c.b16 %v915, %v911
    %v1052 = vpack.c.b16 %v916, %v912
    %v1053 = vpack.c.b16 %v917, %v913
    %v1054 = vpack.c.b16 %v918, %v914
    %v1055 = vpack.c.b16 %v923, %v919
    %v1056 = vpack.c.b16 %v924, %v920
    %v1057 = vpack.c.b16 %v925, %v921
    %v1058 = vpack.c.b16 %v926, %v922
    %v1059 = vpack.c.b16 %v931, %v927
    %v1060 = vpack.c.b16 %v932, %v928
    %v1061 = vpack.c.b16 %v933, %v929
    %v1062 = vpack.c.b16 %v934, %v930
    %1191 = vmatpush.bf16.msra.mxu0 %v963
    %1192 = vmatpush.bf16.msra.mxu0 %v959
    %1193 = vmatpush.bf16.msra.mxu0 %v955
    %1194 = vmatpush.bf16.msra.mxu0 %v951
    %1195 = vmatpush.bf16.msra.mxu0 %v947
    %1196 = vmatpush.bf16.msra.mxu0 %v943
    %1197 = vmatpush.bf16.msra.mxu0 %v939
    %1198 = vmatpush.bf16.msra.mxu0 %v935
    %1199 = vmatmul.bf16.gmra.mxu0 %v543
    %v1200 = vpop.f32.mrf.mxu0
    %v1201 = vadd.f32 %v529, %v1200
    %v1202 = vpop.f32.mrf.mxu0
    %1203 = vdwg.mxu0
    %1204 = vmatpush.bf16.msra.mxu0 %v995
    %1205 = vmatpush.bf16.msra.mxu0 %v991
    %1206 = vmatpush.bf16.msra.mxu0 %v987
    %1207 = vmatpush.bf16.msra.mxu0 %v983
    %1208 = vmatpush.bf16.msra.mxu0 %v979
    %1209 = vmatpush.bf16.msra.mxu0 %v975
    %1210 = vmatpush.bf16.msra.mxu0 %v971
    %1211 = vmatpush.bf16.msra.mxu0 %v967
    %1212 = vmatmul.bf16.gmra.mxu0 %v544
    %v1213 = vpop.f32.mrf.mxu0
    %v1214 = vadd.f32 %v1201, %v1213
    %v1215 = vpop.f32.mrf.mxu0
    %1216 = vdwg.mxu0
    %1217 = vmatpush.bf16.msra.mxu0 %v1027
    %1218 = vmatpush.bf16.msra.mxu0 %v1023
    %1219 = vmatpush.bf16.msra.mxu0 %v1019
    %1220 = vmatpush.bf16.msra.mxu0 %v1015
    %1221 = vmatpush.bf16.msra.mxu0 %v1011
    %1222 = vmatpush.bf16.msra.mxu0 %v1007
    %1223 = vmatpush.bf16.msra.mxu0 %v1003
    %1224 = vmatpush.bf16.msra.mxu0 %v999
    %1225 = vmatmul.bf16.gmra.mxu0 %v545
    %v1226 = vpop.f32.mrf.mxu0
    %v1227 = vadd.f32 %v1214, %v1226
    %v1228 = vpop.f32.mrf.mxu0
    %1229 = vdwg.mxu0
    %1230 = vmatpush.bf16.msra.mxu0 %v1059
    %1231 = vmatpush.bf16.msra.mxu0 %v1055
    %1232 = vmatpush.bf16.msra.mxu0 %v1051
    %1233 = vmatpush.bf16.msra.mxu0 %v1047
    %1234 = vmatpush.bf16.msra.mxu0 %v1043
    %1235 = vmatpush.bf16.msra.mxu0 %v1039
    %1236 = vmatpush.bf16.msra.mxu0 %v1035
    %1237 = vmatpush.bf16.msra.mxu0 %v1031
    %1238 = vmatmul.bf16.gmra.mxu0 %v546
    %v1239 = vpop.f32.mrf.mxu0
    %v1240 = vadd.f32 %v1227, %v1239
    %v1241 = vpop.f32.mrf.mxu0
    %1242 = vdwg.mxu0
    %1243 = vmatpush.bf16.msra.mxu0 %v964
    %1244 = vmatpush.bf16.msra.mxu0 %v960
    %1245 = vmatpush.bf16.msra.mxu0 %v956
    %1246 = vmatpush.bf16.msra.mxu0 %v952
    %1247 = vmatpush.bf16.msra.mxu0 %v948
    %1248 = vmatpush.bf16.msra.mxu0 %v944
    %1249 = vmatpush.bf16.msra.mxu0 %v940
    %1250 = vmatpush.bf16.msra.mxu0 %v936
    %1251 = vmatmul.bf16.gmra.mxu0 %v543
    %v1252 = vpop.f32.mrf.mxu0
    %v1253 = vadd.f32 %v530, %v1252
    %v1254 = vpop.f32.mrf.mxu0
    %1255 = vdwg.mxu0
    %1256 = vmatpush.bf16.msra.mxu0 %v996
    %1257 = vmatpush.bf16.msra.mxu0 %v992
    %1258 = vmatpush.bf16.msra.mxu0 %v988
    %1259 = vmatpush.bf16.msra.mxu0 %v984
    %1260 = vmatpush.bf16.msra.mxu0 %v980
    %1261 = vmatpush.bf16.msra.mxu0 %v976
    %1262 = vmatpush.bf16.msra.mxu0 %v972
    %1263 = vmatpush.bf16.msra.mxu0 %v968
    %1264 = vmatmul.bf16.gmra.mxu0 %v544
    %v1265 = vpop.f32.mrf.mxu0
    %v1266 = vadd.f32 %v1253, %v1265
    %v1267 = vpop.f32.mrf.mxu0
    %1268 = vdwg.mxu0
    %1269 = vmatpush.bf16.msra.mxu0 %v1028
    %1270 = vmatpush.bf16.msra.mxu0 %v1024
    %1271 = vmatpush.bf16.msra.mxu0 %v1020
    %1272 = vmatpush.bf16.msra.mxu0 %v1016
    %1273 = vmatpush.bf16.msra.mxu0 %v1012
    %1274 = vmatpush.bf16.msra.mxu0 %v1008
    %1275 = vmatpush.bf16.msra.mxu0 %v1004
    %1276 = vmatpush.bf16.msra.mxu0 %v1000
    %1277 = vmatmul.bf16.gmra.mxu0 %v545
    %v1278 = vpop.f32.mrf.mxu0
    %v1279 = vadd.f32 %v1266, %v1278
    %v1280 = vpop.f32.mrf.mxu0
    %1281 = vdwg.mxu0
    %1282 = vmatpush.bf16.msra.mxu0 %v1060
    %1283 = vmatpush.bf16.msra.mxu0 %v1056
    %1284 = vmatpush.bf16.msra.mxu0 %v1052
    %1285 = vmatpush.bf16.msra.mxu0 %v1048
    %1286 = vmatpush.bf16.msra.mxu0 %v1044
    %1287 = vmatpush.bf16.msra.mxu0 %v1040
    %1288 = vmatpush.bf16.msra.mxu0 %v1036
    %1289 = vmatpush.bf16.msra.mxu0 %v1032
    %1290 = vmatmul.bf16.gmra.mxu0 %v546
    %v1291 = vpop.f32.mrf.mxu0
    %v1292 = vadd.f32 %v1279, %v1291
    %v1293 = vpop.f32.mrf.mxu0
    %1294 = vdwg.mxu0
    %1295 = vmatpush.bf16.msra.mxu0 %v965
    %1296 = vmatpush.bf16.msra.mxu0 %v961
    %1297 = vmatpush.bf16.msra.mxu0 %v957
    %1298 = vmatpush.bf16.msra.mxu0 %v953
    %1299 = vmatpush.bf16.msra.mxu0 %v949
    %1300 = vmatpush.bf16.msra.mxu0 %v945
    %1301 = vmatpush.bf16.msra.mxu0 %v941
    %1302 = vmatpush.bf16.msra.mxu0 %v937
    %1303 = vmatmul.bf16.gmra.mxu0 %v543
    %v1304 = vpop.f32.mrf.mxu0
    %v1305 = vadd.f32 %v531, %v1304
    %v1306 = vpop.f32.mrf.mxu0
    %1307 = vdwg.mxu0
    %1308 = vmatpush.bf16.msra.mxu0 %v997
    %1309 = vmatpush.bf16.msra.mxu0 %v993
    %1310 = vmatpush.bf16.msra.mxu0 %v989
    %1311 = vmatpush.bf16.msra.mxu0 %v985
    %1312 = vmatpush.bf16.msra.mxu0 %v981
    %1313 = vmatpush.bf16.msra.mxu0 %v977
    %1314 = vmatpush.bf16.msra.mxu0 %v973
    %1315 = vmatpush.bf16.msra.mxu0 %v969
    %1316 = vmatmul.bf16.gmra.mxu0 %v544
    %v1317 = vpop.f32.mrf.mxu0
    %v1318 = vadd.f32 %v1305, %v1317
    %v1319 = vpop.f32.mrf.mxu0
    %1320 = vdwg.mxu0
    %1321 = vmatpush.bf16.msra.mxu0 %v1029
    %1322 = vmatpush.bf16.msra.mxu0 %v1025
    %1323 = vmatpush.bf16.msra.mxu0 %v1021
    %1324 = vmatpush.bf16.msra.mxu0 %v1017
    %1325 = vmatpush.bf16.msra.mxu0 %v1013
    %1326 = vmatpush.bf16.msra.mxu0 %v1009
    %1327 = vmatpush.bf16.msra.mxu0 %v1005
    %1328 = vmatpush.bf16.msra.mxu0 %v1001
    %1329 = vmatmul.bf16.gmra.mxu0 %v545
    %v1330 = vpop.f32.mrf.mxu0
    %v1331 = vadd.f32 %v1318, %v1330
    %v1332 = vpop.f32.mrf.mxu0
    %1333 = vdwg.mxu0
    %1334 = vmatpush.bf16.msra.mxu0 %v1061
    %1335 = vmatpush.bf16.msra.mxu0 %v1057
    %1336 = vmatpush.bf16.msra.mxu0 %v1053
    %1337 = vmatpush.bf16.msra.mxu0 %v1049
    %1338 = vmatpush.bf16.msra.mxu0 %v1045
    %1339 = vmatpush.bf16.msra.mxu0 %v1041
    %1340 = vmatpush.bf16.msra.mxu0 %v1037
    %1341 = vmatpush.bf16.msra.mxu0 %v1033
    %1342 = vmatmul.bf16.gmra.mxu0 %v546
    %v1343 = vpop.f32.mrf.mxu0
    %v1344 = vadd.f32 %v1331, %v1343
    %v1345 = vpop.f32.mrf.mxu0
    %1346 = vdwg.mxu0
    %1347 = vmatpush.bf16.msra.mxu0 %v966
    %1348 = vmatpush.bf16.msra.mxu0 %v962
    %1349 = vmatpush.bf16.msra.mxu0 %v958
    %1350 = vmatpush.bf16.msra.mxu0 %v954
    %1351 = vmatpush.bf16.msra.mxu0 %v950
    %1352 = vmatpush.bf16.msra.mxu0 %v946
    %1353 = vmatpush.bf16.msra.mxu0 %v942
    %1354 = vmatpush.bf16.msra.mxu0 %v938
    %1355 = vmatmul.bf16.gmra.mxu0 %v543
    %v1356 = vpop.f32.mrf.mxu0
    %v1357 = vadd.f32 %v532, %v1356
    %v1358 = vpop.f32.mrf.mxu0
    %1359 = vdwg.mxu0
    %1360 = vmatpush.bf16.msra.mxu0 %v998
    %1361 = vmatpush.bf16.msra.mxu0 %v994
    %1362 = vmatpush.bf16.msra.mxu0 %v990
    %1363 = vmatpush.bf16.msra.mxu0 %v986
    %1364 = vmatpush.bf16.msra.mxu0 %v982
    %1365 = vmatpush.bf16.msra.mxu0 %v978
    %1366 = vmatpush.bf16.msra.mxu0 %v974
    %1367 = vmatpush.bf16.msra.mxu0 %v970
    %1368 = vmatmul.bf16.gmra.mxu0 %v544
    %v1369 = vpop.f32.mrf.mxu0
    %v1370 = vadd.f32 %v1357, %v1369
    %v1371 = vpop.f32.mrf.mxu0
    %1372 = vdwg.mxu0
    %1373 = vmatpush.bf16.msra.mxu0 %v1030
    %1374 = vmatpush.bf16.msra.mxu0 %v1026
    %1375 = vmatpush.bf16.msra.mxu0 %v1022
    %1376 = vmatpush.bf16.msra.mxu0 %v1018
    %1377 = vmatpush.bf16.msra.mxu0 %v1014
    %1378 = vmatpush.bf16.msra.mxu0 %v1010
    %1379 = vmatpush.bf16.msra.mxu0 %v1006
    %1380 = vmatpush.bf16.msra.mxu0 %v1002
    %1381 = vmatmul.bf16.gmra.mxu0 %v545
    %v1382 = vpop.f32.mrf.mxu0
    %v1383 = vadd.f32 %v1370, %v1382
    %v1384 = vpop.f32.mrf.mxu0
    %1385 = vdwg.mxu0
    %1386 = vmatpush.bf16.msra.mxu0 %v1062
    %1387 = vmatpush.bf16.msra.mxu0 %v1058
    %1388 = vmatpush.bf16.msra.mxu0 %v1054
    %1389 = vmatpush.bf16.msra.mxu0 %v1050
    %1390 = vmatpush.bf16.msra.mxu0 %v1046
    %1391 = vmatpush.bf16.msra.mxu0 %v1042
    %1392 = vmatpush.bf16.msra.mxu0 %v1038
    %1393 = vmatpush.bf16.msra.mxu0 %v1034
    %1394 = vmatmul.bf16.gmra.mxu0 %v546
    %v1395 = vpop.f32.mrf.mxu0
    %v1396 = vadd.f32 %v1383, %v1395
    %v1397 = vpop.f32.mrf.mxu0
    %1398 = vdwg.mxu0
    %v1399 = vmax.f32 %v1240, 0.0
    %v1400 = vmax.f32 %v1292, 0.0
    %v1401 = vmax.f32 %v1344, 0.0
    %v1402 = vmax.f32 %v1396, 0.0
    %v1403 = vpack.c.bf16 %v1399, %v1399
    %v1404 = vpack.c.bf16 %v1400, %v1400
    %v1405 = vpack.c.bf16 %v1401, %v1401
    %v1406 = vpack.c.bf16 %v1402, %v1402
    %v1407 = vld [vmem:[#allocation6] sm:$0xff]
    %v1408 = vld [vmem:[#allocation6 + $0x8] sm:$0xff]
    %v1409 = vld [vmem:[#allocation6 + $0x10] sm:$0xff]
    %v1410 = vld [vmem:[#allocation6 + $0x18] sm:$0xff]
    %v1411 = vld [vmem:[#allocation6 + $0x20] sm:$0xff]
    %v1412 = vld [vmem:[#allocation6 + $0x28] sm:$0xff]
    %v1413 = vld [vmem:[#allocation6 + $0x30] sm:$0xff]
    %v1414 = vld [vmem:[#allocation6 + $0x38] sm:$0xff]
    %v1415 = vld [vmem:[#allocation6 + $0x40] sm:$0xff]
    %v1416 = vld [vmem:[#allocation6 + $0x48] sm:$0xff]
    %v1417 = vld [vmem:[#allocation6 + $0x50] sm:$0xff]
    %v1418 = vld [vmem:[#allocation6 + $0x58] sm:$0xff]
    %v1419 = vld [vmem:[#allocation6 + $0x60] sm:$0xff]
    %v1420 = vld [vmem:[#allocation6 + $0x68] sm:$0xff]
    %v1421 = vld [vmem:[#allocation6 + $0x70] sm:$0xff]
    %v1422 = vld [vmem:[#allocation6 + $0x78] sm:$0xff]
    %v1423 = vld [vmem:[#allocation6 + $0x80] sm:$0xff]
    %v1424 = vld [vmem:[#allocation6 + $0x88] sm:$0xff]
    %v1425 = vld [vmem:[#allocation6 + $0x90] sm:$0xff]
    %v1426 = vld [vmem:[#allocation6 + $0x98] sm:$0xff]
    %v1427 = vld [vmem:[#allocation6 + $0xa0] sm:$0xff]
    %v1428 = vld [vmem:[#allocation6 + $0xa8] sm:$0xff]
    %v1429 = vld [vmem:[#allocation6 + $0xb0] sm:$0xff]
    %v1430 = vld [vmem:[#allocation6 + $0xb8] sm:$0xff]
    %v1431 = vld [vmem:[#allocation6 + $0xc0] sm:$0xff]
    %v1432 = vld [vmem:[#allocation6 + $0xc8] sm:$0xff]
    %v1433 = vld [vmem:[#allocation6 + $0xd0] sm:$0xff]
    %v1434 = vld [vmem:[#allocation6 + $0xd8] sm:$0xff]
    %v1435 = vld [vmem:[#allocation6 + $0xe0] sm:$0xff]
    %v1436 = vld [vmem:[#allocation6 + $0xe8] sm:$0xff]
    %v1437 = vld [vmem:[#allocation6 + $0xf0] sm:$0xff]
    %v1438 = vld [vmem:[#allocation6 + $0xf8] sm:$0xff]
    %v1439 = vld [vmem:[#allocation6 + $0x100] sm:$0xff]
    %v1440 = vld [vmem:[#allocation6 + $0x108] sm:$0xff]
    %v1441 = vld [vmem:[#allocation6 + $0x110] sm:$0xff]
    %v1442 = vld [vmem:[#allocation6 + $0x118] sm:$0xff]
    %v1443 = vld [vmem:[#allocation6 + $0x120] sm:$0xff]
    %v1444 = vld [vmem:[#allocation6 + $0x128] sm:$0xff]
    %v1445 = vld [vmem:[#allocation6 + $0x130] sm:$0xff]
    %v1446 = vld [vmem:[#allocation6 + $0x138] sm:$0xff]
    %v1447 = vld [vmem:[#allocation6 + $0x140] sm:$0xff]
    %v1448 = vld [vmem:[#allocation6 + $0x148] sm:$0xff]
    %v1449 = vld [vmem:[#allocation6 + $0x150] sm:$0xff]
    %v1450 = vld [vmem:[#allocation6 + $0x158] sm:$0xff]
    %v1451 = vld [vmem:[#allocation6 + $0x160] sm:$0xff]
    %v1452 = vld [vmem:[#allocation6 + $0x168] sm:$0xff]
    %v1453 = vld [vmem:[#allocation6 + $0x170] sm:$0xff]
    %v1454 = vld [vmem:[#allocation6 + $0x178] sm:$0xff]
    %v1455 = vld [vmem:[#allocation6 + $0x180] sm:$0xff]
    %v1456 = vld [vmem:[#allocation6 + $0x188] sm:$0xff]
    %v1457 = vld [vmem:[#allocation6 + $0x190] sm:$0xff]
    %v1458 = vld [vmem:[#allocation6 + $0x198] sm:$0xff]
    %v1459 = vld [vmem:[#allocation6 + $0x1a0] sm:$0xff]
    %v1460 = vld [vmem:[#allocation6 + $0x1a8] sm:$0xff]
    %v1461 = vld [vmem:[#allocation6 + $0x1b0] sm:$0xff]
    %v1462 = vld [vmem:[#allocation6 + $0x1b8] sm:$0xff]
    %v1463 = vld [vmem:[#allocation6 + $0x1c0] sm:$0xff]
    %v1464 = vld [vmem:[#allocation6 + $0x1c8] sm:$0xff]
    %v1465 = vld [vmem:[#allocation6 + $0x1d0] sm:$0xff]
    %v1466 = vld [vmem:[#allocation6 + $0x1d8] sm:$0xff]
    %v1467 = vld [vmem:[#allocation6 + $0x1e0] sm:$0xff]
    %v1468 = vld [vmem:[#allocation6 + $0x1e8] sm:$0xff]
    %v1469 = vld [vmem:[#allocation6 + $0x1f0] sm:$0xff]
    %v1470 = vld [vmem:[#allocation6 + $0x1f8] sm:$0xff]
    %v1471 = vld [vmem:[#allocation6 + $0x200] sm:$0xff]
    %v1472 = vld [vmem:[#allocation6 + $0x208] sm:$0xff]
    %v1473 = vld [vmem:[#allocation6 + $0x210] sm:$0xff]
    %v1474 = vld [vmem:[#allocation6 + $0x218] sm:$0xff]
    %v1475 = vld [vmem:[#allocation6 + $0x220] sm:$0xff]
    %v1476 = vld [vmem:[#allocation6 + $0x228] sm:$0xff]
    %v1477 = vld [vmem:[#allocation6 + $0x230] sm:$0xff]
    %v1478 = vld [vmem:[#allocation6 + $0x238] sm:$0xff]
    %v1479 = vld [vmem:[#allocation6 + $0x240] sm:$0xff]
    %v1480 = vld [vmem:[#allocation6 + $0x248] sm:$0xff]
    %v1481 = vld [vmem:[#allocation6 + $0x250] sm:$0xff]
    %v1482 = vld [vmem:[#allocation6 + $0x258] sm:$0xff]
    %v1483 = vld [vmem:[#allocation6 + $0x260] sm:$0xff]
    %v1484 = vld [vmem:[#allocation6 + $0x268] sm:$0xff]
    %v1485 = vld [vmem:[#allocation6 + $0x270] sm:$0xff]
    %v1486 = vld [vmem:[#allocation6 + $0x278] sm:$0xff]
    %v1487 = vld [vmem:[#allocation6 + $0x280] sm:$0xff]
    %v1488 = vld [vmem:[#allocation6 + $0x288] sm:$0xff]
    %v1489 = vld [vmem:[#allocation6 + $0x290] sm:$0xff]
    %v1490 = vld [vmem:[#allocation6 + $0x298] sm:$0xff]
    %v1491 = vld [vmem:[#allocation6 + $0x2a0] sm:$0xff]
    %v1492 = vld [vmem:[#allocation6 + $0x2a8] sm:$0xff]
    %v1493 = vld [vmem:[#allocation6 + $0x2b0] sm:$0xff]
    %v1494 = vld [vmem:[#allocation6 + $0x2b8] sm:$0xff]
    %v1495 = vld [vmem:[#allocation6 + $0x2c0] sm:$0xff]
    %v1496 = vld [vmem:[#allocation6 + $0x2c8] sm:$0xff]
    %v1497 = vld [vmem:[#allocation6 + $0x2d0] sm:$0xff]
    %v1498 = vld [vmem:[#allocation6 + $0x2d8] sm:$0xff]
    %v1499 = vld [vmem:[#allocation6 + $0x2e0] sm:$0xff]
    %v1500 = vld [vmem:[#allocation6 + $0x2e8] sm:$0xff]
    %v1501 = vld [vmem:[#allocation6 + $0x2f0] sm:$0xff]
    %v1502 = vld [vmem:[#allocation6 + $0x2f8] sm:$0xff]
    %v1503 = vld [vmem:[#allocation6 + $0x300] sm:$0xff]
    %v1504 = vld [vmem:[#allocation6 + $0x308] sm:$0xff]
    %v1505 = vld [vmem:[#allocation6 + $0x310] sm:$0xff]
    %v1506 = vld [vmem:[#allocation6 + $0x318] sm:$0xff]
    %v1507 = vld [vmem:[#allocation6 + $0x320] sm:$0xff]
    %v1508 = vld [vmem:[#allocation6 + $0x328] sm:$0xff]
    %v1509 = vld [vmem:[#allocation6 + $0x330] sm:$0xff]
    %v1510 = vld [vmem:[#allocation6 + $0x338] sm:$0xff]
    %v1511 = vld [vmem:[#allocation6 + $0x340] sm:$0xff]
    %v1512 = vld [vmem:[#allocation6 + $0x348] sm:$0xff]
    %v1513 = vld [vmem:[#allocation6 + $0x350] sm:$0xff]
    %v1514 = vld [vmem:[#allocation6 + $0x358] sm:$0xff]
    %v1515 = vld [vmem:[#allocation6 + $0x360] sm:$0xff]
    %v1516 = vld [vmem:[#allocation6 + $0x368] sm:$0xff]
    %v1517 = vld [vmem:[#allocation6 + $0x370] sm:$0xff]
    %v1518 = vld [vmem:[#allocation6 + $0x378] sm:$0xff]
    %v1519 = vld [vmem:[#allocation6 + $0x380] sm:$0xff]
    %v1520 = vld [vmem:[#allocation6 + $0x388] sm:$0xff]
    %v1521 = vld [vmem:[#allocation6 + $0x390] sm:$0xff]
    %v1522 = vld [vmem:[#allocation6 + $0x398] sm:$0xff]
    %v1523 = vld [vmem:[#allocation6 + $0x3a0] sm:$0xff]
    %v1524 = vld [vmem:[#allocation6 + $0x3a8] sm:$0xff]
    %v1525 = vld [vmem:[#allocation6 + $0x3b0] sm:$0xff]
    %v1526 = vld [vmem:[#allocation6 + $0x3b8] sm:$0xff]
    %v1527 = vld [vmem:[#allocation6 + $0x3c0] sm:$0xff]
    %v1528 = vld [vmem:[#allocation6 + $0x3c8] sm:$0xff]
    %v1529 = vld [vmem:[#allocation6 + $0x3d0] sm:$0xff]
    %v1530 = vld [vmem:[#allocation6 + $0x3d8] sm:$0xff]
    %v1531 = vld [vmem:[#allocation6 + $0x3e0] sm:$0xff]
    %v1532 = vld [vmem:[#allocation6 + $0x3e8] sm:$0xff]
    %v1533 = vld [vmem:[#allocation6 + $0x3f0] sm:$0xff]
    %v1534 = vld [vmem:[#allocation6 + $0x3f8] sm:$0xff]
    %v1535 = vld [vmem:[%s6] sm:$0xf]
    %v1537 = vperm.slane %v1535, 0
    %v1538 = vperm.slane %v1535, 1
    %v1539 = vperm.slane %v1535, 2
    %v1540 = vperm.slane %v1535, 3
    %v1673 = vunpack.c.l.b16 %v1407
    %v1674 = vunpack.c.h.b16 %v1407
    %v1675 = vunpack.c.l.b16 %v1408
    %v1676 = vunpack.c.h.b16 %v1408
    %v1677 = vunpack.c.l.b16 %v1409
    %v1678 = vunpack.c.h.b16 %v1409
    %v1679 = vunpack.c.l.b16 %v1410
    %v1680 = vunpack.c.h.b16 %v1410
    %v1681 = vunpack.c.l.b16 %v1411
    %v1682 = vunpack.c.h.b16 %v1411
    %v1683 = vunpack.c.l.b16 %v1412
    %v1684 = vunpack.c.h.b16 %v1412
    %v1685 = vunpack.c.l.b16 %v1413
    %v1686 = vunpack.c.h.b16 %v1413
    %v1687 = vunpack.c.l.b16 %v1414
    %v1688 = vunpack.c.h.b16 %v1414
    %v1689 = vunpack.c.l.b16 %v1415
    %v1690 = vunpack.c.h.b16 %v1415
    %v1691 = vunpack.c.l.b16 %v1416
    %v1692 = vunpack.c.h.b16 %v1416
    %v1693 = vunpack.c.l.b16 %v1417
    %v1694 = vunpack.c.h.b16 %v1417
    %v1695 = vunpack.c.l.b16 %v1418
    %v1696 = vunpack.c.h.b16 %v1418
    %v1697 = vunpack.c.l.b16 %v1419
    %v1698 = vunpack.c.h.b16 %v1419
    %v1699 = vunpack.c.l.b16 %v1420
    %v1700 = vunpack.c.h.b16 %v1420
    %v1701 = vunpack.c.l.b16 %v1421
    %v1702 = vunpack.c.h.b16 %v1421
    %v1703 = vunpack.c.l.b16 %v1422
    %v1704 = vunpack.c.h.b16 %v1422
    %v1705 = vunpack.c.l.b16 %v1423
    %v1706 = vunpack.c.h.b16 %v1423
    %v1707 = vunpack.c.l.b16 %v1424
    %v1708 = vunpack.c.h.b16 %v1424
    %v1709 = vunpack.c.l.b16 %v1425
    %v1710 = vunpack.c.h.b16 %v1425
    %v1711 = vunpack.c.l.b16 %v1426
    %v1712 = vunpack.c.h.b16 %v1426
    %v1713 = vunpack.c.l.b16 %v1427
    %v1714 = vunpack.c.h.b16 %v1427
    %v1715 = vunpack.c.l.b16 %v1428
    %v1716 = vunpack.c.h.b16 %v1428
    %v1717 = vunpack.c.l.b16 %v1429
    %v1718 = vunpack.c.h.b16 %v1429
    %v1719 = vunpack.c.l.b16 %v1430
    %v1720 = vunpack.c.h.b16 %v1430
    %v1721 = vunpack.c.l.b16 %v1431
    %v1722 = vunpack.c.h.b16 %v1431
    %v1723 = vunpack.c.l.b16 %v1432
    %v1724 = vunpack.c.h.b16 %v1432
    %v1725 = vunpack.c.l.b16 %v1433
    %v1726 = vunpack.c.h.b16 %v1433
    %v1727 = vunpack.c.l.b16 %v1434
    %v1728 = vunpack.c.h.b16 %v1434
    %v1729 = vunpack.c.l.b16 %v1435
    %v1730 = vunpack.c.h.b16 %v1435
    %v1731 = vunpack.c.l.b16 %v1436
    %v1732 = vunpack.c.h.b16 %v1436
    %v1733 = vunpack.c.l.b16 %v1437
    %v1734 = vunpack.c.h.b16 %v1437
    %v1735 = vunpack.c.l.b16 %v1438
    %v1736 = vunpack.c.h.b16 %v1438
    %v1737 = vunpack.c.l.b16 %v1439
    %v1738 = vunpack.c.h.b16 %v1439
    %v1739 = vunpack.c.l.b16 %v1440
    %v1740 = vunpack.c.h.b16 %v1440
    %v1741 = vunpack.c.l.b16 %v1441
    %v1742 = vunpack.c.h.b16 %v1441
    %v1743 = vunpack.c.l.b16 %v1442
    %v1744 = vunpack.c.h.b16 %v1442
    %v1745 = vunpack.c.l.b16 %v1443
    %v1746 = vunpack.c.h.b16 %v1443
    %v1747 = vunpack.c.l.b16 %v1444
    %v1748 = vunpack.c.h.b16 %v1444
    %v1749 = vunpack.c.l.b16 %v1445
    %v1750 = vunpack.c.h.b16 %v1445
    %v1751 = vunpack.c.l.b16 %v1446
    %v1752 = vunpack.c.h.b16 %v1446
    %v1753 = vunpack.c.l.b16 %v1447
    %v1754 = vunpack.c.h.b16 %v1447
    %v1755 = vunpack.c.l.b16 %v1448
    %v1756 = vunpack.c.h.b16 %v1448
    %v1757 = vunpack.c.l.b16 %v1449
    %v1758 = vunpack.c.h.b16 %v1449
    %v1759 = vunpack.c.l.b16 %v1450
    %v1760 = vunpack.c.h.b16 %v1450
    %v1761 = vunpack.c.l.b16 %v1451
    %v1762 = vunpack.c.h.b16 %v1451
    %v1763 = vunpack.c.l.b16 %v1452
    %v1764 = vunpack.c.h.b16 %v1452
    %v1765 = vunpack.c.l.b16 %v1453
    %v1766 = vunpack.c.h.b16 %v1453
    %v1767 = vunpack.c.l.b16 %v1454
    %v1768 = vunpack.c.h.b16 %v1454
    %v1769 = vunpack.c.l.b16 %v1455
    %v1770 = vunpack.c.h.b16 %v1455
    %v1771 = vunpack.c.l.b16 %v1456
    %v1772 = vunpack.c.h.b16 %v1456
    %v1773 = vunpack.c.l.b16 %v1457
    %v1774 = vunpack.c.h.b16 %v1457
    %v1775 = vunpack.c.l.b16 %v1458
    %v1776 = vunpack.c.h.b16 %v1458
    %v1777 = vunpack.c.l.b16 %v1459
    %v1778 = vunpack.c.h.b16 %v1459
    %v1779 = vunpack.c.l.b16 %v1460
    %v1780 = vunpack.c.h.b16 %v1460
    %v1781 = vunpack.c.l.b16 %v1461
    %v1782 = vunpack.c.h.b16 %v1461
    %v1783 = vunpack.c.l.b16 %v1462
    %v1784 = vunpack.c.h.b16 %v1462
    %v1785 = vunpack.c.l.b16 %v1463
    %v1786 = vunpack.c.h.b16 %v1463
    %v1787 = vunpack.c.l.b16 %v1464
    %v1788 = vunpack.c.h.b16 %v1464
    %v1789 = vunpack.c.l.b16 %v1465
    %v1790 = vunpack.c.h.b16 %v1465
    %v1791 = vunpack.c.l.b16 %v1466
    %v1792 = vunpack.c.h.b16 %v1466
    %v1793 = vunpack.c.l.b16 %v1467
    %v1794 = vunpack.c.h.b16 %v1467
    %v1795 = vunpack.c.l.b16 %v1468
    %v1796 = vunpack.c.h.b16 %v1468
    %v1797 = vunpack.c.l.b16 %v1469
    %v1798 = vunpack.c.h.b16 %v1469
    %v1799 = vunpack.c.l.b16 %v1470
    %v1800 = vunpack.c.h.b16 %v1470
    %v1801 = vunpack.c.l.b16 %v1471
    %v1802 = vunpack.c.h.b16 %v1471
    %v1803 = vunpack.c.l.b16 %v1472
    %v1804 = vunpack.c.h.b16 %v1472
    %v1805 = vunpack.c.l.b16 %v1473
    %v1806 = vunpack.c.h.b16 %v1473
    %v1807 = vunpack.c.l.b16 %v1474
    %v1808 = vunpack.c.h.b16 %v1474
    %v1809 = vunpack.c.l.b16 %v1475
    %v1810 = vunpack.c.h.b16 %v1475
    %v1811 = vunpack.c.l.b16 %v1476
    %v1812 = vunpack.c.h.b16 %v1476
    %v1813 = vunpack.c.l.b16 %v1477
    %v1814 = vunpack.c.h.b16 %v1477
    %v1815 = vunpack.c.l.b16 %v1478
    %v1816 = vunpack.c.h.b16 %v1478
    %v1817 = vunpack.c.l.b16 %v1479
    %v1818 = vunpack.c.h.b16 %v1479
    %v1819 = vunpack.c.l.b16 %v1480
    %v1820 = vunpack.c.h.b16 %v1480
    %v1821 = vunpack.c.l.b16 %v1481
    %v1822 = vunpack.c.h.b16 %v1481
    %v1823 = vunpack.c.l.b16 %v1482
    %v1824 = vunpack.c.h.b16 %v1482
    %v1825 = vunpack.c.l.b16 %v1483
    %v1826 = vunpack.c.h.b16 %v1483
    %v1827 = vunpack.c.l.b16 %v1484
    %v1828 = vunpack.c.h.b16 %v1484
    %v1829 = vunpack.c.l.b16 %v1485
    %v1830 = vunpack.c.h.b16 %v1485
    %v1831 = vunpack.c.l.b16 %v1486
    %v1832 = vunpack.c.h.b16 %v1486
    %v1833 = vunpack.c.l.b16 %v1487
    %v1834 = vunpack.c.h.b16 %v1487
    %v1835 = vunpack.c.l.b16 %v1488
    %v1836 = vunpack.c.h.b16 %v1488
    %v1837 = vunpack.c.l.b16 %v1489
    %v1838 = vunpack.c.h.b16 %v1489
    %v1839 = vunpack.c.l.b16 %v1490
    %v1840 = vunpack.c.h.b16 %v1490
    %v1841 = vunpack.c.l.b16 %v1491
    %v1842 = vunpack.c.h.b16 %v1491
    %v1843 = vunpack.c.l.b16 %v1492
    %v1844 = vunpack.c.h.b16 %v1492
    %v1845 = vunpack.c.l.b16 %v1493
    %v1846 = vunpack.c.h.b16 %v1493
    %v1847 = vunpack.c.l.b16 %v1494
    %v1848 = vunpack.c.h.b16 %v1494
    %v1849 = vunpack.c.l.b16 %v1495
    %v1850 = vunpack.c.h.b16 %v1495
    %v1851 = vunpack.c.l.b16 %v1496
    %v1852 = vunpack.c.h.b16 %v1496
    %v1853 = vunpack.c.l.b16 %v1497
    %v1854 = vunpack.c.h.b16 %v1497
    %v1855 = vunpack.c.l.b16 %v1498
    %v1856 = vunpack.c.h.b16 %v1498
    %v1857 = vunpack.c.l.b16 %v1499
    %v1858 = vunpack.c.h.b16 %v1499
    %v1859 = vunpack.c.l.b16 %v1500
    %v1860 = vunpack.c.h.b16 %v1500
    %v1861 = vunpack.c.l.b16 %v1501
    %v1862 = vunpack.c.h.b16 %v1501
    %v1863 = vunpack.c.l.b16 %v1502
    %v1864 = vunpack.c.h.b16 %v1502
    %v1865 = vunpack.c.l.b16 %v1503
    %v1866 = vunpack.c.h.b16 %v1503
    %v1867 = vunpack.c.l.b16 %v1504
    %v1868 = vunpack.c.h.b16 %v1504
    %v1869 = vunpack.c.l.b16 %v1505
    %v1870 = vunpack.c.h.b16 %v1505
    %v1871 = vunpack.c.l.b16 %v1506
    %v1872 = vunpack.c.h.b16 %v1506
    %v1873 = vunpack.c.l.b16 %v1507
    %v1874 = vunpack.c.h.b16 %v1507
    %v1875 = vunpack.c.l.b16 %v1508
    %v1876 = vunpack.c.h.b16 %v1508
    %v1877 = vunpack.c.l.b16 %v1509
    %v1878 = vunpack.c.h.b16 %v1509
    %v1879 = vunpack.c.l.b16 %v1510
    %v1880 = vunpack.c.h.b16 %v1510
    %v1881 = vunpack.c.l.b16 %v1511
    %v1882 = vunpack.c.h.b16 %v1511
    %v1883 = vunpack.c.l.b16 %v1512
    %v1884 = vunpack.c.h.b16 %v1512
    %v1885 = vunpack.c.l.b16 %v1513
    %v1886 = vunpack.c.h.b16 %v1513
    %v1887 = vunpack.c.l.b16 %v1514
    %v1888 = vunpack.c.h.b16 %v1514
    %v1889 = vunpack.c.l.b16 %v1515
    %v1890 = vunpack.c.h.b16 %v1515
    %v1891 = vunpack.c.l.b16 %v1516
    %v1892 = vunpack.c.h.b16 %v1516
    %v1893 = vunpack.c.l.b16 %v1517
    %v1894 = vunpack.c.h.b16 %v1517
    %v1895 = vunpack.c.l.b16 %v1518
    %v1896 = vunpack.c.h.b16 %v1518
    %v1897 = vunpack.c.l.b16 %v1519
    %v1898 = vunpack.c.h.b16 %v1519
    %v1899 = vunpack.c.l.b16 %v1520
    %v1900 = vunpack.c.h.b16 %v1520
    %v1901 = vunpack.c.l.b16 %v1521
    %v1902 = vunpack.c.h.b16 %v1521
    %v1903 = vunpack.c.l.b16 %v1522
    %v1904 = vunpack.c.h.b16 %v1522
    %v1905 = vunpack.c.l.b16 %v1523
    %v1906 = vunpack.c.h.b16 %v1523
    %v1907 = vunpack.c.l.b16 %v1524
    %v1908 = vunpack.c.h.b16 %v1524
    %v1909 = vunpack.c.l.b16 %v1525
    %v1910 = vunpack.c.h.b16 %v1525
    %v1911 = vunpack.c.l.b16 %v1526
    %v1912 = vunpack.c.h.b16 %v1526
    %v1913 = vunpack.c.l.b16 %v1527
    %v1914 = vunpack.c.h.b16 %v1527
    %v1915 = vunpack.c.l.b16 %v1528
    %v1916 = vunpack.c.h.b16 %v1528
    %v1917 = vunpack.c.l.b16 %v1529
    %v1918 = vunpack.c.h.b16 %v1529
    %v1919 = vunpack.c.l.b16 %v1530
    %v1920 = vunpack.c.h.b16 %v1530
    %v1921 = vunpack.c.l.b16 %v1531
    %v1922 = vunpack.c.h.b16 %v1531
    %v1923 = vunpack.c.l.b16 %v1532
    %v1924 = vunpack.c.h.b16 %v1532
    %v1925 = vunpack.c.l.b16 %v1533
    %v1926 = vunpack.c.h.b16 %v1533
    %v1927 = vunpack.c.l.b16 %v1534
    %v1928 = vunpack.c.h.b16 %v1534
    %v1929 = vpack.c.b16 %v1677, %v1673
    %v1930 = vpack.c.b16 %v1678, %v1674
    %v1931 = vpack.c.b16 %v1679, %v1675
    %v1932 = vpack.c.b16 %v1680, %v1676
    %v1933 = vpack.c.b16 %v1685, %v1681
    %v1934 = vpack.c.b16 %v1686, %v1682
    %v1935 = vpack.c.b16 %v1687, %v1683
    %v1936 = vpack.c.b16 %v1688, %v1684
    %v1937 = vpack.c.b16 %v1693, %v1689
    %v1938 = vpack.c.b16 %v1694, %v1690
    %v1939 = vpack.c.b16 %v1695, %v1691
    %v1940 = vpack.c.b16 %v1696, %v1692
    %v1941 = vpack.c.b16 %v1701, %v1697
    %v1942 = vpack.c.b16 %v1702, %v1698
    %v1943 = vpack.c.b16 %v1703, %v1699
    %v1944 = vpack.c.b16 %v1704, %v1700
    %v1945 = vpack.c.b16 %v1709, %v1705
    %v1946 = vpack.c.b16 %v1710, %v1706
    %v1947 = vpack.c.b16 %v1711, %v1707
    %v1948 = vpack.c.b16 %v1712, %v1708
    %v1949 = vpack.c.b16 %v1717, %v1713
    %v1950 = vpack.c.b16 %v1718, %v1714
    %v1951 = vpack.c.b16 %v1719, %v1715
    %v1952 = vpack.c.b16 %v1720, %v1716
    %v1953 = vpack.c.b16 %v1725, %v1721
    %v1954 = vpack.c.b16 %v1726, %v1722
    %v1955 = vpack.c.b16 %v1727, %v1723
    %v1956 = vpack.c.b16 %v1728, %v1724
    %v1957 = vpack.c.b16 %v1733, %v1729
    %v1958 = vpack.c.b16 %v1734, %v1730
    %v1959 = vpack.c.b16 %v1735, %v1731
    %v1960 = vpack.c.b16 %v1736, %v1732
    %v1961 = vpack.c.b16 %v1741, %v1737
    %v1962 = vpack.c.b16 %v1742, %v1738
    %v1963 = vpack.c.b16 %v1743, %v1739
    %v1964 = vpack.c.b16 %v1744, %v1740
    %v1965 = vpack.c.b16 %v1749, %v1745
    %v1966 = vpack.c.b16 %v1750, %v1746
    %v1967 = vpack.c.b16 %v1751, %v1747
    %v1968 = vpack.c.b16 %v1752, %v1748
    %v1969 = vpack.c.b16 %v1757, %v1753
    %v1970 = vpack.c.b16 %v1758, %v1754
    %v1971 = vpack.c.b16 %v1759, %v1755
    %v1972 = vpack.c.b16 %v1760, %v1756
    %v1973 = vpack.c.b16 %v1765, %v1761
    %v1974 = vpack.c.b16 %v1766, %v1762
    %v1975 = vpack.c.b16 %v1767, %v1763
    %v1976 = vpack.c.b16 %v1768, %v1764
    %v1977 = vpack.c.b16 %v1773, %v1769
    %v1978 = vpack.c.b16 %v1774, %v1770
    %v1979 = vpack.c.b16 %v1775, %v1771
    %v1980 = vpack.c.b16 %v1776, %v1772
    %v1981 = vpack.c.b16 %v1781, %v1777
    %v1982 = vpack.c.b16 %v1782, %v1778
    %v1983 = vpack.c.b16 %v1783, %v1779
    %v1984 = vpack.c.b16 %v1784, %v1780
    %v1985 = vpack.c.b16 %v1789, %v1785
    %v1986 = vpack.c.b16 %v1790, %v1786
    %v1987 = vpack.c.b16 %v1791, %v1787
    %v1988 = vpack.c.b16 %v1792, %v1788
    %v1989 = vpack.c.b16 %v1797, %v1793
    %v1990 = vpack.c.b16 %v1798, %v1794
    %v1991 = vpack.c.b16 %v1799, %v1795
    %v1992 = vpack.c.b16 %v1800, %v1796
    %v1993 = vpack.c.b16 %v1805, %v1801
    %v1994 = vpack.c.b16 %v1806, %v1802
    %v1995 = vpack.c.b16 %v1807, %v1803
    %v1996 = vpack.c.b16 %v1808, %v1804
    %v1997 = vpack.c.b16 %v1813, %v1809
    %v1998 = vpack.c.b16 %v1814, %v1810
    %v1999 = vpack.c.b16 %v1815, %v1811
    %v2000 = vpack.c.b16 %v1816, %v1812
    %v2001 = vpack.c.b16 %v1821, %v1817
    %v2002 = vpack.c.b16 %v1822, %v1818
    %v2003 = vpack.c.b16 %v1823, %v1819
    %v2004 = vpack.c.b16 %v1824, %v1820
    %v2005 = vpack.c.b16 %v1829, %v1825
    %v2006 = vpack.c.b16 %v1830, %v1826
    %v2007 = vpack.c.b16 %v1831, %v1827
    %v2008 = vpack.c.b16 %v1832, %v1828
    %v2009 = vpack.c.b16 %v1837, %v1833
    %v2010 = vpack.c.b16 %v1838, %v1834
    %v2011 = vpack.c.b16 %v1839, %v1835
    %v2012 = vpack.c.b16 %v1840, %v1836
    %v2013 = vpack.c.b16 %v1845, %v1841
    %v2014 = vpack.c.b16 %v1846, %v1842
    %v2015 = vpack.c.b16 %v1847, %v1843
    %v2016 = vpack.c.b16 %v1848, %v1844
    %v2017 = vpack.c.b16 %v1853, %v1849
    %v2018 = vpack.c.b16 %v1854, %v1850
    %v2019 = vpack.c.b16 %v1855, %v1851
    %v2020 = vpack.c.b16 %v1856, %v1852
    %v2021 = vpack.c.b16 %v1861, %v1857
    %v2022 = vpack.c.b16 %v1862, %v1858
    %v2023 = vpack.c.b16 %v1863, %v1859
    %v2024 = vpack.c.b16 %v1864, %v1860
    %v2025 = vpack.c.b16 %v1869, %v1865
    %v2026 = vpack.c.b16 %v1870, %v1866
    %v2027 = vpack.c.b16 %v1871, %v1867
    %v2028 = vpack.c.b16 %v1872, %v1868
    %v2029 = vpack.c.b16 %v1877, %v1873
    %v2030 = vpack.c.b16 %v1878, %v1874
    %v2031 = vpack.c.b16 %v1879, %v1875
    %v2032 = vpack.c.b16 %v1880, %v1876
    %v2033 = vpack.c.b16 %v1885, %v1881
    %v2034 = vpack.c.b16 %v1886, %v1882
    %v2035 = vpack.c.b16 %v1887, %v1883
    %v2036 = vpack.c.b16 %v1888, %v1884
    %v2037 = vpack.c.b16 %v1893, %v1889
    %v2038 = vpack.c.b16 %v1894, %v1890
    %v2039 = vpack.c.b16 %v1895, %v1891
    %v2040 = vpack.c.b16 %v1896, %v1892
    %v2041 = vpack.c.b16 %v1901, %v1897
    %v2042 = vpack.c.b16 %v1902, %v1898
    %v2043 = vpack.c.b16 %v1903, %v1899
    %v2044 = vpack.c.b16 %v1904, %v1900
    %v2045 = vpack.c.b16 %v1909, %v1905
    %v2046 = vpack.c.b16 %v1910, %v1906
    %v2047 = vpack.c.b16 %v1911, %v1907
    %v2048 = vpack.c.b16 %v1912, %v1908
    %v2049 = vpack.c.b16 %v1917, %v1913
    %v2050 = vpack.c.b16 %v1918, %v1914
    %v2051 = vpack.c.b16 %v1919, %v1915
    %v2052 = vpack.c.b16 %v1920, %v1916
    %v2053 = vpack.c.b16 %v1925, %v1921
    %v2054 = vpack.c.b16 %v1926, %v1922
    %v2055 = vpack.c.b16 %v1927, %v1923
    %v2056 = vpack.c.b16 %v1928, %v1924
    %2185 = vmatpush.bf16.msra.mxu0 %v1957
    %2186 = vmatpush.bf16.msra.mxu0 %v1953
    %2187 = vmatpush.bf16.msra.mxu0 %v1949
    %2188 = vmatpush.bf16.msra.mxu0 %v1945
    %2189 = vmatpush.bf16.msra.mxu0 %v1941
    %2190 = vmatpush.bf16.msra.mxu0 %v1937
    %2191 = vmatpush.bf16.msra.mxu0 %v1933
    %2192 = vmatpush.bf16.msra.mxu0 %v1929
    %2193 = vmatmul.bf16.gmra.mxu0 %v1403
    %v2194 = vpop.f32.mrf.mxu0
    %v2195 = vadd.f32 %v1537, %v2194
    %v2196 = vpop.f32.mrf.mxu0
    %2197 = vdwg.mxu0
    %2198 = vmatpush.bf16.msra.mxu0 %v1989
    %2199 = vmatpush.bf16.msra.mxu0 %v1985
    %2200 = vmatpush.bf16.msra.mxu0 %v1981
    %2201 = vmatpush.bf16.msra.mxu0 %v1977
    %2202 = vmatpush.bf16.msra.mxu0 %v1973
    %2203 = vmatpush.bf16.msra.mxu0 %v1969
    %2204 = vmatpush.bf16.msra.mxu0 %v1965
    %2205 = vmatpush.bf16.msra.mxu0 %v1961
    %2206 = vmatmul.bf16.gmra.mxu0 %v1404
    %v2207 = vpop.f32.mrf.mxu0
    %v2208 = vadd.f32 %v2195, %v2207
    %v2209 = vpop.f32.mrf.mxu0
    %2210 = vdwg.mxu0
    %2211 = vmatpush.bf16.msra.mxu0 %v2021
    %2212 = vmatpush.bf16.msra.mxu0 %v2017
    %2213 = vmatpush.bf16.msra.mxu0 %v2013
    %2214 = vmatpush.bf16.msra.mxu0 %v2009
    %2215 = vmatpush.bf16.msra.mxu0 %v2005
    %2216 = vmatpush.bf16.msra.mxu0 %v2001
    %2217 = vmatpush.bf16.msra.mxu0 %v1997
    %2218 = vmatpush.bf16.msra.mxu0 %v1993
    %2219 = vmatmul.bf16.gmra.mxu0 %v1405
    %v2220 = vpop.f32.mrf.mxu0
    %v2221 = vadd.f32 %v2208, %v2220
    %v2222 = vpop.f32.mrf.mxu0
    %2223 = vdwg.mxu0
    %2224 = vmatpush.bf16.msra.mxu0 %v2053
    %2225 = vmatpush.bf16.msra.mxu0 %v2049
    %2226 = vmatpush.bf16.msra.mxu0 %v2045
    %2227 = vmatpush.bf16.msra.mxu0 %v2041
    %2228 = vmatpush.bf16.msra.mxu0 %v2037
    %2229 = vmatpush.bf16.msra.mxu0 %v2033
    %2230 = vmatpush.bf16.msra.mxu0 %v2029
    %2231 = vmatpush.bf16.msra.mxu0 %v2025
    %2232 = vmatmul.bf16.gmra.mxu0 %v1406
    %v2233 = vpop.f32.mrf.mxu0
    %v2234 = vadd.f32 %v2221, %v2233
    %v2235 = vpop.f32.mrf.mxu0
    %2236 = vdwg.mxu0
    %2237 = vmatpush.bf16.msra.mxu0 %v1958
    %2238 = vmatpush.bf16.msra.mxu0 %v1954
    %2239 = vmatpush.bf16.msra.mxu0 %v1950
    %2240 = vmatpush.bf16.msra.mxu0 %v1946
    %2241 = vmatpush.bf16.msra.mxu0 %v1942
    %2242 = vmatpush.bf16.msra.mxu0 %v1938
    %2243 = vmatpush.bf16.msra.mxu0 %v1934
    %2244 = vmatpush.bf16.msra.mxu0 %v1930
    %2245 = vmatmul.bf16.gmra.mxu0 %v1403
    %v2246 = vpop.f32.mrf.mxu0
    %v2247 = vadd.f32 %v1538, %v2246
    %v2248 = vpop.f32.mrf.mxu0
    %2249 = vdwg.mxu0
    %2250 = vmatpush.bf16.msra.mxu0 %v1990
    %2251 = vmatpush.bf16.msra.mxu0 %v1986
    %2252 = vmatpush.bf16.msra.mxu0 %v1982
    %2253 = vmatpush.bf16.msra.mxu0 %v1978
    %2254 = vmatpush.bf16.msra.mxu0 %v1974
    %2255 = vmatpush.bf16.msra.mxu0 %v1970
    %2256 = vmatpush.bf16.msra.mxu0 %v1966
    %2257 = vmatpush.bf16.msra.mxu0 %v1962
    %2258 = vmatmul.bf16.gmra.mxu0 %v1404
    %v2259 = vpop.f32.mrf.mxu0
    %v2260 = vadd.f32 %v2247, %v2259
    %v2261 = vpop.f32.mrf.mxu0
    %2262 = vdwg.mxu0
    %2263 = vmatpush.bf16.msra.mxu0 %v2022
    %2264 = vmatpush.bf16.msra.mxu0 %v2018
    %2265 = vmatpush.bf16.msra.mxu0 %v2014
    %2266 = vmatpush.bf16.msra.mxu0 %v2010
    %2267 = vmatpush.bf16.msra.mxu0 %v2006
    %2268 = vmatpush.bf16.msra.mxu0 %v2002
    %2269 = vmatpush.bf16.msra.mxu0 %v1998
    %2270 = vmatpush.bf16.msra.mxu0 %v1994
    %2271 = vmatmul.bf16.gmra.mxu0 %v1405
    %v2272 = vpop.f32.mrf.mxu0
    %v2273 = vadd.f32 %v2260, %v2272
    %v2274 = vpop.f32.mrf.mxu0
    %2275 = vdwg.mxu0
    %2276 = vmatpush.bf16.msra.mxu0 %v2054
    %2277 = vmatpush.bf16.msra.mxu0 %v2050
    %2278 = vmatpush.bf16.msra.mxu0 %v2046
    %2279 = vmatpush.bf16.msra.mxu0 %v2042
    %2280 = vmatpush.bf16.msra.mxu0 %v2038
    %2281 = vmatpush.bf16.msra.mxu0 %v2034
    %2282 = vmatpush.bf16.msra.mxu0 %v2030
    %2283 = vmatpush.bf16.msra.mxu0 %v2026
    %2284 = vmatmul.bf16.gmra.mxu0 %v1406
    %v2285 = vpop.f32.mrf.mxu0
    %v2286 = vadd.f32 %v2273, %v2285
    %v2287 = vpop.f32.mrf.mxu0
    %2288 = vdwg.mxu0
    %2289 = vmatpush.bf16.msra.mxu0 %v1959
    %2290 = vmatpush.bf16.msra.mxu0 %v1955
    %2291 = vmatpush.bf16.msra.mxu0 %v1951
    %2292 = vmatpush.bf16.msra.mxu0 %v1947
    %2293 = vmatpush.bf16.msra.mxu0 %v1943
    %2294 = vmatpush.bf16.msra.mxu0 %v1939
    %2295 = vmatpush.bf16.msra.mxu0 %v1935
    %2296 = vmatpush.bf16.msra.mxu0 %v1931
    %2297 = vmatmul.bf16.gmra.mxu0 %v1403
    %v2298 = vpop.f32.mrf.mxu0
    %v2299 = vadd.f32 %v1539, %v2298
    %v2300 = vpop.f32.mrf.mxu0
    %2301 = vdwg.mxu0
    %2302 = vmatpush.bf16.msra.mxu0 %v1991
    %2303 = vmatpush.bf16.msra.mxu0 %v1987
    %2304 = vmatpush.bf16.msra.mxu0 %v1983
    %2305 = vmatpush.bf16.msra.mxu0 %v1979
    %2306 = vmatpush.bf16.msra.mxu0 %v1975
    %2307 = vmatpush.bf16.msra.mxu0 %v1971
    %2308 = vmatpush.bf16.msra.mxu0 %v1967
    %2309 = vmatpush.bf16.msra.mxu0 %v1963
    %2310 = vmatmul.bf16.gmra.mxu0 %v1404
    %v2311 = vpop.f32.mrf.mxu0
    %v2312 = vadd.f32 %v2299, %v2311
    %v2313 = vpop.f32.mrf.mxu0
    %2314 = vdwg.mxu0
    %2315 = vmatpush.bf16.msra.mxu0 %v2023
    %2316 = vmatpush.bf16.msra.mxu0 %v2019
    %2317 = vmatpush.bf16.msra.mxu0 %v2015
    %2318 = vmatpush.bf16.msra.mxu0 %v2011
    %2319 = vmatpush.bf16.msra.mxu0 %v2007
    %2320 = vmatpush.bf16.msra.mxu0 %v2003
    %2321 = vmatpush.bf16.msra.mxu0 %v1999
    %2322 = vmatpush.bf16.msra.mxu0 %v1995
    %2323 = vmatmul.bf16.gmra.mxu0 %v1405
    %v2324 = vpop.f32.mrf.mxu0
    %v2325 = vadd.f32 %v2312, %v2324
    %v2326 = vpop.f32.mrf.mxu0
    %2327 = vdwg.mxu0
    %2328 = vmatpush.bf16.msra.mxu0 %v2055
    %2329 = vmatpush.bf16.msra.mxu0 %v2051
    %2330 = vmatpush.bf16.msra.mxu0 %v2047
    %2331 = vmatpush.bf16.msra.mxu0 %v2043
    %2332 = vmatpush.bf16.msra.mxu0 %v2039
    %2333 = vmatpush.bf16.msra.mxu0 %v2035
    %2334 = vmatpush.bf16.msra.mxu0 %v2031
    %2335 = vmatpush.bf16.msra.mxu0 %v2027
    %2336 = vmatmul.bf16.gmra.mxu0 %v1406
    %v2337 = vpop.f32.mrf.mxu0
    %v2338 = vadd.f32 %v2325, %v2337
    %v2339 = vpop.f32.mrf.mxu0
    %2340 = vdwg.mxu0
    %2341 = vmatpush.bf16.msra.mxu0 %v1960
    %2342 = vmatpush.bf16.msra.mxu0 %v1956
    %2343 = vmatpush.bf16.msra.mxu0 %v1952
    %2344 = vmatpush.bf16.msra.mxu0 %v1948
    %2345 = vmatpush.bf16.msra.mxu0 %v1944
    %2346 = vmatpush.bf16.msra.mxu0 %v1940
    %2347 = vmatpush.bf16.msra.mxu0 %v1936
    %2348 = vmatpush.bf16.msra.mxu0 %v1932
    %2349 = vmatmul.bf16.gmra.mxu0 %v1403
    %v2350 = vpop.f32.mrf.mxu0
    %v2351 = vadd.f32 %v1540, %v2350
    %v2352 = vpop.f32.mrf.mxu0
    %2353 = vdwg.mxu0
    %2354 = vmatpush.bf16.msra.mxu0 %v1992
    %2355 = vmatpush.bf16.msra.mxu0 %v1988
    %2356 = vmatpush.bf16.msra.mxu0 %v1984
    %2357 = vmatpush.bf16.msra.mxu0 %v1980
    %2358 = vmatpush.bf16.msra.mxu0 %v1976
    %2359 = vmatpush.bf16.msra.mxu0 %v1972
    %2360 = vmatpush.bf16.msra.mxu0 %v1968
    %2361 = vmatpush.bf16.msra.mxu0 %v1964
    %2362 = vmatmul.bf16.gmra.mxu0 %v1404
    %v2363 = vpop.f32.mrf.mxu0
    %v2364 = vadd.f32 %v2351, %v2363
    %v2365 = vpop.f32.mrf.mxu0
    %2366 = vdwg.mxu0
    %2367 = vmatpush.bf16.msra.mxu0 %v2024
    %2368 = vmatpush.bf16.msra.mxu0 %v2020
    %2369 = vmatpush.bf16.msra.mxu0 %v2016
    %2370 = vmatpush.bf16.msra.mxu0 %v2012
    %2371 = vmatpush.bf16.msra.mxu0 %v2008
    %2372 = vmatpush.bf16.msra.mxu0 %v2004
    %2373 = vmatpush.bf16.msra.mxu0 %v2000
    %2374 = vmatpush.bf16.msra.mxu0 %v1996
    %2375 = vmatmul.bf16.gmra.mxu0 %v1405
    %v2376 = vpop.f32.mrf.mxu0
    %v2377 = vadd.f32 %v2364, %v2376
    %v2378 = vpop.f32.mrf.mxu0
    %2379 = vdwg.mxu0
    %2380 = vmatpush.bf16.msra.mxu0 %v2056
    %2381 = vmatpush.bf16.msra.mxu0 %v2052
    %2382 = vmatpush.bf16.msra.mxu0 %v2048
    %2383 = vmatpush.bf16.msra.mxu0 %v2044
    %2384 = vmatpush.bf16.msra.mxu0 %v2040
    %2385 = vmatpush.bf16.msra.mxu0 %v2036
    %2386 = vmatpush.bf16.msra.mxu0 %v2032
    %2387 = vmatpush.bf16.msra.mxu0 %v2028
    %2388 = vmatmul.bf16.gmra.mxu0 %v1406
    %v2389 = vpop.f32.mrf.mxu0
    %v2390 = vadd.f32 %v2377, %v2389
    %v2391 = vpop.f32.mrf.mxu0
    %2392 = vdwg.mxu0
    %v2393 = vunpack.c.l.bf16 %v397
    %v2394 = vunpack.c.h.bf16 %v397
    %v2395 = vunpack.c.l.bf16 %v398
    %v2396 = vunpack.c.h.bf16 %v398
    %v2397 = vadd.f32 %v2234, %v2393
    %v2398 = vadd.f32 %v2286, %v2394
    %v2399 = vadd.f32 %v2338, %v2395
    %v2400 = vadd.f32 %v2390, %v2396
    %v2401 = vmax.f32 %v2397, 0.0
    %v2402 = vmax.f32 %v2398, 0.0
    %v2403 = vmax.f32 %v2399, 0.0
    %v2404 = vmax.f32 %v2400, 0.0
    %v2405 = vpack.c.bf16 %v2402, %v2401
    %v2406 = vpack.c.bf16 %v2404, %v2403
    %v2407 = vld [vmem:[#allocation7] sm:$0xff]
    %v2408 = vld [vmem:[#allocation7 + $0x8] sm:$0xff]
    %v2409 = vld [vmem:[#allocation7 + $0x10] sm:$0xff]
    %v2410 = vld [vmem:[#allocation7 + $0x18] sm:$0xff]
    %v2411 = vld [vmem:[#allocation7 + $0x20] sm:$0xff]
    %v2412 = vld [vmem:[#allocation7 + $0x28] sm:$0xff]
    %v2413 = vld [vmem:[#allocation7 + $0x30] sm:$0xff]
    %v2414 = vld [vmem:[#allocation7 + $0x38] sm:$0xff]
    %v2415 = vld [vmem:[#allocation7 + $0x40] sm:$0xff]
    %v2416 = vld [vmem:[#allocation7 + $0x48] sm:$0xff]
    %v2417 = vld [vmem:[#allocation7 + $0x50] sm:$0xff]
    %v2418 = vld [vmem:[#allocation7 + $0x58] sm:$0xff]
    %v2419 = vld [vmem:[#allocation7 + $0x60] sm:$0xff]
    %v2420 = vld [vmem:[#allocation7 + $0x68] sm:$0xff]
    %v2421 = vld [vmem:[#allocation7 + $0x70] sm:$0xff]
    %v2422 = vld [vmem:[#allocation7 + $0x78] sm:$0xff]
    %v2423 = vld [vmem:[#allocation7 + $0x80] sm:$0xff]
    %v2424 = vld [vmem:[#allocation7 + $0x88] sm:$0xff]
    %v2425 = vld [vmem:[#allocation7 + $0x90] sm:$0xff]
    %v2426 = vld [vmem:[#allocation7 + $0x98] sm:$0xff]
    %v2427 = vld [vmem:[#allocation7 + $0xa0] sm:$0xff]
    %v2428 = vld [vmem:[#allocation7 + $0xa8] sm:$0xff]
    %v2429 = vld [vmem:[#allocation7 + $0xb0] sm:$0xff]
    %v2430 = vld [vmem:[#allocation7 + $0xb8] sm:$0xff]
    %v2431 = vld [vmem:[#allocation7 + $0xc0] sm:$0xff]
    %v2432 = vld [vmem:[#allocation7 + $0xc8] sm:$0xff]
    %v2433 = vld [vmem:[#allocation7 + $0xd0] sm:$0xff]
    %v2434 = vld [vmem:[#allocation7 + $0xd8] sm:$0xff]
    %v2435 = vld [vmem:[#allocation7 + $0xe0] sm:$0xff]
    %v2436 = vld [vmem:[#allocation7 + $0xe8] sm:$0xff]
    %v2437 = vld [vmem:[#allocation7 + $0xf0] sm:$0xff]
    %v2438 = vld [vmem:[#allocation7 + $0xf8] sm:$0xff]
    %v2439 = vld [vmem:[#allocation7 + $0x100] sm:$0xff]
    %v2440 = vld [vmem:[#allocation7 + $0x108] sm:$0xff]
    %v2441 = vld [vmem:[#allocation7 + $0x110] sm:$0xff]
    %v2442 = vld [vmem:[#allocation7 + $0x118] sm:$0xff]
    %v2443 = vld [vmem:[#allocation7 + $0x120] sm:$0xff]
    %v2444 = vld [vmem:[#allocation7 + $0x128] sm:$0xff]
    %v2445 = vld [vmem:[#allocation7 + $0x130] sm:$0xff]
    %v2446 = vld [vmem:[#allocation7 + $0x138] sm:$0xff]
    %v2447 = vld [vmem:[#allocation7 + $0x140] sm:$0xff]
    %v2448 = vld [vmem:[#allocation7 + $0x148] sm:$0xff]
    %v2449 = vld [vmem:[#allocation7 + $0x150] sm:$0xff]
    %v2450 = vld [vmem:[#allocation7 + $0x158] sm:$0xff]
    %v2451 = vld [vmem:[#allocation7 + $0x160] sm:$0xff]
    %v2452 = vld [vmem:[#allocation7 + $0x168] sm:$0xff]
    %v2453 = vld [vmem:[#allocation7 + $0x170] sm:$0xff]
    %v2454 = vld [vmem:[#allocation7 + $0x178] sm:$0xff]
    %v2455 = vld [vmem:[#allocation7 + $0x180] sm:$0xff]
    %v2456 = vld [vmem:[#allocation7 + $0x188] sm:$0xff]
    %v2457 = vld [vmem:[#allocation7 + $0x190] sm:$0xff]
    %v2458 = vld [vmem:[#allocation7 + $0x198] sm:$0xff]
    %v2459 = vld [vmem:[#allocation7 + $0x1a0] sm:$0xff]
    %v2460 = vld [vmem:[#allocation7 + $0x1a8] sm:$0xff]
    %v2461 = vld [vmem:[#allocation7 + $0x1b0] sm:$0xff]
    %v2462 = vld [vmem:[#allocation7 + $0x1b8] sm:$0xff]
    %v2463 = vld [vmem:[#allocation7 + $0x1c0] sm:$0xff]
    %v2464 = vld [vmem:[#allocation7 + $0x1c8] sm:$0xff]
    %v2465 = vld [vmem:[#allocation7 + $0x1d0] sm:$0xff]
    %v2466 = vld [vmem:[#allocation7 + $0x1d8] sm:$0xff]
    %v2467 = vld [vmem:[#allocation7 + $0x1e0] sm:$0xff]
    %v2468 = vld [vmem:[#allocation7 + $0x1e8] sm:$0xff]
    %v2469 = vld [vmem:[#allocation7 + $0x1f0] sm:$0xff]
    %v2470 = vld [vmem:[#allocation7 + $0x1f8] sm:$0xff]
    %v2471 = vld [vmem:[#allocation7 + $0x200] sm:$0xff]
    %v2472 = vld [vmem:[#allocation7 + $0x208] sm:$0xff]
    %v2473 = vld [vmem:[#allocation7 + $0x210] sm:$0xff]
    %v2474 = vld [vmem:[#allocation7 + $0x218] sm:$0xff]
    %v2475 = vld [vmem:[#allocation7 + $0x220] sm:$0xff]
    %v2476 = vld [vmem:[#allocation7 + $0x228] sm:$0xff]
    %v2477 = vld [vmem:[#allocation7 + $0x230] sm:$0xff]
    %v2478 = vld [vmem:[#allocation7 + $0x238] sm:$0xff]
    %v2479 = vld [vmem:[#allocation7 + $0x240] sm:$0xff]
    %v2480 = vld [vmem:[#allocation7 + $0x248] sm:$0xff]
    %v2481 = vld [vmem:[#allocation7 + $0x250] sm:$0xff]
    %v2482 = vld [vmem:[#allocation7 + $0x258] sm:$0xff]
    %v2483 = vld [vmem:[#allocation7 + $0x260] sm:$0xff]
    %v2484 = vld [vmem:[#allocation7 + $0x268] sm:$0xff]
    %v2485 = vld [vmem:[#allocation7 + $0x270] sm:$0xff]
    %v2486 = vld [vmem:[#allocation7 + $0x278] sm:$0xff]
    %v2487 = vld [vmem:[#allocation7 + $0x280] sm:$0xff]
    %v2488 = vld [vmem:[#allocation7 + $0x288] sm:$0xff]
    %v2489 = vld [vmem:[#allocation7 + $0x290] sm:$0xff]
    %v2490 = vld [vmem:[#allocation7 + $0x298] sm:$0xff]
    %v2491 = vld [vmem:[#allocation7 + $0x2a0] sm:$0xff]
    %v2492 = vld [vmem:[#allocation7 + $0x2a8] sm:$0xff]
    %v2493 = vld [vmem:[#allocation7 + $0x2b0] sm:$0xff]
    %v2494 = vld [vmem:[#allocation7 + $0x2b8] sm:$0xff]
    %v2495 = vld [vmem:[#allocation7 + $0x2c0] sm:$0xff]
    %v2496 = vld [vmem:[#allocation7 + $0x2c8] sm:$0xff]
    %v2497 = vld [vmem:[#allocation7 + $0x2d0] sm:$0xff]
    %v2498 = vld [vmem:[#allocation7 + $0x2d8] sm:$0xff]
    %v2499 = vld [vmem:[#allocation7 + $0x2e0] sm:$0xff]
    %v2500 = vld [vmem:[#allocation7 + $0x2e8] sm:$0xff]
    %v2501 = vld [vmem:[#allocation7 + $0x2f0] sm:$0xff]
    %v2502 = vld [vmem:[#allocation7 + $0x2f8] sm:$0xff]
    %v2503 = vld [vmem:[#allocation7 + $0x300] sm:$0xff]
    %v2504 = vld [vmem:[#allocation7 + $0x308] sm:$0xff]
    %v2505 = vld [vmem:[#allocation7 + $0x310] sm:$0xff]
    %v2506 = vld [vmem:[#allocation7 + $0x318] sm:$0xff]
    %v2507 = vld [vmem:[#allocation7 + $0x320] sm:$0xff]
    %v2508 = vld [vmem:[#allocation7 + $0x328] sm:$0xff]
    %v2509 = vld [vmem:[#allocation7 + $0x330] sm:$0xff]
    %v2510 = vld [vmem:[#allocation7 + $0x338] sm:$0xff]
    %v2511 = vld [vmem:[#allocation7 + $0x340] sm:$0xff]
    %v2512 = vld [vmem:[#allocation7 + $0x348] sm:$0xff]
    %v2513 = vld [vmem:[#allocation7 + $0x350] sm:$0xff]
    %v2514 = vld [vmem:[#allocation7 + $0x358] sm:$0xff]
    %v2515 = vld [vmem:[#allocation7 + $0x360] sm:$0xff]
    %v2516 = vld [vmem:[#allocation7 + $0x368] sm:$0xff]
    %v2517 = vld [vmem:[#allocation7 + $0x370] sm:$0xff]
    %v2518 = vld [vmem:[#allocation7 + $0x378] sm:$0xff]
    %v2519 = vld [vmem:[#allocation7 + $0x380] sm:$0xff]
    %v2520 = vld [vmem:[#allocation7 + $0x388] sm:$0xff]
    %v2521 = vld [vmem:[#allocation7 + $0x390] sm:$0xff]
    %v2522 = vld [vmem:[#allocation7 + $0x398] sm:$0xff]
    %v2523 = vld [vmem:[#allocation7 + $0x3a0] sm:$0xff]
    %v2524 = vld [vmem:[#allocation7 + $0x3a8] sm:$0xff]
    %v2525 = vld [vmem:[#allocation7 + $0x3b0] sm:$0xff]
    %v2526 = vld [vmem:[#allocation7 + $0x3b8] sm:$0xff]
    %v2527 = vld [vmem:[#allocation7 + $0x3c0] sm:$0xff]
    %v2528 = vld [vmem:[#allocation7 + $0x3c8] sm:$0xff]
    %v2529 = vld [vmem:[#allocation7 + $0x3d0] sm:$0xff]
    %v2530 = vld [vmem:[#allocation7 + $0x3d8] sm:$0xff]
    %v2531 = vld [vmem:[#allocation7 + $0x3e0] sm:$0xff]
    %v2532 = vld [vmem:[#allocation7 + $0x3e8] sm:$0xff]
    %v2533 = vld [vmem:[#allocation7 + $0x3f0] sm:$0xff]
    %v2534 = vld [vmem:[#allocation7 + $0x3f8] sm:$0xff]
    %v2535 = vld [vmem:[%s8] sm:$0xf]
    %v2537 = vperm.slane %v2535, 0
    %v2538 = vperm.slane %v2535, 1
    %v2539 = vperm.slane %v2535, 2
    %v2540 = vperm.slane %v2535, 3
    %v2547 = vunpack.c.l.b16 %v2405
    %v2548 = vunpack.c.h.b16 %v2405
    %v2549 = vunpack.c.l.b16 %v2406
    %v2550 = vunpack.c.h.b16 %v2406
    %v2551 = vpack.c.b16 %v2547, %v2547
    %v2552 = vpack.c.b16 %v2548, %v2548
    %v2553 = vpack.c.b16 %v2549, %v2549
    %v2554 = vpack.c.b16 %v2550, %v2550
    %v2687 = vunpack.c.l.b16 %v2407
    %v2688 = vunpack.c.h.b16 %v2407
    %v2689 = vunpack.c.l.b16 %v2408
    %v2690 = vunpack.c.h.b16 %v2408
    %v2691 = vunpack.c.l.b16 %v2409
    %v2692 = vunpack.c.h.b16 %v2409
    %v2693 = vunpack.c.l.b16 %v2410
    %v2694 = vunpack.c.h.b16 %v2410
    %v2695 = vunpack.c.l.b16 %v2411
    %v2696 = vunpack.c.h.b16 %v2411
    %v2697 = vunpack.c.l.b16 %v2412
    %v2698 = vunpack.c.h.b16 %v2412
    %v2699 = vunpack.c.l.b16 %v2413
    %v2700 = vunpack.c.h.b16 %v2413
    %v2701 = vunpack.c.l.b16 %v2414
    %v2702 = vunpack.c.h.b16 %v2414
    %v2703 = vunpack.c.l.b16 %v2415
    %v2704 = vunpack.c.h.b16 %v2415
    %v2705 = vunpack.c.l.b16 %v2416
    %v2706 = vunpack.c.h.b16 %v2416
    %v2707 = vunpack.c.l.b16 %v2417
    %v2708 = vunpack.c.h.b16 %v2417
    %v2709 = vunpack.c.l.b16 %v2418
    %v2710 = vunpack.c.h.b16 %v2418
    %v2711 = vunpack.c.l.b16 %v2419
    %v2712 = vunpack.c.h.b16 %v2419
    %v2713 = vunpack.c.l.b16 %v2420
    %v2714 = vunpack.c.h.b16 %v2420
    %v2715 = vunpack.c.l.b16 %v2421
    %v2716 = vunpack.c.h.b16 %v2421
    %v2717 = vunpack.c.l.b16 %v2422
    %v2718 = vunpack.c.h.b16 %v2422
    %v2719 = vunpack.c.l.b16 %v2423
    %v2720 = vunpack.c.h.b16 %v2423
    %v2721 = vunpack.c.l.b16 %v2424
    %v2722 = vunpack.c.h.b16 %v2424
    %v2723 = vunpack.c.l.b16 %v2425
    %v2724 = vunpack.c.h.b16 %v2425
    %v2725 = vunpack.c.l.b16 %v2426
    %v2726 = vunpack.c.h.b16 %v2426
    %v2727 = vunpack.c.l.b16 %v2427
    %v2728 = vunpack.c.h.b16 %v2427
    %v2729 = vunpack.c.l.b16 %v2428
    %v2730 = vunpack.c.h.b16 %v2428
    %v2731 = vunpack.c.l.b16 %v2429
    %v2732 = vunpack.c.h.b16 %v2429
    %v2733 = vunpack.c.l.b16 %v2430
    %v2734 = vunpack.c.h.b16 %v2430
    %v2735 = vunpack.c.l.b16 %v2431
    %v2736 = vunpack.c.h.b16 %v2431
    %v2737 = vunpack.c.l.b16 %v2432
    %v2738 = vunpack.c.h.b16 %v2432
    %v2739 = vunpack.c.l.b16 %v2433
    %v2740 = vunpack.c.h.b16 %v2433
    %v2741 = vunpack.c.l.b16 %v2434
    %v2742 = vunpack.c.h.b16 %v2434
    %v2743 = vunpack.c.l.b16 %v2435
    %v2744 = vunpack.c.h.b16 %v2435
    %v2745 = vunpack.c.l.b16 %v2436
    %v2746 = vunpack.c.h.b16 %v2436
    %v2747 = vunpack.c.l.b16 %v2437
    %v2748 = vunpack.c.h.b16 %v2437
    %v2749 = vunpack.c.l.b16 %v2438
    %v2750 = vunpack.c.h.b16 %v2438
    %v2751 = vunpack.c.l.b16 %v2439
    %v2752 = vunpack.c.h.b16 %v2439
    %v2753 = vunpack.c.l.b16 %v2440
    %v2754 = vunpack.c.h.b16 %v2440
    %v2755 = vunpack.c.l.b16 %v2441
    %v2756 = vunpack.c.h.b16 %v2441
    %v2757 = vunpack.c.l.b16 %v2442
    %v2758 = vunpack.c.h.b16 %v2442
    %v2759 = vunpack.c.l.b16 %v2443
    %v2760 = vunpack.c.h.b16 %v2443
    %v2761 = vunpack.c.l.b16 %v2444
    %v2762 = vunpack.c.h.b16 %v2444
    %v2763 = vunpack.c.l.b16 %v2445
    %v2764 = vunpack.c.h.b16 %v2445
    %v2765 = vunpack.c.l.b16 %v2446
    %v2766 = vunpack.c.h.b16 %v2446
    %v2767 = vunpack.c.l.b16 %v2447
    %v2768 = vunpack.c.h.b16 %v2447
    %v2769 = vunpack.c.l.b16 %v2448
    %v2770 = vunpack.c.h.b16 %v2448
    %v2771 = vunpack.c.l.b16 %v2449
    %v2772 = vunpack.c.h.b16 %v2449
    %v2773 = vunpack.c.l.b16 %v2450
    %v2774 = vunpack.c.h.b16 %v2450
    %v2775 = vunpack.c.l.b16 %v2451
    %v2776 = vunpack.c.h.b16 %v2451
    %v2777 = vunpack.c.l.b16 %v2452
    %v2778 = vunpack.c.h.b16 %v2452
    %v2779 = vunpack.c.l.b16 %v2453
    %v2780 = vunpack.c.h.b16 %v2453
    %v2781 = vunpack.c.l.b16 %v2454
    %v2782 = vunpack.c.h.b16 %v2454
    %v2783 = vunpack.c.l.b16 %v2455
    %v2784 = vunpack.c.h.b16 %v2455
    %v2785 = vunpack.c.l.b16 %v2456
    %v2786 = vunpack.c.h.b16 %v2456
    %v2787 = vunpack.c.l.b16 %v2457
    %v2788 = vunpack.c.h.b16 %v2457
    %v2789 = vunpack.c.l.b16 %v2458
    %v2790 = vunpack.c.h.b16 %v2458
    %v2791 = vunpack.c.l.b16 %v2459
    %v2792 = vunpack.c.h.b16 %v2459
    %v2793 = vunpack.c.l.b16 %v2460
    %v2794 = vunpack.c.h.b16 %v2460
    %v2795 = vunpack.c.l.b16 %v2461
    %v2796 = vunpack.c.h.b16 %v2461
    %v2797 = vunpack.c.l.b16 %v2462
    %v2798 = vunpack.c.h.b16 %v2462
    %v2799 = vunpack.c.l.b16 %v2463
    %v2800 = vunpack.c.h.b16 %v2463
    %v2801 = vunpack.c.l.b16 %v2464
    %v2802 = vunpack.c.h.b16 %v2464
    %v2803 = vunpack.c.l.b16 %v2465
    %v2804 = vunpack.c.h.b16 %v2465
    %v2805 = vunpack.c.l.b16 %v2466
    %v2806 = vunpack.c.h.b16 %v2466
    %v2807 = vunpack.c.l.b16 %v2467
    %v2808 = vunpack.c.h.b16 %v2467
    %v2809 = vunpack.c.l.b16 %v2468
    %v2810 = vunpack.c.h.b16 %v2468
    %v2811 = vunpack.c.l.b16 %v2469
    %v2812 = vunpack.c.h.b16 %v2469
    %v2813 = vunpack.c.l.b16 %v2470
    %v2814 = vunpack.c.h.b16 %v2470
    %v2815 = vunpack.c.l.b16 %v2471
    %v2816 = vunpack.c.h.b16 %v2471
    %v2817 = vunpack.c.l.b16 %v2472
    %v2818 = vunpack.c.h.b16 %v2472
    %v2819 = vunpack.c.l.b16 %v2473
    %v2820 = vunpack.c.h.b16 %v2473
    %v2821 = vunpack.c.l.b16 %v2474
    %v2822 = vunpack.c.h.b16 %v2474
    %v2823 = vunpack.c.l.b16 %v2475
    %v2824 = vunpack.c.h.b16 %v2475
    %v2825 = vunpack.c.l.b16 %v2476
    %v2826 = vunpack.c.h.b16 %v2476
    %v2827 = vunpack.c.l.b16 %v2477
    %v2828 = vunpack.c.h.b16 %v2477
    %v2829 = vunpack.c.l.b16 %v2478
    %v2830 = vunpack.c.h.b16 %v2478
    %v2831 = vunpack.c.l.b16 %v2479
    %v2832 = vunpack.c.h.b16 %v2479
    %v2833 = vunpack.c.l.b16 %v2480
    %v2834 = vunpack.c.h.b16 %v2480
    %v2835 = vunpack.c.l.b16 %v2481
    %v2836 = vunpack.c.h.b16 %v2481
    %v2837 = vunpack.c.l.b16 %v2482
    %v2838 = vunpack.c.h.b16 %v2482
    %v2839 = vunpack.c.l.b16 %v2483
    %v2840 = vunpack.c.h.b16 %v2483
    %v2841 = vunpack.c.l.b16 %v2484
    %v2842 = vunpack.c.h.b16 %v2484
    %v2843 = vunpack.c.l.b16 %v2485
    %v2844 = vunpack.c.h.b16 %v2485
    %v2845 = vunpack.c.l.b16 %v2486
    %v2846 = vunpack.c.h.b16 %v2486
    %v2847 = vunpack.c.l.b16 %v2487
    %v2848 = vunpack.c.h.b16 %v2487
    %v2849 = vunpack.c.l.b16 %v2488
    %v2850 = vunpack.c.h.b16 %v2488
    %v2851 = vunpack.c.l.b16 %v2489
    %v2852 = vunpack.c.h.b16 %v2489
    %v2853 = vunpack.c.l.b16 %v2490
    %v2854 = vunpack.c.h.b16 %v2490
    %v2855 = vunpack.c.l.b16 %v2491
    %v2856 = vunpack.c.h.b16 %v2491
    %v2857 = vunpack.c.l.b16 %v2492
    %v2858 = vunpack.c.h.b16 %v2492
    %v2859 = vunpack.c.l.b16 %v2493
    %v2860 = vunpack.c.h.b16 %v2493
    %v2861 = vunpack.c.l.b16 %v2494
    %v2862 = vunpack.c.h.b16 %v2494
    %v2863 = vunpack.c.l.b16 %v2495
    %v2864 = vunpack.c.h.b16 %v2495
    %v2865 = vunpack.c.l.b16 %v2496
    %v2866 = vunpack.c.h.b16 %v2496
    %v2867 = vunpack.c.l.b16 %v2497
    %v2868 = vunpack.c.h.b16 %v2497
    %v2869 = vunpack.c.l.b16 %v2498
    %v2870 = vunpack.c.h.b16 %v2498
    %v2871 = vunpack.c.l.b16 %v2499
    %v2872 = vunpack.c.h.b16 %v2499
    %v2873 = vunpack.c.l.b16 %v2500
    %v2874 = vunpack.c.h.b16 %v2500
    %v2875 = vunpack.c.l.b16 %v2501
    %v2876 = vunpack.c.h.b16 %v2501
    %v2877 = vunpack.c.l.b16 %v2502
    %v2878 = vunpack.c.h.b16 %v2502
    %v2879 = vunpack.c.l.b16 %v2503
    %v2880 = vunpack.c.h.b16 %v2503
    %v2881 = vunpack.c.l.b16 %v2504
    %v2882 = vunpack.c.h.b16 %v2504
    %v2883 = vunpack.c.l.b16 %v2505
    %v2884 = vunpack.c.h.b16 %v2505
    %v2885 = vunpack.c.l.b16 %v2506
    %v2886 = vunpack.c.h.b16 %v2506
    %v2887 = vunpack.c.l.b16 %v2507
    %v2888 = vunpack.c.h.b16 %v2507
    %v2889 = vunpack.c.l.b16 %v2508
    %v2890 = vunpack.c.h.b16 %v2508
    %v2891 = vunpack.c.l.b16 %v2509
    %v2892 = vunpack.c.h.b16 %v2509
    %v2893 = vunpack.c.l.b16 %v2510
    %v2894 = vunpack.c.h.b16 %v2510
    %v2895 = vunpack.c.l.b16 %v2511
    %v2896 = vunpack.c.h.b16 %v2511
    %v2897 = vunpack.c.l.b16 %v2512
    %v2898 = vunpack.c.h.b16 %v2512
    %v2899 = vunpack.c.l.b16 %v2513
    %v2900 = vunpack.c.h.b16 %v2513
    %v2901 = vunpack.c.l.b16 %v2514
    %v2902 = vunpack.c.h.b16 %v2514
    %v2903 = vunpack.c.l.b16 %v2515
    %v2904 = vunpack.c.h.b16 %v2515
    %v2905 = vunpack.c.l.b16 %v2516
    %v2906 = vunpack.c.h.b16 %v2516
    %v2907 = vunpack.c.l.b16 %v2517
    %v2908 = vunpack.c.h.b16 %v2517
    %v2909 = vunpack.c.l.b16 %v2518
    %v2910 = vunpack.c.h.b16 %v2518
    %v2911 = vunpack.c.l.b16 %v2519
    %v2912 = vunpack.c.h.b16 %v2519
    %v2913 = vunpack.c.l.b16 %v2520
    %v2914 = vunpack.c.h.b16 %v2520
    %v2915 = vunpack.c.l.b16 %v2521
    %v2916 = vunpack.c.h.b16 %v2521
    %v2917 = vunpack.c.l.b16 %v2522
    %v2918 = vunpack.c.h.b16 %v2522
    %v2919 = vunpack.c.l.b16 %v2523
    %v2920 = vunpack.c.h.b16 %v2523
    %v2921 = vunpack.c.l.b16 %v2524
    %v2922 = vunpack.c.h.b16 %v2524
    %v2923 = vunpack.c.l.b16 %v2525
    %v2924 = vunpack.c.h.b16 %v2525
    %v2925 = vunpack.c.l.b16 %v2526
    %v2926 = vunpack.c.h.b16 %v2526
    %v2927 = vunpack.c.l.b16 %v2527
    %v2928 = vunpack.c.h.b16 %v2527
    %v2929 = vunpack.c.l.b16 %v2528
    %v2930 = vunpack.c.h.b16 %v2528
    %v2931 = vunpack.c.l.b16 %v2529
    %v2932 = vunpack.c.h.b16 %v2529
    %v2933 = vunpack.c.l.b16 %v2530
    %v2934 = vunpack.c.h.b16 %v2530
    %v2935 = vunpack.c.l.b16 %v2531
    %v2936 = vunpack.c.h.b16 %v2531
    %v2937 = vunpack.c.l.b16 %v2532
    %v2938 = vunpack.c.h.b16 %v2532
    %v2939 = vunpack.c.l.b16 %v2533
    %v2940 = vunpack.c.h.b16 %v2533
    %v2941 = vunpack.c.l.b16 %v2534
    %v2942 = vunpack.c.h.b16 %v2534
    %v2943 = vpack.c.b16 %v2691, %v2687
    %v2944 = vpack.c.b16 %v2692, %v2688
    %v2945 = vpack.c.b16 %v2693, %v2689
    %v2946 = vpack.c.b16 %v2694, %v2690
    %v2947 = vpack.c.b16 %v2699, %v2695
    %v2948 = vpack.c.b16 %v2700, %v2696
    %v2949 = vpack.c.b16 %v2701, %v2697
    %v2950 = vpack.c.b16 %v2702, %v2698
    %v2951 = vpack.c.b16 %v2707, %v2703
    %v2952 = vpack.c.b16 %v2708, %v2704
    %v2953 = vpack.c.b16 %v2709, %v2705
    %v2954 = vpack.c.b16 %v2710, %v2706
    %v2955 = vpack.c.b16 %v2715, %v2711
    %v2956 = vpack.c.b16 %v2716, %v2712
    %v2957 = vpack.c.b16 %v2717, %v2713
    %v2958 = vpack.c.b16 %v2718, %v2714
    %v2959 = vpack.c.b16 %v2723, %v2719
    %v2960 = vpack.c.b16 %v2724, %v2720
    %v2961 = vpack.c.b16 %v2725, %v2721
    %v2962 = vpack.c.b16 %v2726, %v2722
    %v2963 = vpack.c.b16 %v2731, %v2727
    %v2964 = vpack.c.b16 %v2732, %v2728
    %v2965 = vpack.c.b16 %v2733, %v2729
    %v2966 = vpack.c.b16 %v2734, %v2730
    %v2967 = vpack.c.b16 %v2739, %v2735
    %v2968 = vpack.c.b16 %v2740, %v2736
    %v2969 = vpack.c.b16 %v2741, %v2737
    %v2970 = vpack.c.b16 %v2742, %v2738
    %v2971 = vpack.c.b16 %v2747, %v2743
    %v2972 = vpack.c.b16 %v2748, %v2744
    %v2973 = vpack.c.b16 %v2749, %v2745
    %v2974 = vpack.c.b16 %v2750, %v2746
    %v2975 = vpack.c.b16 %v2755, %v2751
    %v2976 = vpack.c.b16 %v2756, %v2752
    %v2977 = vpack.c.b16 %v2757, %v2753
    %v2978 = vpack.c.b16 %v2758, %v2754
    %v2979 = vpack.c.b16 %v2763, %v2759
    %v2980 = vpack.c.b16 %v2764, %v2760
    %v2981 = vpack.c.b16 %v2765, %v2761
    %v2982 = vpack.c.b16 %v2766, %v2762
    %v2983 = vpack.c.b16 %v2771, %v2767
    %v2984 = vpack.c.b16 %v2772, %v2768
    %v2985 = vpack.c.b16 %v2773, %v2769
    %v2986 = vpack.c.b16 %v2774, %v2770
    %v2987 = vpack.c.b16 %v2779, %v2775
    %v2988 = vpack.c.b16 %v2780, %v2776
    %v2989 = vpack.c.b16 %v2781, %v2777
    %v2990 = vpack.c.b16 %v2782, %v2778
    %v2991 = vpack.c.b16 %v2787, %v2783
    %v2992 = vpack.c.b16 %v2788, %v2784
    %v2993 = vpack.c.b16 %v2789, %v2785
    %v2994 = vpack.c.b16 %v2790, %v2786
    %v2995 = vpack.c.b16 %v2795, %v2791
    %v2996 = vpack.c.b16 %v2796, %v2792
    %v2997 = vpack.c.b16 %v2797, %v2793
    %v2998 = vpack.c.b16 %v2798, %v2794
    %v2999 = vpack.c.b16 %v2803, %v2799
    %v3000 = vpack.c.b16 %v2804, %v2800
    %v3001 = vpack.c.b16 %v2805, %v2801
    %v3002 = vpack.c.b16 %v2806, %v2802
    %v3003 = vpack.c.b16 %v2811, %v2807
    %v3004 = vpack.c.b16 %v2812, %v2808
    %v3005 = vpack.c.b16 %v2813, %v2809
    %v3006 = vpack.c.b16 %v2814, %v2810
    %v3007 = vpack.c.b16 %v2819, %v2815
    %v3008 = vpack.c.b16 %v2820, %v2816
    %v3009 = vpack.c.b16 %v2821, %v2817
    %v3010 = vpack.c.b16 %v2822, %v2818
    %v3011 = vpack.c.b16 %v2827, %v2823
    %v3012 = vpack.c.b16 %v2828, %v2824
    %v3013 = vpack.c.b16 %v2829, %v2825
    %v3014 = vpack.c.b16 %v2830, %v2826
    %v3015 = vpack.c.b16 %v2835, %v2831
    %v3016 = vpack.c.b16 %v2836, %v2832
    %v3017 = vpack.c.b16 %v2837, %v2833
    %v3018 = vpack.c.b16 %v2838, %v2834
    %v3019 = vpack.c.b16 %v2843, %v2839
    %v3020 = vpack.c.b16 %v2844, %v2840
    %v3021 = vpack.c.b16 %v2845, %v2841
    %v3022 = vpack.c.b16 %v2846, %v2842
    %v3023 = vpack.c.b16 %v2851, %v2847
    %v3024 = vpack.c.b16 %v2852, %v2848
    %v3025 = vpack.c.b16 %v2853, %v2849
    %v3026 = vpack.c.b16 %v2854, %v2850
    %v3027 = vpack.c.b16 %v2859, %v2855
    %v3028 = vpack.c.b16 %v2860, %v2856
    %v3029 = vpack.c.b16 %v2861, %v2857
    %v3030 = vpack.c.b16 %v2862, %v2858
    %v3031 = vpack.c.b16 %v2867, %v2863
    %v3032 = vpack.c.b16 %v2868, %v2864
    %v3033 = vpack.c.b16 %v2869, %v2865
    %v3034 = vpack.c.b16 %v2870, %v2866
    %v3035 = vpack.c.b16 %v2875, %v2871
    %v3036 = vpack.c.b16 %v2876, %v2872
    %v3037 = vpack.c.b16 %v2877, %v2873
    %v3038 = vpack.c.b16 %v2878, %v2874
    %v3039 = vpack.c.b16 %v2883, %v2879
    %v3040 = vpack.c.b16 %v2884, %v2880
    %v3041 = vpack.c.b16 %v2885, %v2881
    %v3042 = vpack.c.b16 %v2886, %v2882
    %v3043 = vpack.c.b16 %v2891, %v2887
    %v3044 = vpack.c.b16 %v2892, %v2888
    %v3045 = vpack.c.b16 %v2893, %v2889
    %v3046 = vpack.c.b16 %v2894, %v2890
    %v3047 = vpack.c.b16 %v2899, %v2895
    %v3048 = vpack.c.b16 %v2900, %v2896
    %v3049 = vpack.c.b16 %v2901, %v2897
    %v3050 = vpack.c.b16 %v2902, %v2898
    %v3051 = vpack.c.b16 %v2907, %v2903
    %v3052 = vpack.c.b16 %v2908, %v2904
    %v3053 = vpack.c.b16 %v2909, %v2905
    %v3054 = vpack.c.b16 %v2910, %v2906
    %v3055 = vpack.c.b16 %v2915, %v2911
    %v3056 = vpack.c.b16 %v2916, %v2912
    %v3057 = vpack.c.b16 %v2917, %v2913
    %v3058 = vpack.c.b16 %v2918, %v2914
    %v3059 = vpack.c.b16 %v2923, %v2919
    %v3060 = vpack.c.b16 %v2924, %v2920
    %v3061 = vpack.c.b16 %v2925, %v2921
    %v3062 = vpack.c.b16 %v2926, %v2922
    %v3063 = vpack.c.b16 %v2931, %v2927
    %v3064 = vpack.c.b16 %v2932, %v2928
    %v3065 = vpack.c.b16 %v2933, %v2929
    %v3066 = vpack.c.b16 %v2934, %v2930
    %v3067 = vpack.c.b16 %v2939, %v2935
    %v3068 = vpack.c.b16 %v2940, %v2936
    %v3069 = vpack.c.b16 %v2941, %v2937
    %v3070 = vpack.c.b16 %v2942, %v2938
    %3199 = vmatpush.bf16.msra.mxu0 %v2971
    %3200 = vmatpush.bf16.msra.mxu0 %v2967
    %3201 = vmatpush.bf16.msra.mxu0 %v2963
    %3202 = vmatpush.bf16.msra.mxu0 %v2959
    %3203 = vmatpush.bf16.msra.mxu0 %v2955
    %3204 = vmatpush.bf16.msra.mxu0 %v2951
    %3205 = vmatpush.bf16.msra.mxu0 %v2947
    %3206 = vmatpush.bf16.msra.mxu0 %v2943
    %3207 = vmatmul.bf16.gmra.mxu0 %v2551
    %v3208 = vpop.f32.mrf.mxu0
    %v3209 = vadd.f32 %v2537, %v3208
    %v3210 = vpop.f32.mrf.mxu0
    %3211 = vdwg.mxu0
    %3212 = vmatpush.bf16.msra.mxu0 %v3003
    %3213 = vmatpush.bf16.msra.mxu0 %v2999
    %3214 = vmatpush.bf16.msra.mxu0 %v2995
    %3215 = vmatpush.bf16.msra.mxu0 %v2991
    %3216 = vmatpush.bf16.msra.mxu0 %v2987
    %3217 = vmatpush.bf16.msra.mxu0 %v2983
    %3218 = vmatpush.bf16.msra.mxu0 %v2979
    %3219 = vmatpush.bf16.msra.mxu0 %v2975
    %3220 = vmatmul.bf16.gmra.mxu0 %v2552
    %v3221 = vpop.f32.mrf.mxu0
    %v3222 = vadd.f32 %v3209, %v3221
    %v3223 = vpop.f32.mrf.mxu0
    %3224 = vdwg.mxu0
    %3225 = vmatpush.bf16.msra.mxu0 %v3035
    %3226 = vmatpush.bf16.msra.mxu0 %v3031
    %3227 = vmatpush.bf16.msra.mxu0 %v3027
    %3228 = vmatpush.bf16.msra.mxu0 %v3023
    %3229 = vmatpush.bf16.msra.mxu0 %v3019
    %3230 = vmatpush.bf16.msra.mxu0 %v3015
    %3231 = vmatpush.bf16.msra.mxu0 %v3011
    %3232 = vmatpush.bf16.msra.mxu0 %v3007
    %3233 = vmatmul.bf16.gmra.mxu0 %v2553
    %v3234 = vpop.f32.mrf.mxu0
    %v3235 = vadd.f32 %v3222, %v3234
    %v3236 = vpop.f32.mrf.mxu0
    %3237 = vdwg.mxu0
    %3238 = vmatpush.bf16.msra.mxu0 %v3067
    %3239 = vmatpush.bf16.msra.mxu0 %v3063
    %3240 = vmatpush.bf16.msra.mxu0 %v3059
    %3241 = vmatpush.bf16.msra.mxu0 %v3055
    %3242 = vmatpush.bf16.msra.mxu0 %v3051
    %3243 = vmatpush.bf16.msra.mxu0 %v3047
    %3244 = vmatpush.bf16.msra.mxu0 %v3043
    %3245 = vmatpush.bf16.msra.mxu0 %v3039
    %3246 = vmatmul.bf16.gmra.mxu0 %v2554
    %v3247 = vpop.f32.mrf.mxu0
    %v3248 = vadd.f32 %v3235, %v3247
    %v3249 = vpop.f32.mrf.mxu0
    %3250 = vdwg.mxu0
    %3251 = vmatpush.bf16.msra.mxu0 %v2972
    %3252 = vmatpush.bf16.msra.mxu0 %v2968
    %3253 = vmatpush.bf16.msra.mxu0 %v2964
    %3254 = vmatpush.bf16.msra.mxu0 %v2960
    %3255 = vmatpush.bf16.msra.mxu0 %v2956
    %3256 = vmatpush.bf16.msra.mxu0 %v2952
    %3257 = vmatpush.bf16.msra.mxu0 %v2948
    %3258 = vmatpush.bf16.msra.mxu0 %v2944
    %3259 = vmatmul.bf16.gmra.mxu0 %v2551
    %v3260 = vpop.f32.mrf.mxu0
    %v3261 = vadd.f32 %v2538, %v3260
    %v3262 = vpop.f32.mrf.mxu0
    %3263 = vdwg.mxu0
    %3264 = vmatpush.bf16.msra.mxu0 %v3004
    %3265 = vmatpush.bf16.msra.mxu0 %v3000
    %3266 = vmatpush.bf16.msra.mxu0 %v2996
    %3267 = vmatpush.bf16.msra.mxu0 %v2992
    %3268 = vmatpush.bf16.msra.mxu0 %v2988
    %3269 = vmatpush.bf16.msra.mxu0 %v2984
    %3270 = vmatpush.bf16.msra.mxu0 %v2980
    %3271 = vmatpush.bf16.msra.mxu0 %v2976
    %3272 = vmatmul.bf16.gmra.mxu0 %v2552
    %v3273 = vpop.f32.mrf.mxu0
    %v3274 = vadd.f32 %v3261, %v3273
    %v3275 = vpop.f32.mrf.mxu0
    %3276 = vdwg.mxu0
    %3277 = vmatpush.bf16.msra.mxu0 %v3036
    %3278 = vmatpush.bf16.msra.mxu0 %v3032
    %3279 = vmatpush.bf16.msra.mxu0 %v3028
    %3280 = vmatpush.bf16.msra.mxu0 %v3024
    %3281 = vmatpush.bf16.msra.mxu0 %v3020
    %3282 = vmatpush.bf16.msra.mxu0 %v3016
    %3283 = vmatpush.bf16.msra.mxu0 %v3012
    %3284 = vmatpush.bf16.msra.mxu0 %v3008
    %3285 = vmatmul.bf16.gmra.mxu0 %v2553
    %v3286 = vpop.f32.mrf.mxu0
    %v3287 = vadd.f32 %v3274, %v3286
    %v3288 = vpop.f32.mrf.mxu0
    %3289 = vdwg.mxu0
    %3290 = vmatpush.bf16.msra.mxu0 %v3068
    %3291 = vmatpush.bf16.msra.mxu0 %v3064
    %3292 = vmatpush.bf16.msra.mxu0 %v3060
    %3293 = vmatpush.bf16.msra.mxu0 %v3056
    %3294 = vmatpush.bf16.msra.mxu0 %v3052
    %3295 = vmatpush.bf16.msra.mxu0 %v3048
    %3296 = vmatpush.bf16.msra.mxu0 %v3044
    %3297 = vmatpush.bf16.msra.mxu0 %v3040
    %3298 = vmatmul.bf16.gmra.mxu0 %v2554
    %v3299 = vpop.f32.mrf.mxu0
    %v3300 = vadd.f32 %v3287, %v3299
    %v3301 = vpop.f32.mrf.mxu0
    %3302 = vdwg.mxu0
    %3303 = vmatpush.bf16.msra.mxu0 %v2973
    %3304 = vmatpush.bf16.msra.mxu0 %v2969
    %3305 = vmatpush.bf16.msra.mxu0 %v2965
    %3306 = vmatpush.bf16.msra.mxu0 %v2961
    %3307 = vmatpush.bf16.msra.mxu0 %v2957
    %3308 = vmatpush.bf16.msra.mxu0 %v2953
    %3309 = vmatpush.bf16.msra.mxu0 %v2949
    %3310 = vmatpush.bf16.msra.mxu0 %v2945
    %3311 = vmatmul.bf16.gmra.mxu0 %v2551
    %v3312 = vpop.f32.mrf.mxu0
    %v3313 = vadd.f32 %v2539, %v3312
    %v3314 = vpop.f32.mrf.mxu0
    %3315 = vdwg.mxu0
    %3316 = vmatpush.bf16.msra.mxu0 %v3005
    %3317 = vmatpush.bf16.msra.mxu0 %v3001
    %3318 = vmatpush.bf16.msra.mxu0 %v2997
    %3319 = vmatpush.bf16.msra.mxu0 %v2993
    %3320 = vmatpush.bf16.msra.mxu0 %v2989
    %3321 = vmatpush.bf16.msra.mxu0 %v2985
    %3322 = vmatpush.bf16.msra.mxu0 %v2981
    %3323 = vmatpush.bf16.msra.mxu0 %v2977
    %3324 = vmatmul.bf16.gmra.mxu0 %v2552
    %v3325 = vpop.f32.mrf.mxu0
    %v3326 = vadd.f32 %v3313, %v3325
    %v3327 = vpop.f32.mrf.mxu0
    %3328 = vdwg.mxu0
    %3329 = vmatpush.bf16.msra.mxu0 %v3037
    %3330 = vmatpush.bf16.msra.mxu0 %v3033
    %3331 = vmatpush.bf16.msra.mxu0 %v3029
    %3332 = vmatpush.bf16.msra.mxu0 %v3025
    %3333 = vmatpush.bf16.msra.mxu0 %v3021
    %3334 = vmatpush.bf16.msra.mxu0 %v3017
    %3335 = vmatpush.bf16.msra.mxu0 %v3013
    %3336 = vmatpush.bf16.msra.mxu0 %v3009
    %3337 = vmatmul.bf16.gmra.mxu0 %v2553
    %v3338 = vpop.f32.mrf.mxu0
    %v3339 = vadd.f32 %v3326, %v3338
    %v3340 = vpop.f32.mrf.mxu0
    %3341 = vdwg.mxu0
    %3342 = vmatpush.bf16.msra.mxu0 %v3069
    %3343 = vmatpush.bf16.msra.mxu0 %v3065
    %3344 = vmatpush.bf16.msra.mxu0 %v3061
    %3345 = vmatpush.bf16.msra.mxu0 %v3057
    %3346 = vmatpush.bf16.msra.mxu0 %v3053
    %3347 = vmatpush.bf16.msra.mxu0 %v3049
    %3348 = vmatpush.bf16.msra.mxu0 %v3045
    %3349 = vmatpush.bf16.msra.mxu0 %v3041
    %3350 = vmatmul.bf16.gmra.mxu0 %v2554
    %v3351 = vpop.f32.mrf.mxu0
    %v3352 = vadd.f32 %v3339, %v3351
    %v3353 = vpop.f32.mrf.mxu0
    %3354 = vdwg.mxu0
    %3355 = vmatpush.bf16.msra.mxu0 %v2974
    %3356 = vmatpush.bf16.msra.mxu0 %v2970
    %3357 = vmatpush.bf16.msra.mxu0 %v2966
    %3358 = vmatpush.bf16.msra.mxu0 %v2962
    %3359 = vmatpush.bf16.msra.mxu0 %v2958
    %3360 = vmatpush.bf16.msra.mxu0 %v2954
    %3361 = vmatpush.bf16.msra.mxu0 %v2950
    %3362 = vmatpush.bf16.msra.mxu0 %v2946
    %3363 = vmatmul.bf16.gmra.mxu0 %v2551
    %v3364 = vpop.f32.mrf.mxu0
    %v3365 = vadd.f32 %v2540, %v3364
    %v3366 = vpop.f32.mrf.mxu0
    %3367 = vdwg.mxu0
    %3368 = vmatpush.bf16.msra.mxu0 %v3006
    %3369 = vmatpush.bf16.msra.mxu0 %v3002
    %3370 = vmatpush.bf16.msra.mxu0 %v2998
    %3371 = vmatpush.bf16.msra.mxu0 %v2994
    %3372 = vmatpush.bf16.msra.mxu0 %v2990
    %3373 = vmatpush.bf16.msra.mxu0 %v2986
    %3374 = vmatpush.bf16.msra.mxu0 %v2982
    %3375 = vmatpush.bf16.msra.mxu0 %v2978
    %3376 = vmatmul.bf16.gmra.mxu0 %v2552
    %v3377 = vpop.f32.mrf.mxu0
    %v3378 = vadd.f32 %v3365, %v3377
    %v3379 = vpop.f32.mrf.mxu0
    %3380 = vdwg.mxu0
    %3381 = vmatpush.bf16.msra.mxu0 %v3038
    %3382 = vmatpush.bf16.msra.mxu0 %v3034
    %3383 = vmatpush.bf16.msra.mxu0 %v3030
    %3384 = vmatpush.bf16.msra.mxu0 %v3026
    %3385 = vmatpush.bf16.msra.mxu0 %v3022
    %3386 = vmatpush.bf16.msra.mxu0 %v3018
    %3387 = vmatpush.bf16.msra.mxu0 %v3014
    %3388 = vmatpush.bf16.msra.mxu0 %v3010
    %3389 = vmatmul.bf16.gmra.mxu0 %v2553
    %v3390 = vpop.f32.mrf.mxu0
    %v3391 = vadd.f32 %v3378, %v3390
    %v3392 = vpop.f32.mrf.mxu0
    %3393 = vdwg.mxu0
    %3394 = vmatpush.bf16.msra.mxu0 %v3070
    %3395 = vmatpush.bf16.msra.mxu0 %v3066
    %3396 = vmatpush.bf16.msra.mxu0 %v3062
    %3397 = vmatpush.bf16.msra.mxu0 %v3058
    %3398 = vmatpush.bf16.msra.mxu0 %v3054
    %3399 = vmatpush.bf16.msra.mxu0 %v3050
    %3400 = vmatpush.bf16.msra.mxu0 %v3046
    %3401 = vmatpush.bf16.msra.mxu0 %v3042
    %3402 = vmatmul.bf16.gmra.mxu0 %v2554
    %v3403 = vpop.f32.mrf.mxu0
    %v3404 = vadd.f32 %v3391, %v3403
    %v3405 = vpop.f32.mrf.mxu0
    %3406 = vdwg.mxu0
    %v3407 = vmax.f32 %v3248, 0.0
    %v3408 = vmax.f32 %v3300, 0.0
    %v3409 = vmax.f32 %v3352, 0.0
    %v3410 = vmax.f32 %v3404, 0.0
    %v3411 = vpack.c.bf16 %v3407, %v3407
    %v3412 = vpack.c.bf16 %v3408, %v3408
    %v3413 = vpack.c.bf16 %v3409, %v3409
    %v3414 = vpack.c.bf16 %v3410, %v3410
    %v3415 = vld [vmem:[#allocation9] sm:$0xff]
    %v3416 = vld [vmem:[#allocation9 + $0x8] sm:$0xff]
    %v3417 = vld [vmem:[#allocation9 + $0x10] sm:$0xff]
    %v3418 = vld [vmem:[#allocation9 + $0x18] sm:$0xff]
    %v3419 = vld [vmem:[#allocation9 + $0x20] sm:$0xff]
    %v3420 = vld [vmem:[#allocation9 + $0x28] sm:$0xff]
    %v3421 = vld [vmem:[#allocation9 + $0x30] sm:$0xff]
    %v3422 = vld [vmem:[#allocation9 + $0x38] sm:$0xff]
    %v3423 = vld [vmem:[#allocation9 + $0x40] sm:$0xff]
    %v3424 = vld [vmem:[#allocation9 + $0x48] sm:$0xff]
    %v3425 = vld [vmem:[#allocation9 + $0x50] sm:$0xff]
    %v3426 = vld [vmem:[#allocation9 + $0x58] sm:$0xff]
    %v3427 = vld [vmem:[#allocation9 + $0x60] sm:$0xff]
    %v3428 = vld [vmem:[#allocation9 + $0x68] sm:$0xff]
    %v3429 = vld [vmem:[#allocation9 + $0x70] sm:$0xff]
    %v3430 = vld [vmem:[#allocation9 + $0x78] sm:$0xff]
    %v3431 = vld [vmem:[#allocation9 + $0x80] sm:$0xff]
    %v3432 = vld [vmem:[#allocation9 + $0x88] sm:$0xff]
    %v3433 = vld [vmem:[#allocation9 + $0x90] sm:$0xff]
    %v3434 = vld [vmem:[#allocation9 + $0x98] sm:$0xff]
    %v3435 = vld [vmem:[#allocation9 + $0xa0] sm:$0xff]
    %v3436 = vld [vmem:[#allocation9 + $0xa8] sm:$0xff]
    %v3437 = vld [vmem:[#allocation9 + $0xb0] sm:$0xff]
    %v3438 = vld [vmem:[#allocation9 + $0xb8] sm:$0xff]
    %v3439 = vld [vmem:[#allocation9 + $0xc0] sm:$0xff]
    %v3440 = vld [vmem:[#allocation9 + $0xc8] sm:$0xff]
    %v3441 = vld [vmem:[#allocation9 + $0xd0] sm:$0xff]
    %v3442 = vld [vmem:[#allocation9 + $0xd8] sm:$0xff]
    %v3443 = vld [vmem:[#allocation9 + $0xe0] sm:$0xff]
    %v3444 = vld [vmem:[#allocation9 + $0xe8] sm:$0xff]
    %v3445 = vld [vmem:[#allocation9 + $0xf0] sm:$0xff]
    %v3446 = vld [vmem:[#allocation9 + $0xf8] sm:$0xff]
    %v3447 = vld [vmem:[#allocation9 + $0x100] sm:$0xff]
    %v3448 = vld [vmem:[#allocation9 + $0x108] sm:$0xff]
    %v3449 = vld [vmem:[#allocation9 + $0x110] sm:$0xff]
    %v3450 = vld [vmem:[#allocation9 + $0x118] sm:$0xff]
    %v3451 = vld [vmem:[#allocation9 + $0x120] sm:$0xff]
    %v3452 = vld [vmem:[#allocation9 + $0x128] sm:$0xff]
    %v3453 = vld [vmem:[#allocation9 + $0x130] sm:$0xff]
    %v3454 = vld [vmem:[#allocation9 + $0x138] sm:$0xff]
    %v3455 = vld [vmem:[#allocation9 + $0x140] sm:$0xff]
    %v3456 = vld [vmem:[#allocation9 + $0x148] sm:$0xff]
    %v3457 = vld [vmem:[#allocation9 + $0x150] sm:$0xff]
    %v3458 = vld [vmem:[#allocation9 + $0x158] sm:$0xff]
    %v3459 = vld [vmem:[#allocation9 + $0x160] sm:$0xff]
    %v3460 = vld [vmem:[#allocation9 + $0x168] sm:$0xff]
    %v3461 = vld [vmem:[#allocation9 + $0x170] sm:$0xff]
    %v3462 = vld [vmem:[#allocation9 + $0x178] sm:$0xff]
    %v3463 = vld [vmem:[#allocation9 + $0x180] sm:$0xff]
    %v3464 = vld [vmem:[#allocation9 + $0x188] sm:$0xff]
    %v3465 = vld [vmem:[#allocation9 + $0x190] sm:$0xff]
    %v3466 = vld [vmem:[#allocation9 + $0x198] sm:$0xff]
    %v3467 = vld [vmem:[#allocation9 + $0x1a0] sm:$0xff]
    %v3468 = vld [vmem:[#allocation9 + $0x1a8] sm:$0xff]
    %v3469 = vld [vmem:[#allocation9 + $0x1b0] sm:$0xff]
    %v3470 = vld [vmem:[#allocation9 + $0x1b8] sm:$0xff]
    %v3471 = vld [vmem:[#allocation9 + $0x1c0] sm:$0xff]
    %v3472 = vld [vmem:[#allocation9 + $0x1c8] sm:$0xff]
    %v3473 = vld [vmem:[#allocation9 + $0x1d0] sm:$0xff]
    %v3474 = vld [vmem:[#allocation9 + $0x1d8] sm:$0xff]
    %v3475 = vld [vmem:[#allocation9 + $0x1e0] sm:$0xff]
    %v3476 = vld [vmem:[#allocation9 + $0x1e8] sm:$0xff]
    %v3477 = vld [vmem:[#allocation9 + $0x1f0] sm:$0xff]
    %v3478 = vld [vmem:[#allocation9 + $0x1f8] sm:$0xff]
    %v3479 = vld [vmem:[#allocation9 + $0x200] sm:$0xff]
    %v3480 = vld [vmem:[#allocation9 + $0x208] sm:$0xff]
    %v3481 = vld [vmem:[#allocation9 + $0x210] sm:$0xff]
    %v3482 = vld [vmem:[#allocation9 + $0x218] sm:$0xff]
    %v3483 = vld [vmem:[#allocation9 + $0x220] sm:$0xff]
    %v3484 = vld [vmem:[#allocation9 + $0x228] sm:$0xff]
    %v3485 = vld [vmem:[#allocation9 + $0x230] sm:$0xff]
    %v3486 = vld [vmem:[#allocation9 + $0x238] sm:$0xff]
    %v3487 = vld [vmem:[#allocation9 + $0x240] sm:$0xff]
    %v3488 = vld [vmem:[#allocation9 + $0x248] sm:$0xff]
    %v3489 = vld [vmem:[#allocation9 + $0x250] sm:$0xff]
    %v3490 = vld [vmem:[#allocation9 + $0x258] sm:$0xff]
    %v3491 = vld [vmem:[#allocation9 + $0x260] sm:$0xff]
    %v3492 = vld [vmem:[#allocation9 + $0x268] sm:$0xff]
    %v3493 = vld [vmem:[#allocation9 + $0x270] sm:$0xff]
    %v3494 = vld [vmem:[#allocation9 + $0x278] sm:$0xff]
    %v3495 = vld [vmem:[#allocation9 + $0x280] sm:$0xff]
    %v3496 = vld [vmem:[#allocation9 + $0x288] sm:$0xff]
    %v3497 = vld [vmem:[#allocation9 + $0x290] sm:$0xff]
    %v3498 = vld [vmem:[#allocation9 + $0x298] sm:$0xff]
    %v3499 = vld [vmem:[#allocation9 + $0x2a0] sm:$0xff]
    %v3500 = vld [vmem:[#allocation9 + $0x2a8] sm:$0xff]
    %v3501 = vld [vmem:[#allocation9 + $0x2b0] sm:$0xff]
    %v3502 = vld [vmem:[#allocation9 + $0x2b8] sm:$0xff]
    %v3503 = vld [vmem:[#allocation9 + $0x2c0] sm:$0xff]
    %v3504 = vld [vmem:[#allocation9 + $0x2c8] sm:$0xff]
    %v3505 = vld [vmem:[#allocation9 + $0x2d0] sm:$0xff]
    %v3506 = vld [vmem:[#allocation9 + $0x2d8] sm:$0xff]
    %v3507 = vld [vmem:[#allocation9 + $0x2e0] sm:$0xff]
    %v3508 = vld [vmem:[#allocation9 + $0x2e8] sm:$0xff]
    %v3509 = vld [vmem:[#allocation9 + $0x2f0] sm:$0xff]
    %v3510 = vld [vmem:[#allocation9 + $0x2f8] sm:$0xff]
    %v3511 = vld [vmem:[#allocation9 + $0x300] sm:$0xff]
    %v3512 = vld [vmem:[#allocation9 + $0x308] sm:$0xff]
    %v3513 = vld [vmem:[#allocation9 + $0x310] sm:$0xff]
    %v3514 = vld [vmem:[#allocation9 + $0x318] sm:$0xff]
    %v3515 = vld [vmem:[#allocation9 + $0x320] sm:$0xff]
    %v3516 = vld [vmem:[#allocation9 + $0x328] sm:$0xff]
    %v3517 = vld [vmem:[#allocation9 + $0x330] sm:$0xff]
    %v3518 = vld [vmem:[#allocation9 + $0x338] sm:$0xff]
    %v3519 = vld [vmem:[#allocation9 + $0x340] sm:$0xff]
    %v3520 = vld [vmem:[#allocation9 + $0x348] sm:$0xff]
    %v3521 = vld [vmem:[#allocation9 + $0x350] sm:$0xff]
    %v3522 = vld [vmem:[#allocation9 + $0x358] sm:$0xff]
    %v3523 = vld [vmem:[#allocation9 + $0x360] sm:$0xff]
    %v3524 = vld [vmem:[#allocation9 + $0x368] sm:$0xff]
    %v3525 = vld [vmem:[#allocation9 + $0x370] sm:$0xff]
    %v3526 = vld [vmem:[#allocation9 + $0x378] sm:$0xff]
    %v3527 = vld [vmem:[#allocation9 + $0x380] sm:$0xff]
    %v3528 = vld [vmem:[#allocation9 + $0x388] sm:$0xff]
    %v3529 = vld [vmem:[#allocation9 + $0x390] sm:$0xff]
    %v3530 = vld [vmem:[#allocation9 + $0x398] sm:$0xff]
    %v3531 = vld [vmem:[#allocation9 + $0x3a0] sm:$0xff]
    %v3532 = vld [vmem:[#allocation9 + $0x3a8] sm:$0xff]
    %v3533 = vld [vmem:[#allocation9 + $0x3b0] sm:$0xff]
    %v3534 = vld [vmem:[#allocation9 + $0x3b8] sm:$0xff]
    %v3535 = vld [vmem:[#allocation9 + $0x3c0] sm:$0xff]
    %v3536 = vld [vmem:[#allocation9 + $0x3c8] sm:$0xff]
    %v3537 = vld [vmem:[#allocation9 + $0x3d0] sm:$0xff]
    %v3538 = vld [vmem:[#allocation9 + $0x3d8] sm:$0xff]
    %v3539 = vld [vmem:[#allocation9 + $0x3e0] sm:$0xff]
    %v3540 = vld [vmem:[#allocation9 + $0x3e8] sm:$0xff]
    %v3541 = vld [vmem:[#allocation9 + $0x3f0] sm:$0xff]
    %v3542 = vld [vmem:[#allocation9 + $0x3f8] sm:$0xff]
    %v3543 = vld [vmem:[%s10] sm:$0xf]
    %v3545 = vperm.slane %v3543, 0
    %v3546 = vperm.slane %v3543, 1
    %v3547 = vperm.slane %v3543, 2
    %v3548 = vperm.slane %v3543, 3
    %v3681 = vunpack.c.l.b16 %v3415
    %v3682 = vunpack.c.h.b16 %v3415
    %v3683 = vunpack.c.l.b16 %v3416
    %v3684 = vunpack.c.h.b16 %v3416
    %v3685 = vunpack.c.l.b16 %v3417
    %v3686 = vunpack.c.h.b16 %v3417
    %v3687 = vunpack.c.l.b16 %v3418
    %v3688 = vunpack.c.h.b16 %v3418
    %v3689 = vunpack.c.l.b16 %v3419
    %v3690 = vunpack.c.h.b16 %v3419
    %v3691 = vunpack.c.l.b16 %v3420
    %v3692 = vunpack.c.h.b16 %v3420
    %v3693 = vunpack.c.l.b16 %v3421
    %v3694 = vunpack.c.h.b16 %v3421
    %v3695 = vunpack.c.l.b16 %v3422
    %v3696 = vunpack.c.h.b16 %v3422
    %v3697 = vunpack.c.l.b16 %v3423
    %v3698 = vunpack.c.h.b16 %v3423
    %v3699 = vunpack.c.l.b16 %v3424
    %v3700 = vunpack.c.h.b16 %v3424
    %v3701 = vunpack.c.l.b16 %v3425
    %v3702 = vunpack.c.h.b16 %v3425
    %v3703 = vunpack.c.l.b16 %v3426
    %v3704 = vunpack.c.h.b16 %v3426
    %v3705 = vunpack.c.l.b16 %v3427
    %v3706 = vunpack.c.h.b16 %v3427
    %v3707 = vunpack.c.l.b16 %v3428
    %v3708 = vunpack.c.h.b16 %v3428
    %v3709 = vunpack.c.l.b16 %v3429
    %v3710 = vunpack.c.h.b16 %v3429
    %v3711 = vunpack.c.l.b16 %v3430
    %v3712 = vunpack.c.h.b16 %v3430
    %v3713 = vunpack.c.l.b16 %v3431
    %v3714 = vunpack.c.h.b16 %v3431
    %v3715 = vunpack.c.l.b16 %v3432
    %v3716 = vunpack.c.h.b16 %v3432
    %v3717 = vunpack.c.l.b16 %v3433
    %v3718 = vunpack.c.h.b16 %v3433
    %v3719 = vunpack.c.l.b16 %v3434
    %v3720 = vunpack.c.h.b16 %v3434
    %v3721 = vunpack.c.l.b16 %v3435
    %v3722 = vunpack.c.h.b16 %v3435
    %v3723 = vunpack.c.l.b16 %v3436
    %v3724 = vunpack.c.h.b16 %v3436
    %v3725 = vunpack.c.l.b16 %v3437
    %v3726 = vunpack.c.h.b16 %v3437
    %v3727 = vunpack.c.l.b16 %v3438
    %v3728 = vunpack.c.h.b16 %v3438
    %v3729 = vunpack.c.l.b16 %v3439
    %v3730 = vunpack.c.h.b16 %v3439
    %v3731 = vunpack.c.l.b16 %v3440
    %v3732 = vunpack.c.h.b16 %v3440
    %v3733 = vunpack.c.l.b16 %v3441
    %v3734 = vunpack.c.h.b16 %v3441
    %v3735 = vunpack.c.l.b16 %v3442
    %v3736 = vunpack.c.h.b16 %v3442
    %v3737 = vunpack.c.l.b16 %v3443
    %v3738 = vunpack.c.h.b16 %v3443
    %v3739 = vunpack.c.l.b16 %v3444
    %v3740 = vunpack.c.h.b16 %v3444
    %v3741 = vunpack.c.l.b16 %v3445
    %v3742 = vunpack.c.h.b16 %v3445
    %v3743 = vunpack.c.l.b16 %v3446
    %v3744 = vunpack.c.h.b16 %v3446
    %v3745 = vunpack.c.l.b16 %v3447
    %v3746 = vunpack.c.h.b16 %v3447
    %v3747 = vunpack.c.l.b16 %v3448
    %v3748 = vunpack.c.h.b16 %v3448
    %v3749 = vunpack.c.l.b16 %v3449
    %v3750 = vunpack.c.h.b16 %v3449
    %v3751 = vunpack.c.l.b16 %v3450
    %v3752 = vunpack.c.h.b16 %v3450
    %v3753 = vunpack.c.l.b16 %v3451
    %v3754 = vunpack.c.h.b16 %v3451
    %v3755 = vunpack.c.l.b16 %v3452
    %v3756 = vunpack.c.h.b16 %v3452
    %v3757 = vunpack.c.l.b16 %v3453
    %v3758 = vunpack.c.h.b16 %v3453
    %v3759 = vunpack.c.l.b16 %v3454
    %v3760 = vunpack.c.h.b16 %v3454
    %v3761 = vunpack.c.l.b16 %v3455
    %v3762 = vunpack.c.h.b16 %v3455
    %v3763 = vunpack.c.l.b16 %v3456
    %v3764 = vunpack.c.h.b16 %v3456
    %v3765 = vunpack.c.l.b16 %v3457
    %v3766 = vunpack.c.h.b16 %v3457
    %v3767 = vunpack.c.l.b16 %v3458
    %v3768 = vunpack.c.h.b16 %v3458
    %v3769 = vunpack.c.l.b16 %v3459
    %v3770 = vunpack.c.h.b16 %v3459
    %v3771 = vunpack.c.l.b16 %v3460
    %v3772 = vunpack.c.h.b16 %v3460
    %v3773 = vunpack.c.l.b16 %v3461
    %v3774 = vunpack.c.h.b16 %v3461
    %v3775 = vunpack.c.l.b16 %v3462
    %v3776 = vunpack.c.h.b16 %v3462
    %v3777 = vunpack.c.l.b16 %v3463
    %v3778 = vunpack.c.h.b16 %v3463
    %v3779 = vunpack.c.l.b16 %v3464
    %v3780 = vunpack.c.h.b16 %v3464
    %v3781 = vunpack.c.l.b16 %v3465
    %v3782 = vunpack.c.h.b16 %v3465
    %v3783 = vunpack.c.l.b16 %v3466
    %v3784 = vunpack.c.h.b16 %v3466
    %v3785 = vunpack.c.l.b16 %v3467
    %v3786 = vunpack.c.h.b16 %v3467
    %v3787 = vunpack.c.l.b16 %v3468
    %v3788 = vunpack.c.h.b16 %v3468
    %v3789 = vunpack.c.l.b16 %v3469
    %v3790 = vunpack.c.h.b16 %v3469
    %v3791 = vunpack.c.l.b16 %v3470
    %v3792 = vunpack.c.h.b16 %v3470
    %v3793 = vunpack.c.l.b16 %v3471
    %v3794 = vunpack.c.h.b16 %v3471
    %v3795 = vunpack.c.l.b16 %v3472
    %v3796 = vunpack.c.h.b16 %v3472
    %v3797 = vunpack.c.l.b16 %v3473
    %v3798 = vunpack.c.h.b16 %v3473
    %v3799 = vunpack.c.l.b16 %v3474
    %v3800 = vunpack.c.h.b16 %v3474
    %v3801 = vunpack.c.l.b16 %v3475
    %v3802 = vunpack.c.h.b16 %v3475
    %v3803 = vunpack.c.l.b16 %v3476
    %v3804 = vunpack.c.h.b16 %v3476
    %v3805 = vunpack.c.l.b16 %v3477
    %v3806 = vunpack.c.h.b16 %v3477
    %v3807 = vunpack.c.l.b16 %v3478
    %v3808 = vunpack.c.h.b16 %v3478
    %v3809 = vunpack.c.l.b16 %v3479
    %v3810 = vunpack.c.h.b16 %v3479
    %v3811 = vunpack.c.l.b16 %v3480
    %v3812 = vunpack.c.h.b16 %v3480
    %v3813 = vunpack.c.l.b16 %v3481
    %v3814 = vunpack.c.h.b16 %v3481
    %v3815 = vunpack.c.l.b16 %v3482
    %v3816 = vunpack.c.h.b16 %v3482
    %v3817 = vunpack.c.l.b16 %v3483
    %v3818 = vunpack.c.h.b16 %v3483
    %v3819 = vunpack.c.l.b16 %v3484
    %v3820 = vunpack.c.h.b16 %v3484
    %v3821 = vunpack.c.l.b16 %v3485
    %v3822 = vunpack.c.h.b16 %v3485
    %v3823 = vunpack.c.l.b16 %v3486
    %v3824 = vunpack.c.h.b16 %v3486
    %v3825 = vunpack.c.l.b16 %v3487
    %v3826 = vunpack.c.h.b16 %v3487
    %v3827 = vunpack.c.l.b16 %v3488
    %v3828 = vunpack.c.h.b16 %v3488
    %v3829 = vunpack.c.l.b16 %v3489
    %v3830 = vunpack.c.h.b16 %v3489
    %v3831 = vunpack.c.l.b16 %v3490
    %v3832 = vunpack.c.h.b16 %v3490
    %v3833 = vunpack.c.l.b16 %v3491
    %v3834 = vunpack.c.h.b16 %v3491
    %v3835 = vunpack.c.l.b16 %v3492
    %v3836 = vunpack.c.h.b16 %v3492
    %v3837 = vunpack.c.l.b16 %v3493
    %v3838 = vunpack.c.h.b16 %v3493
    %v3839 = vunpack.c.l.b16 %v3494
    %v3840 = vunpack.c.h.b16 %v3494
    %v3841 = vunpack.c.l.b16 %v3495
    %v3842 = vunpack.c.h.b16 %v3495
    %v3843 = vunpack.c.l.b16 %v3496
    %v3844 = vunpack.c.h.b16 %v3496
    %v3845 = vunpack.c.l.b16 %v3497
    %v3846 = vunpack.c.h.b16 %v3497
    %v3847 = vunpack.c.l.b16 %v3498
    %v3848 = vunpack.c.h.b16 %v3498
    %v3849 = vunpack.c.l.b16 %v3499
    %v3850 = vunpack.c.h.b16 %v3499
    %v3851 = vunpack.c.l.b16 %v3500
    %v3852 = vunpack.c.h.b16 %v3500
    %v3853 = vunpack.c.l.b16 %v3501
    %v3854 = vunpack.c.h.b16 %v3501
    %v3855 = vunpack.c.l.b16 %v3502
    %v3856 = vunpack.c.h.b16 %v3502
    %v3857 = vunpack.c.l.b16 %v3503
    %v3858 = vunpack.c.h.b16 %v3503
    %v3859 = vunpack.c.l.b16 %v3504
    %v3860 = vunpack.c.h.b16 %v3504
    %v3861 = vunpack.c.l.b16 %v3505
    %v3862 = vunpack.c.h.b16 %v3505
    %v3863 = vunpack.c.l.b16 %v3506
    %v3864 = vunpack.c.h.b16 %v3506
    %v3865 = vunpack.c.l.b16 %v3507
    %v3866 = vunpack.c.h.b16 %v3507
    %v3867 = vunpack.c.l.b16 %v3508
    %v3868 = vunpack.c.h.b16 %v3508
    %v3869 = vunpack.c.l.b16 %v3509
    %v3870 = vunpack.c.h.b16 %v3509
    %v3871 = vunpack.c.l.b16 %v3510
    %v3872 = vunpack.c.h.b16 %v3510
    %v3873 = vunpack.c.l.b16 %v3511
    %v3874 = vunpack.c.h.b16 %v3511
    %v3875 = vunpack.c.l.b16 %v3512
    %v3876 = vunpack.c.h.b16 %v3512
    %v3877 = vunpack.c.l.b16 %v3513
    %v3878 = vunpack.c.h.b16 %v3513
    %v3879 = vunpack.c.l.b16 %v3514
    %v3880 = vunpack.c.h.b16 %v3514
    %v3881 = vunpack.c.l.b16 %v3515
    %v3882 = vunpack.c.h.b16 %v3515
    %v3883 = vunpack.c.l.b16 %v3516
    %v3884 = vunpack.c.h.b16 %v3516
    %v3885 = vunpack.c.l.b16 %v3517
    %v3886 = vunpack.c.h.b16 %v3517
    %v3887 = vunpack.c.l.b16 %v3518
    %v3888 = vunpack.c.h.b16 %v3518
    %v3889 = vunpack.c.l.b16 %v3519
    %v3890 = vunpack.c.h.b16 %v3519
    %v3891 = vunpack.c.l.b16 %v3520
    %v3892 = vunpack.c.h.b16 %v3520
    %v3893 = vunpack.c.l.b16 %v3521
    %v3894 = vunpack.c.h.b16 %v3521
    %v3895 = vunpack.c.l.b16 %v3522
    %v3896 = vunpack.c.h.b16 %v3522
    %v3897 = vunpack.c.l.b16 %v3523
    %v3898 = vunpack.c.h.b16 %v3523
    %v3899 = vunpack.c.l.b16 %v3524
    %v3900 = vunpack.c.h.b16 %v3524
    %v3901 = vunpack.c.l.b16 %v3525
    %v3902 = vunpack.c.h.b16 %v3525
    %v3903 = vunpack.c.l.b16 %v3526
    %v3904 = vunpack.c.h.b16 %v3526
    %v3905 = vunpack.c.l.b16 %v3527
    %v3906 = vunpack.c.h.b16 %v3527
    %v3907 = vunpack.c.l.b16 %v3528
    %v3908 = vunpack.c.h.b16 %v3528
    %v3909 = vunpack.c.l.b16 %v3529
    %v3910 = vunpack.c.h.b16 %v3529
    %v3911 = vunpack.c.l.b16 %v3530
    %v3912 = vunpack.c.h.b16 %v3530
    %v3913 = vunpack.c.l.b16 %v3531
    %v3914 = vunpack.c.h.b16 %v3531
    %v3915 = vunpack.c.l.b16 %v3532
    %v3916 = vunpack.c.h.b16 %v3532
    %v3917 = vunpack.c.l.b16 %v3533
    %v3918 = vunpack.c.h.b16 %v3533
    %v3919 = vunpack.c.l.b16 %v3534
    %v3920 = vunpack.c.h.b16 %v3534
    %v3921 = vunpack.c.l.b16 %v3535
    %v3922 = vunpack.c.h.b16 %v3535
    %v3923 = vunpack.c.l.b16 %v3536
    %v3924 = vunpack.c.h.b16 %v3536
    %v3925 = vunpack.c.l.b16 %v3537
    %v3926 = vunpack.c.h.b16 %v3537
    %v3927 = vunpack.c.l.b16 %v3538
    %v3928 = vunpack.c.h.b16 %v3538
    %v3929 = vunpack.c.l.b16 %v3539
    %v3930 = vunpack.c.h.b16 %v3539
    %v3931 = vunpack.c.l.b16 %v3540
    %v3932 = vunpack.c.h.b16 %v3540
    %v3933 = vunpack.c.l.b16 %v3541
    %v3934 = vunpack.c.h.b16 %v3541
    %v3935 = vunpack.c.l.b16 %v3542
    %v3936 = vunpack.c.h.b16 %v3542
    %v3937 = vpack.c.b16 %v3685, %v3681
    %v3938 = vpack.c.b16 %v3686, %v3682
    %v3939 = vpack.c.b16 %v3687, %v3683
    %v3940 = vpack.c.b16 %v3688, %v3684
    %v3941 = vpack.c.b16 %v3693, %v3689
    %v3942 = vpack.c.b16 %v3694, %v3690
    %v3943 = vpack.c.b16 %v3695, %v3691
    %v3944 = vpack.c.b16 %v3696, %v3692
    %v3945 = vpack.c.b16 %v3701, %v3697
    %v3946 = vpack.c.b16 %v3702, %v3698
    %v3947 = vpack.c.b16 %v3703, %v3699
    %v3948 = vpack.c.b16 %v3704, %v3700
    %v3949 = vpack.c.b16 %v3709, %v3705
    %v3950 = vpack.c.b16 %v3710, %v3706
    %v3951 = vpack.c.b16 %v3711, %v3707
    %v3952 = vpack.c.b16 %v3712, %v3708
    %v3953 = vpack.c.b16 %v3717, %v3713
    %v3954 = vpack.c.b16 %v3718, %v3714
    %v3955 = vpack.c.b16 %v3719, %v3715
    %v3956 = vpack.c.b16 %v3720, %v3716
    %v3957 = vpack.c.b16 %v3725, %v3721
    %v3958 = vpack.c.b16 %v3726, %v3722
    %v3959 = vpack.c.b16 %v3727, %v3723
    %v3960 = vpack.c.b16 %v3728, %v3724
    %v3961 = vpack.c.b16 %v3733, %v3729
    %v3962 = vpack.c.b16 %v3734, %v3730
    %v3963 = vpack.c.b16 %v3735, %v3731
    %v3964 = vpack.c.b16 %v3736, %v3732
    %v3965 = vpack.c.b16 %v3741, %v3737
    %v3966 = vpack.c.b16 %v3742, %v3738
    %v3967 = vpack.c.b16 %v3743, %v3739
    %v3968 = vpack.c.b16 %v3744, %v3740
    %v3969 = vpack.c.b16 %v3749, %v3745
    %v3970 = vpack.c.b16 %v3750, %v3746
    %v3971 = vpack.c.b16 %v3751, %v3747
    %v3972 = vpack.c.b16 %v3752, %v3748
    %v3973 = vpack.c.b16 %v3757, %v3753
    %v3974 = vpack.c.b16 %v3758, %v3754
    %v3975 = vpack.c.b16 %v3759, %v3755
    %v3976 = vpack.c.b16 %v3760, %v3756
    %v3977 = vpack.c.b16 %v3765, %v3761
    %v3978 = vpack.c.b16 %v3766, %v3762
    %v3979 = vpack.c.b16 %v3767, %v3763
    %v3980 = vpack.c.b16 %v3768, %v3764
    %v3981 = vpack.c.b16 %v3773, %v3769
    %v3982 = vpack.c.b16 %v3774, %v3770
    %v3983 = vpack.c.b16 %v3775, %v3771
    %v3984 = vpack.c.b16 %v3776, %v3772
    %v3985 = vpack.c.b16 %v3781, %v3777
    %v3986 = vpack.c.b16 %v3782, %v3778
    %v3987 = vpack.c.b16 %v3783, %v3779
    %v3988 = vpack.c.b16 %v3784, %v3780
    %v3989 = vpack.c.b16 %v3789, %v3785
    %v3990 = vpack.c.b16 %v3790, %v3786
    %v3991 = vpack.c.b16 %v3791, %v3787
    %v3992 = vpack.c.b16 %v3792, %v3788
    %v3993 = vpack.c.b16 %v3797, %v3793
    %v3994 = vpack.c.b16 %v3798, %v3794
    %v3995 = vpack.c.b16 %v3799, %v3795
    %v3996 = vpack.c.b16 %v3800, %v3796
    %v3997 = vpack.c.b16 %v3805, %v3801
    %v3998 = vpack.c.b16 %v3806, %v3802
    %v3999 = vpack.c.b16 %v3807, %v3803
    %v4000 = vpack.c.b16 %v3808, %v3804
    %v4001 = vpack.c.b16 %v3813, %v3809
    %v4002 = vpack.c.b16 %v3814, %v3810
    %v4003 = vpack.c.b16 %v3815, %v3811
    %v4004 = vpack.c.b16 %v3816, %v3812
    %v4005 = vpack.c.b16 %v3821, %v3817
    %v4006 = vpack.c.b16 %v3822, %v3818
    %v4007 = vpack.c.b16 %v3823, %v3819
    %v4008 = vpack.c.b16 %v3824, %v3820
    %v4009 = vpack.c.b16 %v3829, %v3825
    %v4010 = vpack.c.b16 %v3830, %v3826
    %v4011 = vpack.c.b16 %v3831, %v3827
    %v4012 = vpack.c.b16 %v3832, %v3828
    %v4013 = vpack.c.b16 %v3837, %v3833
    %v4014 = vpack.c.b16 %v3838, %v3834
    %v4015 = vpack.c.b16 %v3839, %v3835
    %v4016 = vpack.c.b16 %v3840, %v3836
    %v4017 = vpack.c.b16 %v3845, %v3841
    %v4018 = vpack.c.b16 %v3846, %v3842
    %v4019 = vpack.c.b16 %v3847, %v3843
    %v4020 = vpack.c.b16 %v3848, %v3844
    %v4021 = vpack.c.b16 %v3853, %v3849
    %v4022 = vpack.c.b16 %v3854, %v3850
    %v4023 = vpack.c.b16 %v3855, %v3851
    %v4024 = vpack.c.b16 %v3856, %v3852
    %v4025 = vpack.c.b16 %v3861, %v3857
    %v4026 = vpack.c.b16 %v3862, %v3858
    %v4027 = vpack.c.b16 %v3863, %v3859
    %v4028 = vpack.c.b16 %v3864, %v3860
    %v4029 = vpack.c.b16 %v3869, %v3865
    %v4030 = vpack.c.b16 %v3870, %v3866
    %v4031 = vpack.c.b16 %v3871, %v3867
    %v4032 = vpack.c.b16 %v3872, %v3868
    %v4033 = vpack.c.b16 %v3877, %v3873
    %v4034 = vpack.c.b16 %v3878, %v3874
    %v4035 = vpack.c.b16 %v3879, %v3875
    %v4036 = vpack.c.b16 %v3880, %v3876
    %v4037 = vpack.c.b16 %v3885, %v3881
    %v4038 = vpack.c.b16 %v3886, %v3882
    %v4039 = vpack.c.b16 %v3887, %v3883
    %v4040 = vpack.c.b16 %v3888, %v3884
    %v4041 = vpack.c.b16 %v3893, %v3889
    %v4042 = vpack.c.b16 %v3894, %v3890
    %v4043 = vpack.c.b16 %v3895, %v3891
    %v4044 = vpack.c.b16 %v3896, %v3892
    %v4045 = vpack.c.b16 %v3901, %v3897
    %v4046 = vpack.c.b16 %v3902, %v3898
    %v4047 = vpack.c.b16 %v3903, %v3899
    %v4048 = vpack.c.b16 %v3904, %v3900
    %v4049 = vpack.c.b16 %v3909, %v3905
    %v4050 = vpack.c.b16 %v3910, %v3906
    %v4051 = vpack.c.b16 %v3911, %v3907
    %v4052 = vpack.c.b16 %v3912, %v3908
    %v4053 = vpack.c.b16 %v3917, %v3913
    %v4054 = vpack.c.b16 %v3918, %v3914
    %v4055 = vpack.c.b16 %v3919, %v3915
    %v4056 = vpack.c.b16 %v3920, %v3916
    %v4057 = vpack.c.b16 %v3925, %v3921
    %v4058 = vpack.c.b16 %v3926, %v3922
    %v4059 = vpack.c.b16 %v3927, %v3923
    %v4060 = vpack.c.b16 %v3928, %v3924
    %v4061 = vpack.c.b16 %v3933, %v3929
    %v4062 = vpack.c.b16 %v3934, %v3930
    %v4063 = vpack.c.b16 %v3935, %v3931
    %v4064 = vpack.c.b16 %v3936, %v3932
    %4193 = vmatpush.bf16.msra.mxu0 %v3965
    %4194 = vmatpush.bf16.msra.mxu0 %v3961
    %4195 = vmatpush.bf16.msra.mxu0 %v3957
    %4196 = vmatpush.bf16.msra.mxu0 %v3953
    %4197 = vmatpush.bf16.msra.mxu0 %v3949
    %4198 = vmatpush.bf16.msra.mxu0 %v3945
    %4199 = vmatpush.bf16.msra.mxu0 %v3941
    %4200 = vmatpush.bf16.msra.mxu0 %v3937
    %4201 = vmatmul.bf16.gmra.mxu0 %v3411
    %v4202 = vpop.f32.mrf.mxu0
    %v4203 = vadd.f32 %v3545, %v4202
    %v4204 = vpop.f32.mrf.mxu0
    %4205 = vdwg.mxu0
    %4206 = vmatpush.bf16.msra.mxu0 %v3997
    %4207 = vmatpush.bf16.msra.mxu0 %v3993
    %4208 = vmatpush.bf16.msra.mxu0 %v3989
    %4209 = vmatpush.bf16.msra.mxu0 %v3985
    %4210 = vmatpush.bf16.msra.mxu0 %v3981
    %4211 = vmatpush.bf16.msra.mxu0 %v3977
    %4212 = vmatpush.bf16.msra.mxu0 %v3973
    %4213 = vmatpush.bf16.msra.mxu0 %v3969
    %4214 = vmatmul.bf16.gmra.mxu0 %v3412
    %v4215 = vpop.f32.mrf.mxu0
    %v4216 = vadd.f32 %v4203, %v4215
    %v4217 = vpop.f32.mrf.mxu0
    %4218 = vdwg.mxu0
    %4219 = vmatpush.bf16.msra.mxu0 %v4029
    %4220 = vmatpush.bf16.msra.mxu0 %v4025
    %4221 = vmatpush.bf16.msra.mxu0 %v4021
    %4222 = vmatpush.bf16.msra.mxu0 %v4017
    %4223 = vmatpush.bf16.msra.mxu0 %v4013
    %4224 = vmatpush.bf16.msra.mxu0 %v4009
    %4225 = vmatpush.bf16.msra.mxu0 %v4005
    %4226 = vmatpush.bf16.msra.mxu0 %v4001
    %4227 = vmatmul.bf16.gmra.mxu0 %v3413
    %v4228 = vpop.f32.mrf.mxu0
    %v4229 = vadd.f32 %v4216, %v4228
    %v4230 = vpop.f32.mrf.mxu0
    %4231 = vdwg.mxu0
    %4232 = vmatpush.bf16.msra.mxu0 %v4061
    %4233 = vmatpush.bf16.msra.mxu0 %v4057
    %4234 = vmatpush.bf16.msra.mxu0 %v4053
    %4235 = vmatpush.bf16.msra.mxu0 %v4049
    %4236 = vmatpush.bf16.msra.mxu0 %v4045
    %4237 = vmatpush.bf16.msra.mxu0 %v4041
    %4238 = vmatpush.bf16.msra.mxu0 %v4037
    %4239 = vmatpush.bf16.msra.mxu0 %v4033
    %4240 = vmatmul.bf16.gmra.mxu0 %v3414
    %v4241 = vpop.f32.mrf.mxu0
    %v4242 = vadd.f32 %v4229, %v4241
    %v4243 = vpop.f32.mrf.mxu0
    %4244 = vdwg.mxu0
    %4245 = vmatpush.bf16.msra.mxu0 %v3966
    %4246 = vmatpush.bf16.msra.mxu0 %v3962
    %4247 = vmatpush.bf16.msra.mxu0 %v3958
    %4248 = vmatpush.bf16.msra.mxu0 %v3954
    %4249 = vmatpush.bf16.msra.mxu0 %v3950
    %4250 = vmatpush.bf16.msra.mxu0 %v3946
    %4251 = vmatpush.bf16.msra.mxu0 %v3942
    %4252 = vmatpush.bf16.msra.mxu0 %v3938
    %4253 = vmatmul.bf16.gmra.mxu0 %v3411
    %v4254 = vpop.f32.mrf.mxu0
    %v4255 = vadd.f32 %v3546, %v4254
    %v4256 = vpop.f32.mrf.mxu0
    %4257 = vdwg.mxu0
    %4258 = vmatpush.bf16.msra.mxu0 %v3998
    %4259 = vmatpush.bf16.msra.mxu0 %v3994
    %4260 = vmatpush.bf16.msra.mxu0 %v3990
    %4261 = vmatpush.bf16.msra.mxu0 %v3986
    %4262 = vmatpush.bf16.msra.mxu0 %v3982
    %4263 = vmatpush.bf16.msra.mxu0 %v3978
    %4264 = vmatpush.bf16.msra.mxu0 %v3974
    %4265 = vmatpush.bf16.msra.mxu0 %v3970
    %4266 = vmatmul.bf16.gmra.mxu0 %v3412
    %v4267 = vpop.f32.mrf.mxu0
    %v4268 = vadd.f32 %v4255, %v4267
    %v4269 = vpop.f32.mrf.mxu0
    %4270 = vdwg.mxu0
    %4271 = vmatpush.bf16.msra.mxu0 %v4030
    %4272 = vmatpush.bf16.msra.mxu0 %v4026
    %4273 = vmatpush.bf16.msra.mxu0 %v4022
    %4274 = vmatpush.bf16.msra.mxu0 %v4018
    %4275 = vmatpush.bf16.msra.mxu0 %v4014
    %4276 = vmatpush.bf16.msra.mxu0 %v4010
    %4277 = vmatpush.bf16.msra.mxu0 %v4006
    %4278 = vmatpush.bf16.msra.mxu0 %v4002
    %4279 = vmatmul.bf16.gmra.mxu0 %v3413
    %v4280 = vpop.f32.mrf.mxu0
    %v4281 = vadd.f32 %v4268, %v4280
    %v4282 = vpop.f32.mrf.mxu0
    %4283 = vdwg.mxu0
    %4284 = vmatpush.bf16.msra.mxu0 %v4062
    %4285 = vmatpush.bf16.msra.mxu0 %v4058
    %4286 = vmatpush.bf16.msra.mxu0 %v4054
    %4287 = vmatpush.bf16.msra.mxu0 %v4050
    %4288 = vmatpush.bf16.msra.mxu0 %v4046
    %4289 = vmatpush.bf16.msra.mxu0 %v4042
    %4290 = vmatpush.bf16.msra.mxu0 %v4038
    %4291 = vmatpush.bf16.msra.mxu0 %v4034
    %4292 = vmatmul.bf16.gmra.mxu0 %v3414
    %v4293 = vpop.f32.mrf.mxu0
    %v4294 = vadd.f32 %v4281, %v4293
    %v4295 = vpop.f32.mrf.mxu0
    %4296 = vdwg.mxu0
    %4297 = vmatpush.bf16.msra.mxu0 %v3967
    %4298 = vmatpush.bf16.msra.mxu0 %v3963
    %4299 = vmatpush.bf16.msra.mxu0 %v3959
    %4300 = vmatpush.bf16.msra.mxu0 %v3955
    %4301 = vmatpush.bf16.msra.mxu0 %v3951
    %4302 = vmatpush.bf16.msra.mxu0 %v3947
    %4303 = vmatpush.bf16.msra.mxu0 %v3943
    %4304 = vmatpush.bf16.msra.mxu0 %v3939
    %4305 = vmatmul.bf16.gmra.mxu0 %v3411
    %v4306 = vpop.f32.mrf.mxu0
    %v4307 = vadd.f32 %v3547, %v4306
    %v4308 = vpop.f32.mrf.mxu0
    %4309 = vdwg.mxu0
    %4310 = vmatpush.bf16.msra.mxu0 %v3999
    %4311 = vmatpush.bf16.msra.mxu0 %v3995
    %4312 = vmatpush.bf16.msra.mxu0 %v3991
    %4313 = vmatpush.bf16.msra.mxu0 %v3987
    %4314 = vmatpush.bf16.msra.mxu0 %v3983
    %4315 = vmatpush.bf16.msra.mxu0 %v3979
    %4316 = vmatpush.bf16.msra.mxu0 %v3975
    %4317 = vmatpush.bf16.msra.mxu0 %v3971
    %4318 = vmatmul.bf16.gmra.mxu0 %v3412
    %v4319 = vpop.f32.mrf.mxu0
    %v4320 = vadd.f32 %v4307, %v4319
    %v4321 = vpop.f32.mrf.mxu0
    %4322 = vdwg.mxu0
    %4323 = vmatpush.bf16.msra.mxu0 %v4031
    %4324 = vmatpush.bf16.msra.mxu0 %v4027
    %4325 = vmatpush.bf16.msra.mxu0 %v4023
    %4326 = vmatpush.bf16.msra.mxu0 %v4019
    %4327 = vmatpush.bf16.msra.mxu0 %v4015
    %4328 = vmatpush.bf16.msra.mxu0 %v4011
    %4329 = vmatpush.bf16.msra.mxu0 %v4007
    %4330 = vmatpush.bf16.msra.mxu0 %v4003
    %4331 = vmatmul.bf16.gmra.mxu0 %v3413
    %v4332 = vpop.f32.mrf.mxu0
    %v4333 = vadd.f32 %v4320, %v4332
    %v4334 = vpop.f32.mrf.mxu0
    %4335 = vdwg.mxu0
    %4336 = vmatpush.bf16.msra.mxu0 %v4063
    %4337 = vmatpush.bf16.msra.mxu0 %v4059
    %4338 = vmatpush.bf16.msra.mxu0 %v4055
    %4339 = vmatpush.bf16.msra.mxu0 %v4051
    %4340 = vmatpush.bf16.msra.mxu0 %v4047
    %4341 = vmatpush.bf16.msra.mxu0 %v4043
    %4342 = vmatpush.bf16.msra.mxu0 %v4039
    %4343 = vmatpush.bf16.msra.mxu0 %v4035
    %4344 = vmatmul.bf16.gmra.mxu0 %v3414
    %v4345 = vpop.f32.mrf.mxu0
    %v4346 = vadd.f32 %v4333, %v4345
    %v4347 = vpop.f32.mrf.mxu0
    %4348 = vdwg.mxu0
    %4349 = vmatpush.bf16.msra.mxu0 %v3968
    %4350 = vmatpush.bf16.msra.mxu0 %v3964
    %4351 = vmatpush.bf16.msra.mxu0 %v3960
    %4352 = vmatpush.bf16.msra.mxu0 %v3956
    %4353 = vmatpush.bf16.msra.mxu0 %v3952
    %4354 = vmatpush.bf16.msra.mxu0 %v3948
    %4355 = vmatpush.bf16.msra.mxu0 %v3944
    %4356 = vmatpush.bf16.msra.mxu0 %v3940
    %4357 = vmatmul.bf16.gmra.mxu0 %v3411
    %v4358 = vpop.f32.mrf.mxu0
    %v4359 = vadd.f32 %v3548, %v4358
    %v4360 = vpop.f32.mrf.mxu0
    %4361 = vdwg.mxu0
    %4362 = vmatpush.bf16.msra.mxu0 %v4000
    %4363 = vmatpush.bf16.msra.mxu0 %v3996
    %4364 = vmatpush.bf16.msra.mxu0 %v3992
    %4365 = vmatpush.bf16.msra.mxu0 %v3988
    %4366 = vmatpush.bf16.msra.mxu0 %v3984
    %4367 = vmatpush.bf16.msra.mxu0 %v3980
    %4368 = vmatpush.bf16.msra.mxu0 %v3976
    %4369 = vmatpush.bf16.msra.mxu0 %v3972
    %4370 = vmatmul.bf16.gmra.mxu0 %v3412
    %v4371 = vpop.f32.mrf.mxu0
    %v4372 = vadd.f32 %v4359, %v4371
    %v4373 = vpop.f32.mrf.mxu0
    %4374 = vdwg.mxu0
    %4375 = vmatpush.bf16.msra.mxu0 %v4032
    %4376 = vmatpush.bf16.msra.mxu0 %v4028
    %4377 = vmatpush.bf16.msra.mxu0 %v4024
    %4378 = vmatpush.bf16.msra.mxu0 %v4020
    %4379 = vmatpush.bf16.msra.mxu0 %v4016
    %4380 = vmatpush.bf16.msra.mxu0 %v4012
    %4381 = vmatpush.bf16.msra.mxu0 %v4008
    %4382 = vmatpush.bf16.msra.mxu0 %v4004
    %4383 = vmatmul.bf16.gmra.mxu0 %v3413
    %v4384 = vpop.f32.mrf.mxu0
    %v4385 = vadd.f32 %v4372, %v4384
    %v4386 = vpop.f32.mrf.mxu0
    %4387 = vdwg.mxu0
    %4388 = vmatpush.bf16.msra.mxu0 %v4064
    %4389 = vmatpush.bf16.msra.mxu0 %v4060
    %4390 = vmatpush.bf16.msra.mxu0 %v4056
    %4391 = vmatpush.bf16.msra.mxu0 %v4052
    %4392 = vmatpush.bf16.msra.mxu0 %v4048
    %4393 = vmatpush.bf16.msra.mxu0 %v4044
    %4394 = vmatpush.bf16.msra.mxu0 %v4040
    %4395 = vmatpush.bf16.msra.mxu0 %v4036
    %4396 = vmatmul.bf16.gmra.mxu0 %v3414
    %v4397 = vpop.f32.mrf.mxu0
    %v4398 = vadd.f32 %v4385, %v4397
    %v4399 = vpop.f32.mrf.mxu0
    %4400 = vdwg.mxu0
    %v4401 = vunpack.c.l.bf16 %v2405
    %v4402 = vunpack.c.h.bf16 %v2405
    %v4403 = vunpack.c.l.bf16 %v2406
    %v4404 = vunpack.c.h.bf16 %v2406
    %v4405 = vadd.f32 %v4242, %v4401
    %v4406 = vadd.f32 %v4294, %v4402
    %v4407 = vadd.f32 %v4346, %v4403
    %v4408 = vadd.f32 %v4398, %v4404
    %v4409 = vmax.f32 %v4405, 0.0
    %v4410 = vmax.f32 %v4406, 0.0
    %v4411 = vmax.f32 %v4407, 0.0
    %v4412 = vmax.f32 %v4408, 0.0
    %v4413 = vpack.c.bf16 %v4409, %v4409
    %v4414 = vpack.c.bf16 %v4410, %v4410
    %v4415 = vpack.c.bf16 %v4411, %v4411
    %v4416 = vpack.c.bf16 %v4412, %v4412
    %v4417 = vld [vmem:[#allocation10] sm:$0xf]
    %v4418 = vld [vmem:[#allocation10 + $0x4] sm:$0xf]
    %v4419 = vld [vmem:[#allocation10 + $0x8] sm:$0xf]
    %v4420 = vld [vmem:[#allocation10 + $0xc] sm:$0xf]
    %v4421 = vld [vmem:[#allocation10 + $0x10] sm:$0xf]
    %v4422 = vld [vmem:[#allocation10 + $0x14] sm:$0xf]
    %v4423 = vld [vmem:[#allocation10 + $0x18] sm:$0xf]
    %v4424 = vld [vmem:[#allocation10 + $0x1c] sm:$0xf]
    %v4425 = vld [vmem:[#allocation10 + $0x20] sm:$0xf]
    %v4426 = vld [vmem:[#allocation10 + $0x24] sm:$0xf]
    %v4427 = vld [vmem:[#allocation10 + $0x28] sm:$0xf]
    %v4428 = vld [vmem:[#allocation10 + $0x2c] sm:$0xf]
    %v4429 = vld [vmem:[#allocation10 + $0x30] sm:$0xf]
    %v4430 = vld [vmem:[#allocation10 + $0x34] sm:$0xf]
    %v4431 = vld [vmem:[#allocation10 + $0x38] sm:$0xf]
    %v4432 = vld [vmem:[#allocation10 + $0x3c] sm:$0xf]
    %v4433 = vld [vmem:[#allocation10 + $0x40] sm:$0xf]
    %v4434 = vld [vmem:[#allocation10 + $0x44] sm:$0xf]
    %v4435 = vld [vmem:[#allocation10 + $0x48] sm:$0xf]
    %v4436 = vld [vmem:[#allocation10 + $0x4c] sm:$0xf]
    %v4437 = vld [vmem:[#allocation10 + $0x50] sm:$0xf]
    %v4438 = vld [vmem:[#allocation10 + $0x54] sm:$0xf]
    %v4439 = vld [vmem:[#allocation10 + $0x58] sm:$0xf]
    %v4440 = vld [vmem:[#allocation10 + $0x5c] sm:$0xf]
    %v4441 = vld [vmem:[#allocation10 + $0x60] sm:$0xf]
    %v4442 = vld [vmem:[#allocation10 + $0x64] sm:$0xf]
    %v4443 = vld [vmem:[#allocation10 + $0x68] sm:$0xf]
    %v4444 = vld [vmem:[#allocation10 + $0x6c] sm:$0xf]
    %v4445 = vld [vmem:[#allocation10 + $0x70] sm:$0xf]
    %v4446 = vld [vmem:[#allocation10 + $0x74] sm:$0xf]
    %v4447 = vld [vmem:[#allocation10 + $0x78] sm:$0xf]
    %v4448 = vld [vmem:[#allocation10 + $0x7c] sm:$0xf]
    %v4449 = vld [vmem:[#allocation10 + $0x80] sm:$0xf]
    %v4450 = vld [vmem:[#allocation10 + $0x84] sm:$0xf]
    %v4451 = vld [vmem:[#allocation10 + $0x88] sm:$0xf]
    %v4452 = vld [vmem:[#allocation10 + $0x8c] sm:$0xf]
    %v4453 = vld [vmem:[#allocation10 + $0x90] sm:$0xf]
    %v4454 = vld [vmem:[#allocation10 + $0x94] sm:$0xf]
    %v4455 = vld [vmem:[#allocation10 + $0x98] sm:$0xf]
    %v4456 = vld [vmem:[#allocation10 + $0x9c] sm:$0xf]
    %v4457 = vld [vmem:[#allocation10 + $0xa0] sm:$0xf]
    %v4458 = vld [vmem:[#allocation10 + $0xa4] sm:$0xf]
    %v4459 = vld [vmem:[#allocation10 + $0xa8] sm:$0xf]
    %v4460 = vld [vmem:[#allocation10 + $0xac] sm:$0xf]
    %v4461 = vld [vmem:[#allocation10 + $0xb0] sm:$0xf]
    %v4462 = vld [vmem:[#allocation10 + $0xb4] sm:$0xf]
    %v4463 = vld [vmem:[#allocation10 + $0xb8] sm:$0xf]
    %v4464 = vld [vmem:[#allocation10 + $0xbc] sm:$0xf]
    %v4465 = vld [vmem:[#allocation10 + $0xc0] sm:$0xf]
    %v4466 = vld [vmem:[#allocation10 + $0xc4] sm:$0xf]
    %v4467 = vld [vmem:[#allocation10 + $0xc8] sm:$0xf]
    %v4468 = vld [vmem:[#allocation10 + $0xcc] sm:$0xf]
    %v4469 = vld [vmem:[#allocation10 + $0xd0] sm:$0xf]
    %v4470 = vld [vmem:[#allocation10 + $0xd4] sm:$0xf]
    %v4471 = vld [vmem:[#allocation10 + $0xd8] sm:$0xf]
    %v4472 = vld [vmem:[#allocation10 + $0xdc] sm:$0xf]
    %v4473 = vld [vmem:[#allocation10 + $0xe0] sm:$0xf]
    %v4474 = vld [vmem:[#allocation10 + $0xe4] sm:$0xf]
    %v4475 = vld [vmem:[#allocation10 + $0xe8] sm:$0xf]
    %v4476 = vld [vmem:[#allocation10 + $0xec] sm:$0xf]
    %v4477 = vld [vmem:[#allocation10 + $0xf0] sm:$0xf]
    %v4478 = vld [vmem:[#allocation10 + $0xf4] sm:$0xf]
    %v4479 = vld [vmem:[#allocation10 + $0xf8] sm:$0xf]
    %v4480 = vld [vmem:[#allocation10 + $0xfc] sm:$0xf]
    %v4481 = vld [vmem:[%s12] sm:$0x1]
    %v4483 = vperm.slane %v4481, 0
    %v4549 = vunpack.c.l.b16 %v4417
    %v4550 = vunpack.c.l.b16 %v4418
    %v4551 = vunpack.c.l.b16 %v4419
    %v4552 = vunpack.c.l.b16 %v4420
    %v4553 = vunpack.c.l.b16 %v4421
    %v4554 = vunpack.c.l.b16 %v4422
    %v4555 = vunpack.c.l.b16 %v4423
    %v4556 = vunpack.c.l.b16 %v4424
    %v4557 = vunpack.c.l.b16 %v4425
    %v4558 = vunpack.c.l.b16 %v4426
    %v4559 = vunpack.c.l.b16 %v4427
    %v4560 = vunpack.c.l.b16 %v4428
    %v4561 = vunpack.c.l.b16 %v4429
    %v4562 = vunpack.c.l.b16 %v4430
    %v4563 = vunpack.c.l.b16 %v4431
    %v4564 = vunpack.c.l.b16 %v4432
    %v4565 = vunpack.c.l.b16 %v4433
    %v4566 = vunpack.c.l.b16 %v4434
    %v4567 = vunpack.c.l.b16 %v4435
    %v4568 = vunpack.c.l.b16 %v4436
    %v4569 = vunpack.c.l.b16 %v4437
    %v4570 = vunpack.c.l.b16 %v4438
    %v4571 = vunpack.c.l.b16 %v4439
    %v4572 = vunpack.c.l.b16 %v4440
    %v4573 = vunpack.c.l.b16 %v4441
    %v4574 = vunpack.c.l.b16 %v4442
    %v4575 = vunpack.c.l.b16 %v4443
    %v4576 = vunpack.c.l.b16 %v4444
    %v4577 = vunpack.c.l.b16 %v4445
    %v4578 = vunpack.c.l.b16 %v4446
    %v4579 = vunpack.c.l.b16 %v4447
    %v4580 = vunpack.c.l.b16 %v4448
    %v4581 = vunpack.c.l.b16 %v4449
    %v4582 = vunpack.c.l.b16 %v4450
    %v4583 = vunpack.c.l.b16 %v4451
    %v4584 = vunpack.c.l.b16 %v4452
    %v4585 = vunpack.c.l.b16 %v4453
    %v4586 = vunpack.c.l.b16 %v4454
    %v4587 = vunpack.c.l.b16 %v4455
    %v4588 = vunpack.c.l.b16 %v4456
    %v4589 = vunpack.c.l.b16 %v4457
    %v4590 = vunpack.c.l.b16 %v4458
    %v4591 = vunpack.c.l.b16 %v4459
    %v4592 = vunpack.c.l.b16 %v4460
    %v4593 = vunpack.c.l.b16 %v4461
    %v4594 = vunpack.c.l.b16 %v4462
    %v4595 = vunpack.c.l.b16 %v4463
    %v4596 = vunpack.c.l.b16 %v4464
    %v4597 = vunpack.c.l.b16 %v4465
    %v4598 = vunpack.c.l.b16 %v4466
    %v4599 = vunpack.c.l.b16 %v4467
    %v4600 = vunpack.c.l.b16 %v4468
    %v4601 = vunpack.c.l.b16 %v4469
    %v4602 = vunpack.c.l.b16 %v4470
    %v4603 = vunpack.c.l.b16 %v4471
    %v4604 = vunpack.c.l.b16 %v4472
    %v4605 = vunpack.c.l.b16 %v4473
    %v4606 = vunpack.c.l.b16 %v4474
    %v4607 = vunpack.c.l.b16 %v4475
    %v4608 = vunpack.c.l.b16 %v4476
    %v4609 = vunpack.c.l.b16 %v4477
    %v4610 = vunpack.c.l.b16 %v4478
    %v4611 = vunpack.c.l.b16 %v4479
    %v4612 = vunpack.c.l.b16 %v4480
    %v4613 = vpack.c.b16 %v4550, %v4549
    %v4614 = vpack.c.b16 %v4552, %v4551
    %v4615 = vpack.c.b16 %v4554, %v4553
    %v4616 = vpack.c.b16 %v4556, %v4555
    %v4617 = vpack.c.b16 %v4558, %v4557
    %v4618 = vpack.c.b16 %v4560, %v4559
    %v4619 = vpack.c.b16 %v4562, %v4561
    %v4620 = vpack.c.b16 %v4564, %v4563
    %v4621 = vpack.c.b16 %v4566, %v4565
    %v4622 = vpack.c.b16 %v4568, %v4567
    %v4623 = vpack.c.b16 %v4570, %v4569
    %v4624 = vpack.c.b16 %v4572, %v4571
    %v4625 = vpack.c.b16 %v4574, %v4573
    %v4626 = vpack.c.b16 %v4576, %v4575
    %v4627 = vpack.c.b16 %v4578, %v4577
    %v4628 = vpack.c.b16 %v4580, %v4579
    %v4629 = vpack.c.b16 %v4582, %v4581
    %v4630 = vpack.c.b16 %v4584, %v4583
    %v4631 = vpack.c.b16 %v4586, %v4585
    %v4632 = vpack.c.b16 %v4588, %v4587
    %v4633 = vpack.c.b16 %v4590, %v4589
    %v4634 = vpack.c.b16 %v4592, %v4591
    %v4635 = vpack.c.b16 %v4594, %v4593
    %v4636 = vpack.c.b16 %v4596, %v4595
    %v4637 = vpack.c.b16 %v4598, %v4597
    %v4638 = vpack.c.b16 %v4600, %v4599
    %v4639 = vpack.c.b16 %v4602, %v4601
    %v4640 = vpack.c.b16 %v4604, %v4603
    %v4641 = vpack.c.b16 %v4606, %v4605
    %v4642 = vpack.c.b16 %v4608, %v4607
    %v4643 = vpack.c.b16 %v4610, %v4609
    %v4644 = vpack.c.b16 %v4612, %v4611
    %4677 = vmatpush.bf16.msra.mxu0 %v4620
    %4678 = vmatpush.bf16.msra.mxu0 %v4619
    %4679 = vmatpush.bf16.msra.mxu0 %v4618
    %4680 = vmatpush.bf16.msra.mxu0 %v4617
    %4681 = vmatpush.bf16.msra.mxu0 %v4616
    %4682 = vmatpush.bf16.msra.mxu0 %v4615
    %4683 = vmatpush.bf16.msra.mxu0 %v4614
    %4684 = vmatpush.bf16.msra.mxu0 %v4613
    %4685 = vmatmul.bf16.gmra.mxu0 %v4413
    %v4686 = vpop.f32.mrf.mxu0
    %v4687 = vadd.f32 %v4483, %v4686
    %v4688 = vpop.f32.mrf.mxu0
    %4689 = vdwg.mxu0
    %4690 = vmatpush.bf16.msra.mxu0 %v4628
    %4691 = vmatpush.bf16.msra.mxu0 %v4627
    %4692 = vmatpush.bf16.msra.mxu0 %v4626
    %4693 = vmatpush.bf16.msra.mxu0 %v4625
    %4694 = vmatpush.bf16.msra.mxu0 %v4624
    %4695 = vmatpush.bf16.msra.mxu0 %v4623
    %4696 = vmatpush.bf16.msra.mxu0 %v4622
    %4697 = vmatpush.bf16.msra.mxu0 %v4621
    %4698 = vmatmul.bf16.gmra.mxu0 %v4414
    %v4699 = vpop.f32.mrf.mxu0
    %v4700 = vadd.f32 %v4687, %v4699
    %v4701 = vpop.f32.mrf.mxu0
    %4702 = vdwg.mxu0
    %4703 = vmatpush.bf16.msra.mxu0 %v4636
    %4704 = vmatpush.bf16.msra.mxu0 %v4635
    %4705 = vmatpush.bf16.msra.mxu0 %v4634
    %4706 = vmatpush.bf16.msra.mxu0 %v4633
    %4707 = vmatpush.bf16.msra.mxu0 %v4632
    %4708 = vmatpush.bf16.msra.mxu0 %v4631
    %4709 = vmatpush.bf16.msra.mxu0 %v4630
    %4710 = vmatpush.bf16.msra.mxu0 %v4629
    %4711 = vmatmul.bf16.gmra.mxu0 %v4415
    %v4712 = vpop.f32.mrf.mxu0
    %v4713 = vadd.f32 %v4700, %v4712
    %v4714 = vpop.f32.mrf.mxu0
    %4715 = vdwg.mxu0
    %4716 = vmatpush.bf16.msra.mxu0 %v4644
    %4717 = vmatpush.bf16.msra.mxu0 %v4643
    %4718 = vmatpush.bf16.msra.mxu0 %v4642
    %4719 = vmatpush.bf16.msra.mxu0 %v4641
    %4720 = vmatpush.bf16.msra.mxu0 %v4640
    %4721 = vmatpush.bf16.msra.mxu0 %v4639
    %4722 = vmatpush.bf16.msra.mxu0 %v4638
    %4723 = vmatpush.bf16.msra.mxu0 %v4637
    %4724 = vmatmul.bf16.gmra.mxu0 %v4416
    %v4725 = vpop.f32.mrf.mxu0
    %v4726 = vadd.f32 %v4713, %v4725
    %v4727 = vpop.f32.mrf.mxu0
    %4728 = vdwg.mxu0
    %v4729 = vpack.c.bf16 %v4726, %v4726
    %4730 = vst [vmem:[%s13] sm:$0xf] %v4729
    // Predicated region
    $region78: #{decoder_forward.1} parent=1 // pred_check
      _
    $region79: #{decoder_forward.1} parent=1 // pred_check_branch
      %4732 = sbr.rel (0) target = $region81
    $region80: #{decoder_forward.1} parent=1 // pred_region
      _
    $region81: #{decoder_forward.1} parent=1 // pred_fallthru
      _
    // Predicated region
    $region82: #{decoder_forward.1} parent=1 // pred_check
      _
    $region83: #{decoder_forward.1} parent=1 // pred_check_branch
      %4734 = sbr.rel (0) target = $region85
    $region84: #{decoder_forward.1} parent=1 // pred_region
      _
    $region85: #{decoder_forward.1} parent=1 // pred_fallthru
      _
    %4735 = vsyncpa [#allocation3], 1
    %4736 = vsyncpa [#allocation5], 1
    %4737 = vsyncpa [#allocation8], 1
    %4738 = vsyncpa [#allocation11], 1

</llo_original>
